<compile_context>
chip_gen: v5e
topology: v5e:2x2
jax: 0.10.0
libtpu: 0.0.40
codegen_flags: <defaults>
</compile_context>

<pallas_src>
import functools

import jax
import jax.numpy as jnp
import numpy as np
from jax.experimental import pallas as pl
from jax.experimental.pallas import tpu as pltpu

KW = 4            # conv kernel size
PADW = 2          # int(ceil((4-1)/2))
LRELU_SLOPE = 0.2
BN_EPS = 1e-5

# Tile caps (MXU-aligned; worst-case double-buffered footprint ~10 MiB).
TM_CAP = 512
TN_CAP = 512      # Cout <= 512 always fits a single N block
TK_CAP = 2048


def _round_up(x, m):
    return (x + m - 1) // m * m


def _choose_tile(dim, cap, align):
    """Return (tile, padded_dim) with tile | padded_dim and tile % align == 0."""
    if dim >= cap:
        return cap, _round_up(dim, cap)
    t = _round_up(dim, align)
    return t, t


def _choose_m_tile(m, cap=TM_CAP, align=16):
    """bf16 A-tile: align M to 16 (packed sublane tile).  Prefer >= 2 M blocks
    so the 'parallel' M grid axis keeps both v7x TensorCores busy."""
    if m >= 2 * cap:
        return cap, _round_up(m, cap)
    m_pad = _round_up(m, align)
    if m_pad >= 2 * align:
        tm = _round_up((m_pad + 1) // 2, align)
        return tm, 2 * tm
    return m_pad, m_pad


# ---------------------------------------------------------------------------
# Pallas kernel: tiled im2col matmul with fused bias / LeakyReLU / BN stats
# ---------------------------------------------------------------------------
def _conv_kernel(a_ref, w_ref, b_ref, *refs, leaky, with_stats, nk):
    if with_stats:
        o_ref, sum_ref, sq_ref, acc_ref = refs
    else:
        o_ref, acc_ref = refs
        sum_ref = sq_ref = None

    # program_id is read ONLY at kernel top level (never inside pl.when bodies).
    pid_k = pl.program_id(2)

    @pl.when(pid_k == 0)
    def _init():
        # Start the f32 accumulator from the broadcast bias: removes the
        # separate bias add from the epilogue.
        acc_ref[...] = jnp.broadcast_to(b_ref[...], acc_ref.shape)

    acc_ref[...] += jnp.dot(a_ref[...], w_ref[...],
                            preferred_element_type=jnp.float32)

    @pl.when(pid_k == nk - 1)
    def _epilogue():
        y = acc_ref[...]
        if leaky:
            y = jnp.where(y > 0, y, LRELU_SLOPE * y)
        o_ref[...] = y.astype(o_ref.dtype)
        if with_stats:
            # Per-channel partials for BatchNorm from the f32 accumulator.
            # Zero-padded M rows hold exactly the bias; their contribution is
            # subtracted analytically outside the kernel (no mask/iota here).
            sum_ref[...] = jnp.sum(y, axis=0)[None, None, :]
            sq_ref[...] = jnp.sum(y * y, axis=0)[None, None, :]


def conv_matmul(patches, w, b, *, tm, tk, tn, leaky, with_stats, out_dtype):
    """patches (M_pad,K_pad) bf16 x w (K_pad,C_pad) bf16 (+ bias (1,C_pad) f32)."""
    m_pad, k_pad = patches.shape
    c_pad = w.shape[1]
    nm, nn, nk = m_pad // tm, c_pad // tn, k_pad // tk

    kern = functools.partial(_conv_kernel, leaky=leaky, with_stats=with_stats,
                             nk=nk)

    if with_stats:
        out_shape = (jax.ShapeDtypeStruct((m_pad, c_pad), out_dtype),
                     jax.ShapeDtypeStruct((nm, 1, c_pad), jnp.float32),
                     jax.ShapeDtypeStruct((nm, 1, c_pad), jnp.float32))
        out_specs = (pl.BlockSpec((tm, tn), lambda i, j, k: (i, j)),
                     pl.BlockSpec((1, 1, tn), lambda i, j, k: (i, 0, j)),
                     pl.BlockSpec((1, 1, tn), lambda i, j, k: (i, 0, j)))
    else:
        out_shape = jax.ShapeDtypeStruct((m_pad, c_pad), out_dtype)
        out_specs = pl.BlockSpec((tm, tn), lambda i, j, k: (i, j))

    return pl.pallas_call(
        kern,
        grid=(nm, nn, nk),
        in_specs=[
            pl.BlockSpec((tm, tk), lambda i, j, k: (i, k)),   # bf16 patches
            pl.BlockSpec((tk, tn), lambda i, j, k: (k, j)),   # bf16 weights
            pl.BlockSpec((1, tn), lambda i, j, k: (0, j)),    # f32 bias
        ],
        out_specs=out_specs,
        out_shape=out_shape,
        scratch_shapes=[pltpu.VMEM((tm, tn), jnp.float32)],
        compiler_params=pltpu.CompilerParams(
            dimension_semantics=("parallel", "parallel", "arbitrary")),
    )(patches, w, b)


# ---------------------------------------------------------------------------
# Glue: im2col (with fused pending BN + LeakyReLU) and parameter packing
# ---------------------------------------------------------------------------
def im2col(x, k, stride, pad, *, m_pad, k_pad, affine=None):
    """x (N,H,W,C) -> bf16 patch matrix (m_pad, k_pad), column order (kh,kw,c).

    If affine=(scale, shift) is given, the previous layer's BatchNorm
    normalize + affine + LeakyReLU is applied (in f32, before zero padding and
    the bf16 cast), so the BN'd activation never makes a standalone HBM pass.
    """
    n, h, w, c = x.shape
    ho = (h + 2 * pad - k) // stride + 1
    wo = (w + 2 * pad - k) // stride + 1
    if affine is not None:
        scale, shift = affine
        x = (x.astype(jnp.float32) * scale.reshape(1, 1, 1, -1)
             + shift.reshape(1, 1, 1, -1))
        x = jnp.where(x > 0, x, LRELU_SLOPE * x)
    # bf16 activations: intentional precision trade (hence 5e-2 tolerance).
    xp = jnp.pad(x.astype(jnp.bfloat16),
                 ((0, 0), (pad, pad), (pad, pad), (0, 0)))
    cols = []
    for kh in range(k):
        for kw_ in range(k):
            cols.append(xp[:, kh:kh + stride * (ho - 1) + 1:stride,
                            kw_:kw_ + stride * (wo - 1) + 1:stride, :])
    patches = jnp.concatenate(cols, axis=-1).reshape(n * ho * wo, k * k * c)
    mm, kk = patches.shape
    return jnp.pad(patches, ((0, m_pad - mm), (0, k_pad - kk)))


def init_params(key, input_nc, ndf, n_layers):
    """Deterministic synthetic init (N(0,0.02) weights, zero biases, BN gamma=1)."""
    chans = [(input_nc, ndf, 2, False)]
    nf = ndf
    for _ in range(1, n_layers):
        nf_prev, nf = nf, min(nf * 2, 512)
        chans.append((nf_prev, nf, 2, True))
    nf_prev, nf = nf, min(nf * 2, 512)
    chans.append((nf_prev, nf, 1, True))
    chans.append((nf, 1, 1, False))  # final conv: no norm, no activation
    keys = jax.random.split(key, len(chans))
    layers = []
    for kk, (cin, cout, stride, has_bn) in zip(keys, chans):
        w_key, _ = jax.random.split(kk)
        w = 0.02 * jax.random.normal(w_key, (cout, cin, KW, KW), jnp.float32)
        b = jnp.zeros((cout,), jnp.float32)
        gamma = jnp.ones((cout,), jnp.float32) if has_bn else None
        beta = jnp.zeros((cout,), jnp.float32) if has_bn else None
        layers.append(dict(w=w, b=b, stride=stride, has_bn=has_bn,
                           gamma=gamma, beta=beta))
    return layers


def pack_params(params):
    """Pre-pack weights once: (Cout,Cin,Kh,Kw) -> padded (K_pad,C_pad) bf16."""
    packed = []
    for p in params:
        w = p["w"]
        cout, cin, kh, kw = w.shape
        K = kh * kw * cin
        tk, k_pad = _choose_tile(K, TK_CAP, 128)
        tn, c_pad = _choose_tile(cout, TN_CAP, 128)
        # (Cout,Cin,Kh,Kw) -> (Kh,Kw,Cin,Cout) -> (K,Cout): matches patch order
        w2 = jnp.transpose(w, (2, 3, 1, 0)).reshape(K, cout)
        w2 = jnp.pad(w2, ((0, k_pad - K), (0, c_pad - cout))).astype(jnp.bfloat16)
        b2 = jnp.pad(p["b"], (0, c_pad - cout)).reshape(1, c_pad).astype(jnp.float32)
        entry = dict(w=w2, b=b2, stride=p["stride"], has_bn=p["has_bn"],
                     Cout=cout, K=K, K_pad=k_pad, tk=tk, tn=tn, C_pad=c_pad)
        if p["has_bn"]:
            entry["gamma"] = jnp.pad(p["gamma"], (0, c_pad - cout)).reshape(1, c_pad)
            entry["beta"] = jnp.pad(p["beta"], (0, c_pad - cout)).reshape(1, c_pad)
        packed.append(entry)
    return packed


# ---------------------------------------------------------------------------
# Forward pass
# ---------------------------------------------------------------------------
def discriminator_forward(x_nchw, packed):
    """Matches NLayerDiscriminator(...).forward (getIntermFeat=False)."""
    x = jnp.transpose(x_nchw, (0, 2, 3, 1)).astype(jnp.float32)  # NCHW -> NHWC
    pending = None   # (scale, shift) of a BN+LeakyReLU to fuse into next im2col
    for idx, L in enumerate(packed):
        is_last = idx == len(packed) - 1
        n, h, w, _ = x.shape
        ho = (h + 2 * PADW - KW) // L["stride"] + 1
        wo = (w + 2 * PADW - KW) // L["stride"] + 1
        m = n * ho * wo
        tm, m_pad = _choose_m_tile(m)

        patches = im2col(x, KW, L["stride"], PADW,
                         m_pad=m_pad, k_pad=L["K_pad"], affine=pending)
        res = conv_matmul(
            patches, L["w"], L["b"],
            tm=tm, tk=L["tk"], tn=L["tn"],
            leaky=(not L["has_bn"] and not is_last),
            with_stats=L["has_bn"],
            out_dtype=jnp.float32 if is_last else jnp.bfloat16)

        if L["has_bn"]:
            y, psum, psq = res
            n_inv = float(m_pad - m)
            # Remove the analytically-known contribution of zero-padded M rows
            # (each padded row of the conv output equals the bias exactly).
            s_tot = jnp.sum(psum, axis=0) - n_inv * L["b"]          # (1, C_pad)
            q_tot = jnp.sum(psq, axis=0) - n_inv * L["b"] * L["b"]  # (1, C_pad)
            mean = s_tot / float(m)
            # One-pass E[x^2]-E[x]^2 in f32, clamped >= 0: fine at 5e-2
            # tolerance; use a shifted/two-pass scheme for tighter accuracy.
            var = jnp.maximum(q_tot / float(m) - mean * mean, 0.0)
            scale = L["gamma"] / jnp.sqrt(var + BN_EPS)
            shift = L["beta"] - mean * scale
            pending = (scale[:, :L["Cout"]], shift[:, :L["Cout"]])
        else:
            y = res
            pending = None

        x = y[:m, :L["Cout"]].reshape(n, ho, wo, L["Cout"])
    return jnp.transpose(x, (0, 3, 1, 2)).astype(jnp.float32)      # NHWC -> NCHW


# ---------------------------------------------------------------------------
# Pure-JAX f32 reference (lax.conv) for correctness check
# ---------------------------------------------------------------------------
def _ref_conv(x, w, b, stride, pad=PADW):
    y = jax.lax.conv_general_dilated(
        x, jnp.transpose(w, (2, 3, 1, 0)),
        window_strides=(stride, stride),
        padding=((pad, pad), (pad, pad)),
        dimension_numbers=("NHWC", "HWIO", "NHWC"),
    )
    return y + b.reshape(1, 1, 1, -1)


def reference_forward(x_nchw, params):
    x = jnp.transpose(x_nchw, (0, 2, 3, 1))
    for i, p in enumerate(params):
        is_last = i == len(params) - 1
        x = _ref_conv(x, p["w"], p["b"], p["stride"])
        if p["has_bn"]:
            mean = jnp.mean(x, axis=(0, 1, 2), keepdims=True)
            var = jnp.mean((x - mean) ** 2, axis=(0, 1, 2), keepdims=True)
            x = (x - mean) / jnp.sqrt(var + BN_EPS)
            x = x * p["gamma"].reshape(1, 1, 1, -1) + p["beta"].reshape(1, 1, 1, -1)
            x = jnp.where(x > 0, x, LRELU_SLOPE * x)
        elif not is_last:
            x = jnp.where(x > 0, x, LRELU_SLOPE * x)
    return jnp.transpose(x, (0, 3, 1, 2))


if __name__ == "__main__":
    # Small config consistent with the module: input_nc=4, ndf=8, n_layers=3.
    key = jax.random.PRNGKey(0)
    k_in, k_par = jax.random.split(key)
    x = jax.random.normal(k_in, (2, 4, 16, 16), jnp.float32)  # NCHW like PyTorch
    params = init_params(k_par, input_nc=4, ndf=8, n_layers=3)
    packed = pack_params(params)

    fwd = jax.jit(lambda xx: discriminator_forward(xx, packed))
    out = jax.block_until_ready(fwd(x))

    # spatial trace: 16 -> 9 -> 5 -> 3 -> 4 -> 5, channels -> 1
    assert out.shape == (2, 1, 5, 5), out.shape

    ref = jax.block_until_ready(reference_forward(x, params))
    assert np.allclose(np.asarray(out), np.asarray(ref), rtol=5e-2, atol=5e-2), (
        float(jnp.max(jnp.abs(out - ref))))

    print("KERNEL_OK")
</pallas_src>

<mosaic_0001>
module attributes {stable_mosaic.version = 11 : i64} {
  func.func @_conv_kernel(%arg0: i32, %arg1: i32, %arg2: i32, %arg3: memref<96x128xbf16, #tpu.memory_space<vmem>>, %arg4: memref<128x128xbf16, #tpu.memory_space<vmem>>, %arg5: memref<1x128xf32, #tpu.memory_space<vmem>>, %arg6: memref<96x128xbf16, #tpu.memory_space<vmem>>, %arg7: memref<96x128xf32, #tpu.memory_space<vmem>>) attributes {dimension_semantics = [#tpu.dimension_semantics<parallel>, #tpu.dimension_semantics<parallel>, #tpu.dimension_semantics<arbitrary>], iteration_bounds = array<i64: 2, 1, 1>, scalar_prefetch = 0 : i64, scratch_operands = 1 : i64, tpu.core_type = #tpu.core_type<tc>, window_params = [{transform_indices = @transform_0, window_bounds = array<i64: 96, 128>}, {transform_indices = @transform_1, window_bounds = array<i64: 128, 128>}, {transform_indices = @transform_2, window_bounds = array<i64: 1, 128>}, {transform_indices = @transform_3, window_bounds = array<i64: 96, 128>}]} {
    %c0_i32 = arith.constant 0 : i32
    %0 = arith.cmpi eq, %arg2, %c0_i32 : i32
    %1 = arith.extui %0 : i1 to i32
    %c0_i32_0 = arith.constant 0 : i32
    %2 = arith.cmpi ne, %1, %c0_i32_0 : i32
    scf.if %2 {
      %c0_10 = arith.constant 0 : index
      %c0_11 = arith.constant 0 : index
      %12 = vector.load %arg5[%c0_10, %c0_11] : memref<1x128xf32, #tpu.memory_space<vmem>>, vector<1x128xf32>
      %13 = vector.shape_cast %12 : vector<1x128xf32> to vector<1x128xf32>
      %14 = vector.broadcast %13 : vector<1x128xf32> to vector<96x128xf32>
      %c0_12 = arith.constant 0 : index
      %c0_13 = arith.constant 0 : index
      %15 = vector.load %arg7[%c0_12, %c0_13] : memref<96x128xf32, #tpu.memory_space<vmem>>, vector<96x128xf32>
      tpu.vector_store %arg7[%c0_12, %c0_13], %14 {strides = array<i32>} : memref<96x128xf32, #tpu.memory_space<vmem>>, vector<96x128xf32>,
    } else {
    }
    %c0 = arith.constant 0 : index
    %c0_1 = arith.constant 0 : index
    %3 = vector.load %arg7[%c0, %c0_1] : memref<96x128xf32, #tpu.memory_space<vmem>>, vector<96x128xf32>
    %c0_2 = arith.constant 0 : index
    %c0_3 = arith.constant 0 : index
    %4 = vector.load %arg3[%c0_2, %c0_3] : memref<96x128xbf16, #tpu.memory_space<vmem>>, vector<96x128xbf16>
    %c0_4 = arith.constant 0 : index
    %c0_5 = arith.constant 0 : index
    %5 = vector.load %arg4[%c0_4, %c0_5] : memref<128x128xbf16, #tpu.memory_space<vmem>>, vector<128x128xbf16>
    %cst = arith.constant dense<0.000000e+00> : vector<96x128xf32>
    %6 = tpu.matmul %4, %5, %cst {dimension_numbers = #tpu.dot_dimension_numbers<[1], [0], [0], [1], [0, 0, 1, 1], [], []>} : vector<96x128xbf16>, vector<128x128xbf16>, vector<96x128xf32> -> vector<96x128xf32>
    %7 = arith.addf %3, %6 : vector<96x128xf32>
    %c0_6 = arith.constant 0 : index
    %c0_7 = arith.constant 0 : index
    %8 = vector.load %arg7[%c0_6, %c0_7] : memref<96x128xf32, #tpu.memory_space<vmem>>, vector<96x128xf32>
    tpu.vector_store %arg7[%c0_6, %c0_7], %7 {strides = array<i32>} : memref<96x128xf32, #tpu.memory_space<vmem>>, vector<96x128xf32>,
    %c0_i32_8 = arith.constant 0 : i32
    %9 = arith.cmpi eq, %arg2, %c0_i32_8 : i32
    %10 = arith.extui %9 : i1 to i32
    %c0_i32_9 = arith.constant 0 : i32
    %11 = arith.cmpi ne, %10, %c0_i32_9 : i32
    scf.if %11 {
      %c0_10 = arith.constant 0 : index
      %c0_11 = arith.constant 0 : index
      %12 = vector.load %arg7[%c0_10, %c0_11] : memref<96x128xf32, #tpu.memory_space<vmem>>, vector<96x128xf32>
      %cst_12 = arith.constant 0.000000e+00 : f32
      %13 = vector.broadcast %cst_12 : f32 to vector<96x128xf32>
      %14 = arith.cmpf ogt, %12, %13 : vector<96x128xf32>
      %cst_13 = arith.constant 2.000000e-01 : f32
      %15 = vector.broadcast %cst_13 : f32 to vector<96x128xf32>
      %16 = arith.mulf %15, %12 : vector<96x128xf32>
      %17 = arith.select %14, %12, %16 : vector<96x128xi1>, vector<96x128xf32>
      %18 = arith.truncf %17 : vector<96x128xf32> to vector<96x128xbf16>
      %c0_14 = arith.constant 0 : index
      %c0_15 = arith.constant 0 : index
      %19 = vector.load %arg6[%c0_14, %c0_15] : memref<96x128xbf16, #tpu.memory_space<vmem>>, vector<96x128xbf16>
      tpu.vector_store %arg6[%c0_14, %c0_15], %18 {strides = array<i32>} : memref<96x128xbf16, #tpu.memory_space<vmem>>, vector<96x128xbf16>,
    } else {
    }
    return
  }
  func.func @transform_0(%arg0: i32, %arg1: i32, %arg2: i32) -> (i32, i32) {
    %c0_i32 = arith.constant 0 : i32
    return %arg0, %arg2 : i32, i32
  }
  func.func @transform_1(%arg0: i32, %arg1: i32, %arg2: i32) -> (i32, i32) {
    %c0_i32 = arith.constant 0 : i32
    return %arg2, %arg1 : i32, i32
  }
  func.func @transform_2(%arg0: i32, %arg1: i32, %arg2: i32) -> (i32, i32) {
    %c0_i32 = arith.constant 0 : i32
    %c0_i32_0 = arith.constant 0 : i32
    return %c0_i32, %arg1 : i32, i32
  }
  func.func @transform_3(%arg0: i32, %arg1: i32, %arg2: i32) -> (i32, i32) {
    %c0_i32 = arith.constant 0 : i32
    return %arg0, %arg1 : i32, i32
  }
}

module attributes {stable_mosaic.version = 11 : i64} {
  func.func @_conv_kernel(%arg0: i32, %arg1: i32, %arg2: i32, %arg3: memref<32x128xbf16, #tpu.memory_space<vmem>>, %arg4: memref<128x128xbf16, #tpu.memory_space<vmem>>, %arg5: memref<1x128xf32, #tpu.memory_space<vmem>>, %arg6: memref<32x128xbf16, #tpu.memory_space<vmem>>, %arg7: memref<1x1x128xf32, #tpu.memory_space<vmem>>, %arg8: memref<1x1x128xf32, #tpu.memory_space<vmem>>, %arg9: memref<32x128xf32, #tpu.memory_space<vmem>>) attributes {dimension_semantics = [#tpu.dimension_semantics<parallel>, #tpu.dimension_semantics<parallel>, #tpu.dimension_semantics<arbitrary>], iteration_bounds = array<i64: 2, 1, 1>, scalar_prefetch = 0 : i64, scratch_operands = 1 : i64, tpu.core_type = #tpu.core_type<tc>, window_params = [{transform_indices = @transform_0, window_bounds = array<i64: 32, 128>}, {transform_indices = @transform_1, window_bounds = array<i64: 128, 128>}, {transform_indices = @transform_2, window_bounds = array<i64: 1, 128>}, {transform_indices = @transform_3, window_bounds = array<i64: 32, 128>}, {transform_indices = @transform_4, window_bounds = array<i64: 1, 1, 128>}, {transform_indices = @transform_5, window_bounds = array<i64: 1, 1, 128>}]} {
    %c0_i32 = arith.constant 0 : i32
    %0 = arith.cmpi eq, %arg2, %c0_i32 : i32
    %1 = arith.extui %0 : i1 to i32
    %c0_i32_0 = arith.constant 0 : i32
    %2 = arith.cmpi ne, %1, %c0_i32_0 : i32
    scf.if %2 {
      %c0_10 = arith.constant 0 : index
      %c0_11 = arith.constant 0 : index
      %12 = vector.load %arg5[%c0_10, %c0_11] : memref<1x128xf32, #tpu.memory_space<vmem>>, vector<1x128xf32>
      %13 = vector.shape_cast %12 : vector<1x128xf32> to vector<1x128xf32>
      %14 = vector.broadcast %13 : vector<1x128xf32> to vector<32x128xf32>
      %c0_12 = arith.constant 0 : index
      %c0_13 = arith.constant 0 : index
      %15 = vector.load %arg9[%c0_12, %c0_13] : memref<32x128xf32, #tpu.memory_space<vmem>>, vector<32x128xf32>
      tpu.vector_store %arg9[%c0_12, %c0_13], %14 {strides = array<i32>} : memref<32x128xf32, #tpu.memory_space<vmem>>, vector<32x128xf32>,
    } else {
    }
    %c0 = arith.constant 0 : index
    %c0_1 = arith.constant 0 : index
    %3 = vector.load %arg9[%c0, %c0_1] : memref<32x128xf32, #tpu.memory_space<vmem>>, vector<32x128xf32>
    %c0_2 = arith.constant 0 : index
    %c0_3 = arith.constant 0 : index
    %4 = vector.load %arg3[%c0_2, %c0_3] : memref<32x128xbf16, #tpu.memory_space<vmem>>, vector<32x128xbf16>
    %c0_4 = arith.constant 0 : index
    %c0_5 = arith.constant 0 : index
    %5 = vector.load %arg4[%c0_4, %c0_5] : memref<128x128xbf16, #tpu.memory_space<vmem>>, vector<128x128xbf16>
    %cst = arith.constant dense<0.000000e+00> : vector<32x128xf32>
    %6 = tpu.matmul %4, %5, %cst {dimension_numbers = #tpu.dot_dimension_numbers<[1], [0], [0], [1], [0, 0, 1, 1], [], []>} : vector<32x128xbf16>, vector<128x128xbf16>, vector<32x128xf32> -> vector<32x128xf32>
    %7 = arith.addf %3, %6 : vector<32x128xf32>
    %c0_6 = arith.constant 0 : index
    %c0_7 = arith.constant 0 : index
    %8 = vector.load %arg9[%c0_6, %c0_7] : memref<32x128xf32, #tpu.memory_space<vmem>>, vector<32x128xf32>
    tpu.vector_store %arg9[%c0_6, %c0_7], %7 {strides = array<i32>} : memref<32x128xf32, #tpu.memory_space<vmem>>, vector<32x128xf32>,
    %c0_i32_8 = arith.constant 0 : i32
    %9 = arith.cmpi eq, %arg2, %c0_i32_8 : i32
    %10 = arith.extui %9 : i1 to i32
    %c0_i32_9 = arith.constant 0 : i32
    %11 = arith.cmpi ne, %10, %c0_i32_9 : i32
    scf.if %11 {
      %c0_10 = arith.constant 0 : index
      %c0_11 = arith.constant 0 : index
      %12 = vector.load %arg9[%c0_10, %c0_11] : memref<32x128xf32, #tpu.memory_space<vmem>>, vector<32x128xf32>
      %13 = arith.truncf %12 : vector<32x128xf32> to vector<32x128xbf16>
      %c0_12 = arith.constant 0 : index
      %c0_13 = arith.constant 0 : index
      %14 = vector.load %arg6[%c0_12, %c0_13] : memref<32x128xbf16, #tpu.memory_space<vmem>>, vector<32x128xbf16>
      tpu.vector_store %arg6[%c0_12, %c0_13], %13 {strides = array<i32>} : memref<32x128xbf16, #tpu.memory_space<vmem>>, vector<32x128xbf16>,
      %cst_14 = arith.constant dense<0.000000e+00> : vector<128xf32>
      %15 = vector.multi_reduction <add>, %12, %cst_14 [0] : vector<32x128xf32> to vector<128xf32>
      %16 = vector.shape_cast %15 : vector<128xf32> to vector<1x1x128xf32>
      %c0_15 = arith.constant 0 : index
      %c0_16 = arith.constant 0 : index
      %c0_17 = arith.constant 0 : index
      %17 = vector.load %arg7[%c0_15, %c0_16, %c0_17] : memref<1x1x128xf32, #tpu.memory_space<vmem>>, vector<1x1x128xf32>
      tpu.vector_store %arg7[%c0_15, %c0_16, %c0_17], %16 {strides = array<i32>} : memref<1x1x128xf32, #tpu.memory_space<vmem>>, vector<1x1x128xf32>,
      %18 = arith.mulf %12, %12 : vector<32x128xf32>
      %cst_18 = arith.constant dense<0.000000e+00> : vector<128xf32>
      %19 = vector.multi_reduction <add>, %18, %cst_18 [0] : vector<32x128xf32> to vector<128xf32>
      %20 = vector.shape_cast %19 : vector<128xf32> to vector<1x1x128xf32>
      %c0_19 = arith.constant 0 : index
      %c0_20 = arith.constant 0 : index
      %c0_21 = arith.constant 0 : index
      %21 = vector.load %arg8[%c0_19, %c0_20, %c0_21] : memref<1x1x128xf32, #tpu.memory_space<vmem>>, vector<1x1x128xf32>
      tpu.vector_store %arg8[%c0_19, %c0_20, %c0_21], %20 {strides = array<i32>} : memref<1x1x128xf32, #tpu.memory_space<vmem>>, vector<1x1x128xf32>,
    } else {
    }
    return
  }
  func.func @transform_0(%arg0: i32, %arg1: i32, %arg2: i32) -> (i32, i32) {
    %c0_i32 = arith.constant 0 : i32
    return %arg0, %arg2 : i32, i32
  }
  func.func @transform_1(%arg0: i32, %arg1: i32, %arg2: i32) -> (i32, i32) {
    %c0_i32 = arith.constant 0 : i32
    return %arg2, %arg1 : i32, i32
  }
  func.func @transform_2(%arg0: i32, %arg1: i32, %arg2: i32) -> (i32, i32) {
    %c0_i32 = arith.constant 0 : i32
    %c0_i32_0 = arith.constant 0 : i32
    return %c0_i32, %arg1 : i32, i32
  }
  func.func @transform_3(%arg0: i32, %arg1: i32, %arg2: i32) -> (i32, i32) {
    %c0_i32 = arith.constant 0 : i32
    return %arg0, %arg1 : i32, i32
  }
  func.func @transform_4(%arg0: i32, %arg1: i32, %arg2: i32) -> (i32, i32, i32) {
    %c0_i32 = arith.constant 0 : i32
    %c0_i32_0 = arith.constant 0 : i32
    return %arg0, %c0_i32, %arg1 : i32, i32, i32
  }
  func.func @transform_5(%arg0: i32, %arg1: i32, %arg2: i32) -> (i32, i32, i32) {
    %c0_i32 = arith.constant 0 : i32
    %c0_i32_0 = arith.constant 0 : i32
    return %arg0, %c0_i32, %arg1 : i32, i32, i32
  }
}

module attributes {stable_mosaic.version = 11 : i64} {
  func.func @_conv_kernel(%arg0: i32, %arg1: i32, %arg2: i32, %arg3: memref<16x256xbf16, #tpu.memory_space<vmem>>, %arg4: memref<256x128xbf16, #tpu.memory_space<vmem>>, %arg5: memref<1x128xf32, #tpu.memory_space<vmem>>, %arg6: memref<16x128xbf16, #tpu.memory_space<vmem>>, %arg7: memref<1x1x128xf32, #tpu.memory_space<vmem>>, %arg8: memref<1x1x128xf32, #tpu.memory_space<vmem>>, %arg9: memref<16x128xf32, #tpu.memory_space<vmem>>) attributes {dimension_semantics = [#tpu.dimension_semantics<parallel>, #tpu.dimension_semantics<parallel>, #tpu.dimension_semantics<arbitrary>], iteration_bounds = array<i64: 2, 1, 1>, scalar_prefetch = 0 : i64, scratch_operands = 1 : i64, tpu.core_type = #tpu.core_type<tc>, window_params = [{transform_indices = @transform_0, window_bounds = array<i64: 16, 256>}, {transform_indices = @transform_1, window_bounds = array<i64: 256, 128>}, {transform_indices = @transform_2, window_bounds = array<i64: 1, 128>}, {transform_indices = @transform_3, window_bounds = array<i64: 16, 128>}, {transform_indices = @transform_4, window_bounds = array<i64: 1, 1, 128>}, {transform_indices = @transform_5, window_bounds = array<i64: 1, 1, 128>}]} {
    %c0_i32 = arith.constant 0 : i32
    %0 = arith.cmpi eq, %arg2, %c0_i32 : i32
    %1 = arith.extui %0 : i1 to i32
    %c0_i32_0 = arith.constant 0 : i32
    %2 = arith.cmpi ne, %1, %c0_i32_0 : i32
    scf.if %2 {
      %c0_10 = arith.constant 0 : index
      %c0_11 = arith.constant 0 : index
      %12 = vector.load %arg5[%c0_10, %c0_11] : memref<1x128xf32, #tpu.memory_space<vmem>>, vector<1x128xf32>
      %13 = vector.shape_cast %12 : vector<1x128xf32> to vector<1x128xf32>
      %14 = vector.broadcast %13 : vector<1x128xf32> to vector<16x128xf32>
      %c0_12 = arith.constant 0 : index
      %c0_13 = arith.constant 0 : index
      %15 = vector.load %arg9[%c0_12, %c0_13] : memref<16x128xf32, #tpu.memory_space<vmem>>, vector<16x128xf32>
      tpu.vector_store %arg9[%c0_12, %c0_13], %14 {strides = array<i32>} : memref<16x128xf32, #tpu.memory_space<vmem>>, vector<16x128xf32>,
    } else {
    }
    %c0 = arith.constant 0 : index
    %c0_1 = arith.constant 0 : index
    %3 = vector.load %arg9[%c0, %c0_1] : memref<16x128xf32, #tpu.memory_space<vmem>>, vector<16x128xf32>
    %c0_2 = arith.constant 0 : index
    %c0_3 = arith.constant 0 : index
    %4 = vector.load %arg3[%c0_2, %c0_3] : memref<16x256xbf16, #tpu.memory_space<vmem>>, vector<16x256xbf16>
    %c0_4 = arith.constant 0 : index
    %c0_5 = arith.constant 0 : index
    %5 = vector.load %arg4[%c0_4, %c0_5] : memref<256x128xbf16, #tpu.memory_space<vmem>>, vector<256x128xbf16>
    %cst = arith.constant dense<0.000000e+00> : vector<16x128xf32>
    %6 = tpu.matmul %4, %5, %cst {dimension_numbers = #tpu.dot_dimension_numbers<[1], [0], [0], [1], [0, 0, 1, 1], [], []>} : vector<16x256xbf16>, vector<256x128xbf16>, vector<16x128xf32> -> vector<16x128xf32>
    %7 = arith.addf %3, %6 : vector<16x128xf32>
    %c0_6 = arith.constant 0 : index
    %c0_7 = arith.constant 0 : index
    %8 = vector.load %arg9[%c0_6, %c0_7] : memref<16x128xf32, #tpu.memory_space<vmem>>, vector<16x128xf32>
    tpu.vector_store %arg9[%c0_6, %c0_7], %7 {strides = array<i32>} : memref<16x128xf32, #tpu.memory_space<vmem>>, vector<16x128xf32>,
    %c0_i32_8 = arith.constant 0 : i32
    %9 = arith.cmpi eq, %arg2, %c0_i32_8 : i32
    %10 = arith.extui %9 : i1 to i32
    %c0_i32_9 = arith.constant 0 : i32
    %11 = arith.cmpi ne, %10, %c0_i32_9 : i32
    scf.if %11 {
      %c0_10 = arith.constant 0 : index
      %c0_11 = arith.constant 0 : index
      %12 = vector.load %arg9[%c0_10, %c0_11] : memref<16x128xf32, #tpu.memory_space<vmem>>, vector<16x128xf32>
      %13 = arith.truncf %12 : vector<16x128xf32> to vector<16x128xbf16>
      %c0_12 = arith.constant 0 : index
      %c0_13 = arith.constant 0 : index
      %14 = vector.load %arg6[%c0_12, %c0_13] : memref<16x128xbf16, #tpu.memory_space<vmem>>, vector<16x128xbf16>
      tpu.vector_store %arg6[%c0_12, %c0_13], %13 {strides = array<i32>} : memref<16x128xbf16, #tpu.memory_space<vmem>>, vector<16x128xbf16>,
      %cst_14 = arith.constant dense<0.000000e+00> : vector<128xf32>
      %15 = vector.multi_reduction <add>, %12, %cst_14 [0] : vector<16x128xf32> to vector<128xf32>
      %16 = vector.shape_cast %15 : vector<128xf32> to vector<1x1x128xf32>
      %c0_15 = arith.constant 0 : index
      %c0_16 = arith.constant 0 : index
      %c0_17 = arith.constant 0 : index
      %17 = vector.load %arg7[%c0_15, %c0_16, %c0_17] : memref<1x1x128xf32, #tpu.memory_space<vmem>>, vector<1x1x128xf32>
      tpu.vector_store %arg7[%c0_15, %c0_16, %c0_17], %16 {strides = array<i32>} : memref<1x1x128xf32, #tpu.memory_space<vmem>>, vector<1x1x128xf32>,
      %18 = arith.mulf %12, %12 : vector<16x128xf32>
      %cst_18 = arith.constant dense<0.000000e+00> : vector<128xf32>
      %19 = vector.multi_reduction <add>, %18, %cst_18 [0] : vector<16x128xf32> to vector<128xf32>
      %20 = vector.shape_cast %19 : vector<128xf32> to vector<1x1x128xf32>
      %c0_19 = arith.constant 0 : index
      %c0_20 = arith.constant 0 : index
      %c0_21 = arith.constant 0 : index
      %21 = vector.load %arg8[%c0_19, %c0_20, %c0_21] : memref<1x1x128xf32, #tpu.memory_space<vmem>>, vector<1x1x128xf32>
      tpu.vector_store %arg8[%c0_19, %c0_20, %c0_21], %20 {strides = array<i32>} : memref<1x1x128xf32, #tpu.memory_space<vmem>>, vector<1x1x128xf32>,
    } else {
    }
    return
  }
  func.func @transform_0(%arg0: i32, %arg1: i32, %arg2: i32) -> (i32, i32) {
    %c0_i32 = arith.constant 0 : i32
    return %arg0, %arg2 : i32, i32
  }
  func.func @transform_1(%arg0: i32, %arg1: i32, %arg2: i32) -> (i32, i32) {
    %c0_i32 = arith.constant 0 : i32
    return %arg2, %arg1 : i32, i32
  }
  func.func @transform_2(%arg0: i32, %arg1: i32, %arg2: i32) -> (i32, i32) {
    %c0_i32 = arith.constant 0 : i32
    %c0_i32_0 = arith.constant 0 : i32
    return %c0_i32, %arg1 : i32, i32
  }
  func.func @transform_3(%arg0: i32, %arg1: i32, %arg2: i32) -> (i32, i32) {
    %c0_i32 = arith.constant 0 : i32
    return %arg0, %arg1 : i32, i32
  }
  func.func @transform_4(%arg0: i32, %arg1: i32, %arg2: i32) -> (i32, i32, i32) {
    %c0_i32 = arith.constant 0 : i32
    %c0_i32_0 = arith.constant 0 : i32
    return %arg0, %c0_i32, %arg1 : i32, i32, i32
  }
  func.func @transform_5(%arg0: i32, %arg1: i32, %arg2: i32) -> (i32, i32, i32) {
    %c0_i32 = arith.constant 0 : i32
    %c0_i32_0 = arith.constant 0 : i32
    return %arg0, %c0_i32, %arg1 : i32, i32, i32
  }
}

module attributes {stable_mosaic.version = 11 : i64} {
  func.func @_conv_kernel(%arg0: i32, %arg1: i32, %arg2: i32, %arg3: memref<16x512xbf16, #tpu.memory_space<vmem>>, %arg4: memref<512x128xbf16, #tpu.memory_space<vmem>>, %arg5: memref<1x128xf32, #tpu.memory_space<vmem>>, %arg6: memref<16x128xbf16, #tpu.memory_space<vmem>>, %arg7: memref<1x1x128xf32, #tpu.memory_space<vmem>>, %arg8: memref<1x1x128xf32, #tpu.memory_space<vmem>>, %arg9: memref<16x128xf32, #tpu.memory_space<vmem>>) attributes {dimension_semantics = [#tpu.dimension_semantics<parallel>, #tpu.dimension_semantics<parallel>, #tpu.dimension_semantics<arbitrary>], iteration_bounds = array<i64: 2, 1, 1>, scalar_prefetch = 0 : i64, scratch_operands = 1 : i64, tpu.core_type = #tpu.core_type<tc>, window_params = [{transform_indices = @transform_0, window_bounds = array<i64: 16, 512>}, {transform_indices = @transform_1, window_bounds = array<i64: 512, 128>}, {transform_indices = @transform_2, window_bounds = array<i64: 1, 128>}, {transform_indices = @transform_3, window_bounds = array<i64: 16, 128>}, {transform_indices = @transform_4, window_bounds = array<i64: 1, 1, 128>}, {transform_indices = @transform_5, window_bounds = array<i64: 1, 1, 128>}]} {
    %c0_i32 = arith.constant 0 : i32
    %0 = arith.cmpi eq, %arg2, %c0_i32 : i32
    %1 = arith.extui %0 : i1 to i32
    %c0_i32_0 = arith.constant 0 : i32
    %2 = arith.cmpi ne, %1, %c0_i32_0 : i32
    scf.if %2 {
      %c0_10 = arith.constant 0 : index
      %c0_11 = arith.constant 0 : index
      %12 = vector.load %arg5[%c0_10, %c0_11] : memref<1x128xf32, #tpu.memory_space<vmem>>, vector<1x128xf32>
      %13 = vector.shape_cast %12 : vector<1x128xf32> to vector<1x128xf32>
      %14 = vector.broadcast %13 : vector<1x128xf32> to vector<16x128xf32>
      %c0_12 = arith.constant 0 : index
      %c0_13 = arith.constant 0 : index
      %15 = vector.load %arg9[%c0_12, %c0_13] : memref<16x128xf32, #tpu.memory_space<vmem>>, vector<16x128xf32>
      tpu.vector_store %arg9[%c0_12, %c0_13], %14 {strides = array<i32>} : memref<16x128xf32, #tpu.memory_space<vmem>>, vector<16x128xf32>,
    } else {
    }
    %c0 = arith.constant 0 : index
    %c0_1 = arith.constant 0 : index
    %3 = vector.load %arg9[%c0, %c0_1] : memref<16x128xf32, #tpu.memory_space<vmem>>, vector<16x128xf32>
    %c0_2 = arith.constant 0 : index
    %c0_3 = arith.constant 0 : index
    %4 = vector.load %arg3[%c0_2, %c0_3] : memref<16x512xbf16, #tpu.memory_space<vmem>>, vector<16x512xbf16>
    %c0_4 = arith.constant 0 : index
    %c0_5 = arith.constant 0 : index
    %5 = vector.load %arg4[%c0_4, %c0_5] : memref<512x128xbf16, #tpu.memory_space<vmem>>, vector<512x128xbf16>
    %cst = arith.constant dense<0.000000e+00> : vector<16x128xf32>
    %6 = tpu.matmul %4, %5, %cst {dimension_numbers = #tpu.dot_dimension_numbers<[1], [0], [0], [1], [0, 0, 1, 1], [], []>} : vector<16x512xbf16>, vector<512x128xbf16>, vector<16x128xf32> -> vector<16x128xf32>
    %7 = arith.addf %3, %6 : vector<16x128xf32>
    %c0_6 = arith.constant 0 : index
    %c0_7 = arith.constant 0 : index
    %8 = vector.load %arg9[%c0_6, %c0_7] : memref<16x128xf32, #tpu.memory_space<vmem>>, vector<16x128xf32>
    tpu.vector_store %arg9[%c0_6, %c0_7], %7 {strides = array<i32>} : memref<16x128xf32, #tpu.memory_space<vmem>>, vector<16x128xf32>,
    %c0_i32_8 = arith.constant 0 : i32
    %9 = arith.cmpi eq, %arg2, %c0_i32_8 : i32
    %10 = arith.extui %9 : i1 to i32
    %c0_i32_9 = arith.constant 0 : i32
    %11 = arith.cmpi ne, %10, %c0_i32_9 : i32
    scf.if %11 {
      %c0_10 = arith.constant 0 : index
      %c0_11 = arith.constant 0 : index
      %12 = vector.load %arg9[%c0_10, %c0_11] : memref<16x128xf32, #tpu.memory_space<vmem>>, vector<16x128xf32>
      %13 = arith.truncf %12 : vector<16x128xf32> to vector<16x128xbf16>
      %c0_12 = arith.constant 0 : index
      %c0_13 = arith.constant 0 : index
      %14 = vector.load %arg6[%c0_12, %c0_13] : memref<16x128xbf16, #tpu.memory_space<vmem>>, vector<16x128xbf16>
      tpu.vector_store %arg6[%c0_12, %c0_13], %13 {strides = array<i32>} : memref<16x128xbf16, #tpu.memory_space<vmem>>, vector<16x128xbf16>,
      %cst_14 = arith.constant dense<0.000000e+00> : vector<128xf32>
      %15 = vector.multi_reduction <add>, %12, %cst_14 [0] : vector<16x128xf32> to vector<128xf32>
      %16 = vector.shape_cast %15 : vector<128xf32> to vector<1x1x128xf32>
      %c0_15 = arith.constant 0 : index
      %c0_16 = arith.constant 0 : index
      %c0_17 = arith.constant 0 : index
      %17 = vector.load %arg7[%c0_15, %c0_16, %c0_17] : memref<1x1x128xf32, #tpu.memory_space<vmem>>, vector<1x1x128xf32>
      tpu.vector_store %arg7[%c0_15, %c0_16, %c0_17], %16 {strides = array<i32>} : memref<1x1x128xf32, #tpu.memory_space<vmem>>, vector<1x1x128xf32>,
      %18 = arith.mulf %12, %12 : vector<16x128xf32>
      %cst_18 = arith.constant dense<0.000000e+00> : vector<128xf32>
      %19 = vector.multi_reduction <add>, %18, %cst_18 [0] : vector<16x128xf32> to vector<128xf32>
      %20 = vector.shape_cast %19 : vector<128xf32> to vector<1x1x128xf32>
      %c0_19 = arith.constant 0 : index
      %c0_20 = arith.constant 0 : index
      %c0_21 = arith.constant 0 : index
      %21 = vector.load %arg8[%c0_19, %c0_20, %c0_21] : memref<1x1x128xf32, #tpu.memory_space<vmem>>, vector<1x1x128xf32>
      tpu.vector_store %arg8[%c0_19, %c0_20, %c0_21], %20 {strides = array<i32>} : memref<1x1x128xf32, #tpu.memory_space<vmem>>, vector<1x1x128xf32>,
    } else {
    }
    return
  }
  func.func @transform_0(%arg0: i32, %arg1: i32, %arg2: i32) -> (i32, i32) {
    %c0_i32 = arith.constant 0 : i32
    return %arg0, %arg2 : i32, i32
  }
  func.func @transform_1(%arg0: i32, %arg1: i32, %arg2: i32) -> (i32, i32) {
    %c0_i32 = arith.constant 0 : i32
    return %arg2, %arg1 : i32, i32
  }
  func.func @transform_2(%arg0: i32, %arg1: i32, %arg2: i32) -> (i32, i32) {
    %c0_i32 = arith.constant 0 : i32
    %c0_i32_0 = arith.constant 0 : i32
    return %c0_i32, %arg1 : i32, i32
  }
  func.func @transform_3(%arg0: i32, %arg1: i32, %arg2: i32) -> (i32, i32) {
    %c0_i32 = arith.constant 0 : i32
    return %arg0, %arg1 : i32, i32
  }
  func.func @transform_4(%arg0: i32, %arg1: i32, %arg2: i32) -> (i32, i32, i32) {
    %c0_i32 = arith.constant 0 : i32
    %c0_i32_0 = arith.constant 0 : i32
    return %arg0, %c0_i32, %arg1 : i32, i32, i32
  }
  func.func @transform_5(%arg0: i32, %arg1: i32, %arg2: i32) -> (i32, i32, i32) {
    %c0_i32 = arith.constant 0 : i32
    %c0_i32_0 = arith.constant 0 : i32
    return %arg0, %c0_i32, %arg1 : i32, i32, i32
  }
}

module attributes {stable_mosaic.version = 11 : i64} {
  func.func @_conv_kernel(%arg0: i32, %arg1: i32, %arg2: i32, %arg3: memref<32x1024xbf16, #tpu.memory_space<vmem>>, %arg4: memref<1024x128xbf16, #tpu.memory_space<vmem>>, %arg5: memref<1x128xf32, #tpu.memory_space<vmem>>, %arg6: memref<32x128xf32, #tpu.memory_space<vmem>>, %arg7: memref<32x128xf32, #tpu.memory_space<vmem>>) attributes {dimension_semantics = [#tpu.dimension_semantics<parallel>, #tpu.dimension_semantics<parallel>, #tpu.dimension_semantics<arbitrary>], iteration_bounds = array<i64: 2, 1, 1>, scalar_prefetch = 0 : i64, scratch_operands = 1 : i64, tpu.core_type = #tpu.core_type<tc>, window_params = [{transform_indices = @transform_0, window_bounds = array<i64: 32, 1024>}, {transform_indices = @transform_1, window_bounds = array<i64: 1024, 128>}, {transform_indices = @transform_2, window_bounds = array<i64: 1, 128>}, {transform_indices = @transform_3, window_bounds = array<i64: 32, 128>}]} {
    %c0_i32 = arith.constant 0 : i32
    %0 = arith.cmpi eq, %arg2, %c0_i32 : i32
    %1 = arith.extui %0 : i1 to i32
    %c0_i32_0 = arith.constant 0 : i32
    %2 = arith.cmpi ne, %1, %c0_i32_0 : i32
    scf.if %2 {
      %c0_10 = arith.constant 0 : index
      %c0_11 = arith.constant 0 : index
      %12 = vector.load %arg5[%c0_10, %c0_11] : memref<1x128xf32, #tpu.memory_space<vmem>>, vector<1x128xf32>
      %13 = vector.shape_cast %12 : vector<1x128xf32> to vector<1x128xf32>
      %14 = vector.broadcast %13 : vector<1x128xf32> to vector<32x128xf32>
      %c0_12 = arith.constant 0 : index
      %c0_13 = arith.constant 0 : index
      %15 = vector.load %arg7[%c0_12, %c0_13] : memref<32x128xf32, #tpu.memory_space<vmem>>, vector<32x128xf32>
      tpu.vector_store %arg7[%c0_12, %c0_13], %14 {strides = array<i32>} : memref<32x128xf32, #tpu.memory_space<vmem>>, vector<32x128xf32>,
    } else {
    }
    %c0 = arith.constant 0 : index
    %c0_1 = arith.constant 0 : index
    %3 = vector.load %arg7[%c0, %c0_1] : memref<32x128xf32, #tpu.memory_space<vmem>>, vector<32x128xf32>
    %c0_2 = arith.constant 0 : index
    %c0_3 = arith.constant 0 : index
    %4 = vector.load %arg3[%c0_2, %c0_3] : memref<32x1024xbf16, #tpu.memory_space<vmem>>, vector<32x1024xbf16>
    %c0_4 = arith.constant 0 : index
    %c0_5 = arith.constant 0 : index
    %5 = vector.load %arg4[%c0_4, %c0_5] : memref<1024x128xbf16, #tpu.memory_space<vmem>>, vector<1024x128xbf16>
    %cst = arith.constant dense<0.000000e+00> : vector<32x128xf32>
    %6 = tpu.matmul %4, %5, %cst {dimension_numbers = #tpu.dot_dimension_numbers<[1], [0], [0], [1], [0, 0, 1, 1], [], []>} : vector<32x1024xbf16>, vector<1024x128xbf16>, vector<32x128xf32> -> vector<32x128xf32>
    %7 = arith.addf %3, %6 : vector<32x128xf32>
    %c0_6 = arith.constant 0 : index
    %c0_7 = arith.constant 0 : index
    %8 = vector.load %arg7[%c0_6, %c0_7] : memref<32x128xf32, #tpu.memory_space<vmem>>, vector<32x128xf32>
    tpu.vector_store %arg7[%c0_6, %c0_7], %7 {strides = array<i32>} : memref<32x128xf32, #tpu.memory_space<vmem>>, vector<32x128xf32>,
    %c0_i32_8 = arith.constant 0 : i32
    %9 = arith.cmpi eq, %arg2, %c0_i32_8 : i32
    %10 = arith.extui %9 : i1 to i32
    %c0_i32_9 = arith.constant 0 : i32
    %11 = arith.cmpi ne, %10, %c0_i32_9 : i32
    scf.if %11 {
      %c0_10 = arith.constant 0 : index
      %c0_11 = arith.constant 0 : index
      %12 = vector.load %arg7[%c0_10, %c0_11] : memref<32x128xf32, #tpu.memory_space<vmem>>, vector<32x128xf32>
      %c0_12 = arith.constant 0 : index
      %c0_13 = arith.constant 0 : index
      %13 = vector.load %arg6[%c0_12, %c0_13] : memref<32x128xf32, #tpu.memory_space<vmem>>, vector<32x128xf32>
      tpu.vector_store %arg6[%c0_12, %c0_13], %12 {strides = array<i32>} : memref<32x128xf32, #tpu.memory_space<vmem>>, vector<32x128xf32>,
    } else {
    }
    return
  }
  func.func @transform_0(%arg0: i32, %arg1: i32, %arg2: i32) -> (i32, i32) {
    %c0_i32 = arith.constant 0 : i32
    return %arg0, %arg2 : i32, i32
  }
  func.func @transform_1(%arg0: i32, %arg1: i32, %arg2: i32) -> (i32, i32) {
    %c0_i32 = arith.constant 0 : i32
    return %arg2, %arg1 : i32, i32
  }
  func.func @transform_2(%arg0: i32, %arg1: i32, %arg2: i32) -> (i32, i32) {
    %c0_i32 = arith.constant 0 : i32
    %c0_i32_0 = arith.constant 0 : i32
    return %c0_i32, %arg1 : i32, i32
  }
  func.func @transform_3(%arg0: i32, %arg1: i32, %arg2: i32) -> (i32, i32) {
    %c0_i32 = arith.constant 0 : i32
    return %arg0, %arg1 : i32, i32
  }
}

</mosaic_0001>

<llo_original>
// kernel: _lambda_.5
$region0: #{_lambda_.5}
  #allocation0 [shape = 'u32[]', space=smem, size = 0x4, offset = 0x4, fixed_abs, tag = 'smem constant byte address 0x4 - core index']
  #allocation1 [shape = 'u32[72,128]{1,0:T(1,128)}', space=vmem, size = 0x9000, scoped, tag = 'internal scratch']
  #allocation2 [shape = 'f32[96,128]{1,0:T(8,128)}', space=vmem, size = 0xc000, scoped, tag = 'scratch operand']
  %s0 = inlined_call_operand.vmem [shape: bf16[192,128], index: 0, kind: input, shape index: {}]
  %s1 = inlined_call_operand.vmem [shape: bf16[128,128], index: 1, kind: input, shape index: {}]
  %s2 = inlined_call_operand.vmem [shape: f32[1,128], index: 2, kind: input, shape index: {}]
  %s3 = inlined_call_operand.vmem [shape: bf16[192,128], index: 3, kind: output, shape index: {}]
  %s4 = sld [smem:[#allocation0]]
  $region53: #{_lambda_.5} parent=0
    _
  %s6 = ssub.s32 1, %s4
  %s7 = scalar_select 0, %s6, %s4
  loop: start=0, step=1, limit=4
  $region2: #{_lambda_.5} parent=0 // loop_pre_header
    _
  $region3: #{_lambda_.5} parent=0 // loop_header
    %s9 = sphi 0, %s13
    %p10 = scmp.ge.s32.totalorder %s9, 4
    %s16 = sphi 0, %s35
    %s17 = sphi 0, %s31
    %s18 = sphi 0, %s27
    %s19 = sphi 0, %s16
    %s20 = sphi 0, %s17
    %s21 = sphi 0, %s18
    %s22 = sphi 0, %s19
    %s23 = sphi 0, %s20
    %s24 = sphi 0, %s21
    %s40 = sphi 0, %s42
    %s43 = sphi 0, %s40
    %s44 = sphi 0, %s43
    %s60 = sphi 0, %s44
    %s68 = sphi 0, %s70
    %s71 = sphi 0, %s68
    %s72 = sphi 0, %s71
    %s88 = sphi 0, %s72
    %s94 = sphi 0, %s96
    %s97 = sphi 0, %s94
    %s98 = sphi 0, %s97
    %s114 = sphi 0, %s98
    %s122 = sphi 0, %s124
    %s125 = sphi 0, %s122
    %s126 = sphi 0, %s125
    %s142 = sphi 0, %s126
  $region4: #{_lambda_.5} parent=0 // loop_header_branch
    %12 = sbr.rel (%p10) target = $region8
  $region5: #{_lambda_.5} parent=0 // loop_body
    %s14 = ssub.s32 %s9, 1
    %s15 = ssub.s32 %s9, 2
    %s25 = sadd.s32 1, %s18
    %p26 = scmp.ge.s32.totalorder %s25, 1
    %s27 = scalar_select %p26, 0, %s25
    %s28 = sadd.s32 1, %s17
    %s29 = scalar_select %p26, %s28, %s17
    %p30 = scmp.ge.s32.totalorder %s29, 1
    %s31 = scalar_select %p30, 0, %s29
    %s32 = sadd.s32 1, %s16
    %s33 = scalar_select %p30, %s32, %s16
    %p34 = scmp.ge.s32.totalorder %s33, 2
    %s35 = scalar_select %p34, 0, %s33
    %s36 = ssub.s32 %s16, %s35
    %s37 = ssub.s32 %s18, %s27
    %s38 = sor.u32 %s36, %s37
    %p39 = scmp.eq.s32.totalorder %s38, 0
    %s41 = sadd.s32 %s40, 1
    %s42 = scalar_select %p39, %s40, %s41
    %p45 = pneg %p39
    %p46 = scmp.eq.s32.totalorder %s9, 1
    %p47 = por %p45, %p46
    %p48 = scmp.ne.s32.totalorder %s40, %s43
    %p49 = scmp.eq.s32.totalorder %s9, 0
    %p50 = por %p48, %p49
    %p51 = scmp.ne.s32.totalorder %s40, %s43
    %p52 = scmp.eq.s32.totalorder %s14, 1
    %p53 = por %p51, %p52
    %p54 = scmp.ne.s32.totalorder %s43, %s44
    %p55 = scmp.eq.s32.totalorder %s14, 0
    %p56 = por %p54, %p55
    %p57 = scmp.ne.s32.totalorder %s43, %s44
    %p58 = scmp.eq.s32.totalorder %s15, 1
    %p59 = por %p57, %p58
    %p61 = scmp.ne.s32.totalorder %s44, %s60
    %p62 = scmp.eq.s32.totalorder %s15, 0
    %p63 = por %p61, %p62
    %s64 = ssub.s32 %s18, %s27
    %s65 = ssub.s32 %s17, %s31
    %s66 = sor.u32 %s64, %s65
    %p67 = scmp.eq.s32.totalorder %s66, 0
    %s69 = sadd.s32 %s68, 1
    %s70 = scalar_select %p67, %s68, %s69
    %p73 = pneg %p67
    %p74 = scmp.eq.s32.totalorder %s9, 1
    %p75 = por %p73, %p74
    %p76 = scmp.ne.s32.totalorder %s68, %s71
    %p77 = scmp.eq.s32.totalorder %s9, 0
    %p78 = por %p76, %p77
    %p79 = scmp.ne.s32.totalorder %s68, %s71
    %p80 = scmp.eq.s32.totalorder %s14, 1
    %p81 = por %p79, %p80
    %p82 = scmp.ne.s32.totalorder %s71, %s72
    %p83 = scmp.eq.s32.totalorder %s14, 0
    %p84 = por %p82, %p83
    %p85 = scmp.ne.s32.totalorder %s71, %s72
    %p86 = scmp.eq.s32.totalorder %s15, 1
    %p87 = por %p85, %p86
    %p89 = scmp.ne.s32.totalorder %s72, %s88
    %p90 = scmp.eq.s32.totalorder %s15, 0
    %p91 = por %p89, %p90
    %s92 = ssub.s32 %s17, %s31
    %p93 = scmp.eq.s32.totalorder %s92, 0
    %s95 = sadd.s32 %s94, 1
    %s96 = scalar_select %p93, %s94, %s95
    %p99 = pneg %p93
    %p100 = scmp.eq.s32.totalorder %s9, 1
    %p101 = por %p99, %p100
    %p102 = scmp.ne.s32.totalorder %s94, %s97
    %p103 = scmp.eq.s32.totalorder %s9, 0
    %p104 = por %p102, %p103
    %p105 = scmp.ne.s32.totalorder %s94, %s97
    %p106 = scmp.eq.s32.totalorder %s14, 1
    %p107 = por %p105, %p106
    %p108 = scmp.ne.s32.totalorder %s97, %s98
    %p109 = scmp.eq.s32.totalorder %s14, 0
    %p110 = por %p108, %p109
    %p111 = scmp.ne.s32.totalorder %s97, %s98
    %p112 = scmp.eq.s32.totalorder %s15, 1
    %p113 = por %p111, %p112
    %p115 = scmp.ne.s32.totalorder %s98, %s114
    %p116 = scmp.eq.s32.totalorder %s15, 0
    %p117 = por %p115, %p116
    %s118 = ssub.s32 %s16, %s35
    %s119 = ssub.s32 %s17, %s31
    %s120 = sor.u32 %s118, %s119
    %p121 = scmp.eq.s32.totalorder %s120, 0
    %s123 = sadd.s32 %s122, 1
    %s124 = scalar_select %p121, %s122, %s123
    %p127 = pneg %p121
    %p128 = scmp.eq.s32.totalorder %s9, 1
    %p129 = por %p127, %p128
    %p130 = scmp.ne.s32.totalorder %s122, %s125
    %p131 = scmp.eq.s32.totalorder %s9, 0
    %p132 = por %p130, %p131
    %p133 = scmp.ne.s32.totalorder %s122, %s125
    %p134 = scmp.eq.s32.totalorder %s14, 1
    %p135 = por %p133, %p134
    %p136 = scmp.ne.s32.totalorder %s125, %s126
    %p137 = scmp.eq.s32.totalorder %s14, 0
    %p138 = por %p136, %p137
    %p139 = scmp.ne.s32.totalorder %s125, %s126
    %p140 = scmp.eq.s32.totalorder %s15, 1
    %p141 = por %p139, %p140
    %p143 = scmp.ne.s32.totalorder %s126, %s142
    %p144 = scmp.eq.s32.totalorder %s15, 0
    %p145 = por %p143, %p144
    %p146 = scmp.le.s32.totalorder 1, %s9
    %p147 = scmp.lt.s32.totalorder %s9, 3
    %p148 = pnand %p146, %p147
    %p149 = pneg %p148
    // Predicated region
    $region9: #{_lambda_.5} parent=5 // pred_check
      _
    $region10: #{_lambda_.5} parent=5 // pred_check_branch
      %151 = sbr.rel (%p148) target = $region12
    $region11: #{_lambda_.5} parent=5 // pred_region
      %s152 = ssub.s32 %s9, 1
      // Predicated region
      $region13: #{_lambda_.5} parent=11 // pred_check
        %p153 = pneg %p84
      $region14: #{_lambda_.5} parent=11 // pred_check_branch
        %155 = sbr.rel (%p153) target = $region16
      $region15: #{_lambda_.5} parent=11 // pred_region
        %s156 = smul.u32 16, %s21
        %p157 = scmp.lt.s32.totalorder %s156, 15
        %s158 = scalar_select %p157, %s156, 15
        %p159 = scmp.lt.s32.totalorder %s20, 0
        %s160 = scalar_select %p159, %s20, 0
        %s161 = sadd.s32 %s160, %s158
        %s162 = smul.addr %s161, 4
        %s163 = scalar_lea.vmem %s1, %s162
        %s164 = smul.u32 16, %s21
      $region16: #{_lambda_.5} parent=11 // pred_fallthru
        _
      // Predicated region
      $region17: #{_lambda_.5} parent=11 // pred_check
        %p165 = pneg %p110
      $region18: #{_lambda_.5} parent=11 // pred_check_branch
        %167 = sbr.rel (%p165) target = $region20
      $region19: #{_lambda_.5} parent=11 // pred_region
        %p168 = scmp.lt.s32.totalorder %s20, 0
        %s169 = scalar_select %p168, %s20, 0
        %s170 = scalar_lea.vmem %s2, %s169
      $region20: #{_lambda_.5} parent=11 // pred_fallthru
        _
    $region12: #{_lambda_.5} parent=5 // pred_fallthru
      _
    %p171 = scmp.lt.s32.totalorder %s9, 2
    // Predicated region
    $region21: #{_lambda_.5} parent=5 // pred_check
      %p172 = pneg %p171
    $region22: #{_lambda_.5} parent=5 // pred_check_branch
      %174 = sbr.rel (%p172) target = $region24
    $region23: #{_lambda_.5} parent=5 // pred_region
      // Predicated region
      $region25: #{_lambda_.5} parent=23 // pred_check
        %p175 = pneg %p50
      $region26: #{_lambda_.5} parent=23 // pred_check_branch
        %177 = sbr.rel (%p175) target = $region28
      $region27: #{_lambda_.5} parent=23 // pred_region
        %s178 = smul.u32 12, %s16
        %p179 = scmp.lt.s32.totalorder %s178, 23
        %s180 = scalar_select %p179, %s178, 23
        %p181 = scmp.lt.s32.totalorder %s18, 0
        %s182 = scalar_select %p181, %s18, 0
        %s183 = sadd.s32 %s182, %s180
        %s184 = smul.addr %s183, 4
        %s185 = scalar_lea.vmem %s0, %s184
        %s186 = smul.u32 12, %s16
      $region28: #{_lambda_.5} parent=23 // pred_fallthru
        _
    $region24: #{_lambda_.5} parent=5 // pred_fallthru
      _
    %p187 = scmp.le.s32.totalorder 1, %s9
    %p188 = scmp.lt.s32.totalorder %s9, 3
    %p189 = pnand %p187, %p188
    %p190 = pneg %p189
    // Predicated region
    $region29: #{_lambda_.5} parent=5 // pred_check
      _
    $region30: #{_lambda_.5} parent=5 // pred_check_branch
      %192 = sbr.rel (%p189) target = $region32
    $region31: #{_lambda_.5} parent=5 // pred_region
      %s193 = ssub.s32 %s9, 1
      %s194 = smul.u32 12, %s19
      %p195 = scmp.lt.s32.totalorder %s194, 23
      %s196 = scalar_select %p195, %s194, 23
      %p197 = scmp.lt.s32.totalorder %s21, 0
      %s198 = scalar_select %p197, %s21, 0
      %s199 = sadd.s32 %s198, %s196
      %s200 = smul.addr %s199, 4
      %s201 = scalar_lea.vmem %s0, %s200
      %p202 = pneg %p56
      %p203 = pneg %p53
      %s204 = smul.u32 16, %s21
      %p205 = scmp.lt.s32.totalorder %s204, 15
      %s206 = scalar_select %p205, %s204, 15
      %p207 = scmp.lt.s32.totalorder %s20, 0
      %s208 = scalar_select %p207, %s20, 0
      %s209 = sadd.s32 %s208, %s206
      %s210 = smul.addr %s209, 4
      %s211 = scalar_lea.vmem %s1, %s210
      %p212 = pneg %p84
      %p213 = pneg %p81
      %p214 = scmp.lt.s32.totalorder %s20, 0
      %s215 = scalar_select %p214, %s20, 0
      %s216 = scalar_lea.vmem %s2, %s215
      %p217 = pneg %p110
      %p218 = pneg %p107
      %p219 = pneg %p138
      %p220 = pneg %p135
      %s221 = smul.u32 12, %s19
      %p222 = scmp.lt.s32.totalorder %s221, 23
      %s223 = scalar_select %p222, %s221, 23
      %p224 = scmp.lt.s32.totalorder %s20, 0
      %s225 = scalar_select %p224, %s20, 0
      %s226 = sadd.s32 %s225, %s223
      %s227 = smul.addr %s226, 4
      %s228 = scalar_lea.vmem %s3, %s227
      %s229 = smul.u32 12, %s19
      %p230 = scmp.lt.s32.totalorder %s229, 23
      %s231 = scalar_select %p230, %s229, 23
      %p232 = scmp.lt.s32.totalorder %s21, 0
      %s233 = scalar_select %p232, %s21, 0
      %s234 = sadd.s32 %s233, %s231
      %s235 = smul.addr %s234, 4
      %s236 = scalar_lea.vmem %s0, %s235
      %s237 = smul.u32 12, %s19
      %s238 = smul.u32 16, %s21
      %p239 = scmp.lt.s32.totalorder %s238, 15
      %s240 = scalar_select %p239, %s238, 15
      %p241 = scmp.lt.s32.totalorder %s20, 0
      %s242 = scalar_select %p241, %s20, 0
      %s243 = sadd.s32 %s242, %s240
      %s244 = smul.addr %s243, 4
      %s245 = scalar_lea.vmem %s1, %s244
      %s246 = smul.u32 16, %s21
      %p247 = scmp.lt.s32.totalorder %s20, 0
      %s248 = scalar_select %p247, %s20, 0
      %s249 = scalar_lea.vmem %s2, %s248
      %s250 = smul.u32 12, %s19
      %p251 = scmp.lt.s32.totalorder %s250, 23
      %s252 = scalar_select %p251, %s250, 23
      %p253 = scmp.lt.s32.totalorder %s20, 0
      %s254 = scalar_select %p253, %s20, 0
      %s255 = sadd.s32 %s254, %s252
      %s256 = smul.addr %s255, 4
      %s257 = scalar_lea.vmem %s3, %s256
      %s258 = smul.u32 12, %s19
      %p259 = scmp.eq.s32.totalorder %s21, 0
      // Predicated region
      $region33: #{_lambda_.5} parent=31 // pred_check
        %p260 = pneg %p259
      $region34: #{_lambda_.5} parent=31 // pred_check_branch
        %262 = sbr.rel (%p260) target = $region36
      $region35: #{_lambda_.5} parent=31 // pred_region
        %v263 = vld [vmem:[%s249] sm:$0x1]
        %v265 = vperm.slane %v263, 0
        %267 = vst [vmem:[#allocation2] sm:$0xff] %v265
        %268 = vst [vmem:[#allocation2 + $0x8] sm:$0xff] %v265
        %269 = vst [vmem:[#allocation2 + $0x10] sm:$0xff] %v265
        %270 = vst [vmem:[#allocation2 + $0x18] sm:$0xff] %v265
        %271 = vst [vmem:[#allocation2 + $0x20] sm:$0xff] %v265
        %272 = vst [vmem:[#allocation2 + $0x28] sm:$0xff] %v265
        %273 = vst [vmem:[#allocation2 + $0x30] sm:$0xff] %v265
        %274 = vst [vmem:[#allocation2 + $0x38] sm:$0xff] %v265
        %275 = vst [vmem:[#allocation2 + $0x40] sm:$0xff] %v265
        %276 = vst [vmem:[#allocation2 + $0x48] sm:$0xff] %v265
        %277 = vst [vmem:[#allocation2 + $0x50] sm:$0xff] %v265
        %278 = vst [vmem:[#allocation2 + $0x58] sm:$0xff] %v265
      $region36: #{_lambda_.5} parent=31 // pred_fallthru
        _
      %v279 = vld [vmem:[#allocation2] sm:$0xff]
      %v280 = vld [vmem:[#allocation2 + $0x8] sm:$0xff]
      %v281 = vld [vmem:[#allocation2 + $0x10] sm:$0xff]
      %v282 = vld [vmem:[#allocation2 + $0x18] sm:$0xff]
      %v283 = vld [vmem:[#allocation2 + $0x20] sm:$0xff]
      %v284 = vld [vmem:[#allocation2 + $0x28] sm:$0xff]
      %v285 = vld [vmem:[#allocation2 + $0x30] sm:$0xff]
      %v286 = vld [vmem:[#allocation2 + $0x38] sm:$0xff]
      %v287 = vld [vmem:[#allocation2 + $0x40] sm:$0xff]
      %v288 = vld [vmem:[#allocation2 + $0x48] sm:$0xff]
      %v289 = vld [vmem:[#allocation2 + $0x50] sm:$0xff]
      %v290 = vld [vmem:[#allocation2 + $0x58] sm:$0xff]
      %v291 = vld [vmem:[%s236] sm:$0xf]
      %v292 = vld [vmem:[%s236 + $0x4] sm:$0xf]
      %v293 = vld [vmem:[%s236 + $0x8] sm:$0xf]
      %v294 = vld [vmem:[%s236 + $0xc] sm:$0xf]
      %v295 = vld [vmem:[%s236 + $0x10] sm:$0xf]
      %v296 = vld [vmem:[%s236 + $0x14] sm:$0xf]
      %v297 = vld [vmem:[%s236 + $0x18] sm:$0xf]
      %v298 = vld [vmem:[%s236 + $0x1c] sm:$0xf]
      %v299 = vld [vmem:[%s236 + $0x20] sm:$0xf]
      %v300 = vld [vmem:[%s236 + $0x24] sm:$0xf]
      %v301 = vld [vmem:[%s236 + $0x28] sm:$0xf]
      %v302 = vld [vmem:[%s236 + $0x2c] sm:$0xf]
      %v303 = vld [vmem:[%s245] sm:$0xf]
      %v304 = vld [vmem:[%s245 + $0x4] sm:$0xf]
      %v305 = vld [vmem:[%s245 + $0x8] sm:$0xf]
      %v306 = vld [vmem:[%s245 + $0xc] sm:$0xf]
      %v307 = vld [vmem:[%s245 + $0x10] sm:$0xf]
      %v308 = vld [vmem:[%s245 + $0x14] sm:$0xf]
      %v309 = vld [vmem:[%s245 + $0x18] sm:$0xf]
      %v310 = vld [vmem:[%s245 + $0x1c] sm:$0xf]
      %v311 = vld [vmem:[%s245 + $0x20] sm:$0xf]
      %v312 = vld [vmem:[%s245 + $0x24] sm:$0xf]
      %v313 = vld [vmem:[%s245 + $0x28] sm:$0xf]
      %v314 = vld [vmem:[%s245 + $0x2c] sm:$0xf]
      %v315 = vld [vmem:[%s245 + $0x30] sm:$0xf]
      %v316 = vld [vmem:[%s245 + $0x34] sm:$0xf]
      %v317 = vld [vmem:[%s245 + $0x38] sm:$0xf]
      %v318 = vld [vmem:[%s245 + $0x3c] sm:$0xf]
      %v331 = vunpack.c.l.b16 %v291
      %v332 = vunpack.c.l.b16 %v292
      %v333 = vunpack.c.l.b16 %v293
      %v334 = vunpack.c.l.b16 %v294
      %v335 = vunpack.c.l.b16 %v295
      %v336 = vunpack.c.l.b16 %v296
      %v337 = vunpack.c.l.b16 %v297
      %v338 = vunpack.c.l.b16 %v298
      %v339 = vunpack.c.l.b16 %v299
      %v340 = vunpack.c.l.b16 %v300
      %v341 = vunpack.c.l.b16 %v301
      %v342 = vunpack.c.l.b16 %v302
      %v343 = vpack.c.b16 %v332, %v331
      %v344 = vpack.c.b16 %v334, %v333
      %v345 = vpack.c.b16 %v336, %v335
      %v346 = vpack.c.b16 %v338, %v337
      %v347 = vpack.c.b16 %v340, %v339
      %v348 = vpack.c.b16 %v342, %v341
      %v371 = vunpack.c.l.b16 %v303
      %v372 = vunpack.c.l.b16 %v304
      %v373 = vunpack.c.l.b16 %v305
      %v374 = vunpack.c.l.b16 %v306
      %v375 = vunpack.c.l.b16 %v307
      %v376 = vunpack.c.l.b16 %v308
      %v377 = vunpack.c.l.b16 %v309
      %v378 = vunpack.c.l.b16 %v310
      %v379 = vunpack.c.l.b16 %v311
      %v380 = vunpack.c.l.b16 %v312
      %v381 = vunpack.c.l.b16 %v313
      %v382 = vunpack.c.l.b16 %v314
      %v383 = vunpack.c.l.b16 %v315
      %v384 = vunpack.c.l.b16 %v316
      %v385 = vunpack.c.l.b16 %v317
      %v386 = vunpack.c.l.b16 %v318
      %v387 = vpack.c.b16 %v372, %v371
      %v388 = vpack.c.b16 %v374, %v373
      %v389 = vpack.c.b16 %v376, %v375
      %v390 = vpack.c.b16 %v378, %v377
      %v391 = vpack.c.b16 %v380, %v379
      %v392 = vpack.c.b16 %v382, %v381
      %v393 = vpack.c.b16 %v384, %v383
      %v394 = vpack.c.b16 %v386, %v385
      %403 = vmatpush.bf16.msra.mxu0 %v394
      %404 = vmatpush.bf16.msra.mxu0 %v393
      %405 = vmatpush.bf16.msra.mxu0 %v392
      %406 = vmatpush.bf16.msra.mxu0 %v391
      %407 = vmatpush.bf16.msra.mxu0 %v390
      %408 = vmatpush.bf16.msra.mxu0 %v389
      %409 = vmatpush.bf16.msra.mxu0 %v388
      %410 = vmatpush.bf16.msra.mxu0 %v387
      %411 = vmatmul.bf16.gmra.mxu0 %v343
      %v412 = vpop.f32.mrf.mxu0
      %v413 = vadd.f32 0.0, %v412
      %v414 = vpop.f32.mrf.mxu0
      %v415 = vadd.f32 0.0, %v414
      %416 = vmatmul.bf16.gmra.mxu0 %v344
      %v417 = vpop.f32.mrf.mxu0
      %v418 = vadd.f32 0.0, %v417
      %v419 = vpop.f32.mrf.mxu0
      %v420 = vadd.f32 0.0, %v419
      %421 = vmatmul.bf16.gmra.mxu0 %v345
      %v422 = vpop.f32.mrf.mxu0
      %v423 = vadd.f32 0.0, %v422
      %v424 = vpop.f32.mrf.mxu0
      %v425 = vadd.f32 0.0, %v424
      %426 = vmatmul.bf16.gmra.mxu0 %v346
      %v427 = vpop.f32.mrf.mxu0
      %v428 = vadd.f32 0.0, %v427
      %v429 = vpop.f32.mrf.mxu0
      %v430 = vadd.f32 0.0, %v429
      %431 = vmatmul.bf16.gmra.mxu0 %v347
      %v432 = vpop.f32.mrf.mxu0
      %v433 = vadd.f32 0.0, %v432
      %v434 = vpop.f32.mrf.mxu0
      %v435 = vadd.f32 0.0, %v434
      %436 = vmatmul.bf16.gmra.mxu0 %v348
      %v437 = vpop.f32.mrf.mxu0
      %v438 = vadd.f32 0.0, %v437
      %v439 = vpop.f32.mrf.mxu0
      %v440 = vadd.f32 0.0, %v439
      %441 = vdwg.mxu0
      %v442 = vadd.f32 %v279, %v413
      %v443 = vadd.f32 %v280, %v415
      %v444 = vadd.f32 %v281, %v418
      %v445 = vadd.f32 %v282, %v420
      %v446 = vadd.f32 %v283, %v423
      %v447 = vadd.f32 %v284, %v425
      %v448 = vadd.f32 %v285, %v428
      %v449 = vadd.f32 %v286, %v430
      %v450 = vadd.f32 %v287, %v433
      %v451 = vadd.f32 %v288, %v435
      %v452 = vadd.f32 %v289, %v438
      %v453 = vadd.f32 %v290, %v440
      %454 = vst [vmem:[#allocation2] sm:$0xff] %v442
      %455 = vst [vmem:[#allocation2 + $0x8] sm:$0xff] %v443
      %456 = vst [vmem:[#allocation2 + $0x10] sm:$0xff] %v444
      %457 = vst [vmem:[#allocation2 + $0x18] sm:$0xff] %v445
      %458 = vst [vmem:[#allocation2 + $0x20] sm:$0xff] %v446
      %459 = vst [vmem:[#allocation2 + $0x28] sm:$0xff] %v447
      %460 = vst [vmem:[#allocation2 + $0x30] sm:$0xff] %v448
      %461 = vst [vmem:[#allocation2 + $0x38] sm:$0xff] %v449
      %462 = vst [vmem:[#allocation2 + $0x40] sm:$0xff] %v450
      %463 = vst [vmem:[#allocation2 + $0x48] sm:$0xff] %v451
      %464 = vst [vmem:[#allocation2 + $0x50] sm:$0xff] %v452
      %465 = vst [vmem:[#allocation2 + $0x58] sm:$0xff] %v453
      // Predicated region
      $region37: #{_lambda_.5} parent=31 // pred_check
        %p466 = pneg %p259
      $region38: #{_lambda_.5} parent=31 // pred_check_branch
        %468 = sbr.rel (%p466) target = $region40
      $region39: #{_lambda_.5} parent=31 // pred_region
        %v469 = vld [vmem:[#allocation2] sm:$0xff]
        %v470 = vld [vmem:[#allocation2 + $0x8] sm:$0xff]
        %v471 = vld [vmem:[#allocation2 + $0x10] sm:$0xff]
        %v472 = vld [vmem:[#allocation2 + $0x18] sm:$0xff]
        %v473 = vld [vmem:[#allocation2 + $0x20] sm:$0xff]
        %v474 = vld [vmem:[#allocation2 + $0x28] sm:$0xff]
        %v475 = vld [vmem:[#allocation2 + $0x30] sm:$0xff]
        %v476 = vld [vmem:[#allocation2 + $0x38] sm:$0xff]
        %v477 = vld [vmem:[#allocation2 + $0x40] sm:$0xff]
        %v478 = vld [vmem:[#allocation2 + $0x48] sm:$0xff]
        %v479 = vld [vmem:[#allocation2 + $0x50] sm:$0xff]
        %v480 = vld [vmem:[#allocation2 + $0x58] sm:$0xff]
        %vm481 = vcmp.gt.f32.partialorder %v469, 0.0
        %vm482 = vcmp.gt.f32.partialorder %v470, 0.0
        %vm483 = vcmp.gt.f32.partialorder %v471, 0.0
        %vm484 = vcmp.gt.f32.partialorder %v472, 0.0
        %vm485 = vcmp.gt.f32.partialorder %v473, 0.0
        %vm486 = vcmp.gt.f32.partialorder %v474, 0.0
        %vm487 = vcmp.gt.f32.partialorder %v475, 0.0
        %vm488 = vcmp.gt.f32.partialorder %v476, 0.0
        %vm489 = vcmp.gt.f32.partialorder %v477, 0.0
        %vm490 = vcmp.gt.f32.partialorder %v478, 0.0
        %vm491 = vcmp.gt.f32.partialorder %v479, 0.0
        %vm492 = vcmp.gt.f32.partialorder %v480, 0.0
        %v493 = vmul.f32 %v469, 0.2
        %v494 = vmul.f32 %v470, 0.2
        %v495 = vmul.f32 %v471, 0.2
        %v496 = vmul.f32 %v472, 0.2
        %v497 = vmul.f32 %v473, 0.2
        %v498 = vmul.f32 %v474, 0.2
        %v499 = vmul.f32 %v475, 0.2
        %v500 = vmul.f32 %v476, 0.2
        %v501 = vmul.f32 %v477, 0.2
        %v502 = vmul.f32 %v478, 0.2
        %v503 = vmul.f32 %v479, 0.2
        %v504 = vmul.f32 %v480, 0.2
        %v505 = vsel %vm481, %v469, %v493
        %v506 = vsel %vm482, %v470, %v494
        %v507 = vsel %vm483, %v471, %v495
        %v508 = vsel %vm484, %v472, %v496
        %v509 = vsel %vm485, %v473, %v497
        %v510 = vsel %vm486, %v474, %v498
        %v511 = vsel %vm487, %v475, %v499
        %v512 = vsel %vm488, %v476, %v500
        %v513 = vsel %vm489, %v477, %v501
        %v514 = vsel %vm490, %v478, %v502
        %v515 = vsel %vm491, %v479, %v503
        %v516 = vsel %vm492, %v480, %v504
        %v517 = vpack.c.bf16 %v505, %v505
        %v518 = vpack.c.bf16 %v506, %v506
        %v519 = vpack.c.bf16 %v507, %v507
        %v520 = vpack.c.bf16 %v508, %v508
        %v521 = vpack.c.bf16 %v509, %v509
        %v522 = vpack.c.bf16 %v510, %v510
        %v523 = vpack.c.bf16 %v511, %v511
        %v524 = vpack.c.bf16 %v512, %v512
        %v525 = vpack.c.bf16 %v513, %v513
        %v526 = vpack.c.bf16 %v514, %v514
        %v527 = vpack.c.bf16 %v515, %v515
        %v528 = vpack.c.bf16 %v516, %v516
        %529 = vst [vmem:[%s257] sm:$0xf] %v517
        %530 = vst [vmem:[%s257 + $0x4] sm:$0xf] %v518
        %531 = vst [vmem:[%s257 + $0x8] sm:$0xf] %v519
        %532 = vst [vmem:[%s257 + $0xc] sm:$0xf] %v520
        %533 = vst [vmem:[%s257 + $0x10] sm:$0xf] %v521
        %534 = vst [vmem:[%s257 + $0x14] sm:$0xf] %v522
        %535 = vst [vmem:[%s257 + $0x18] sm:$0xf] %v523
        %536 = vst [vmem:[%s257 + $0x1c] sm:$0xf] %v524
        %537 = vst [vmem:[%s257 + $0x20] sm:$0xf] %v525
        %538 = vst [vmem:[%s257 + $0x24] sm:$0xf] %v526
        %539 = vst [vmem:[%s257 + $0x28] sm:$0xf] %v527
        %540 = vst [vmem:[%s257 + $0x2c] sm:$0xf] %v528
      $region40: #{_lambda_.5} parent=31 // pred_fallthru
        _
      %s541 = smul.u32 12, %s19
      %p542 = scmp.lt.s32.totalorder %s541, 23
      %s543 = scalar_select %p542, %s541, 23
      %p544 = scmp.lt.s32.totalorder %s20, 0
      %s545 = scalar_select %p544, %s20, 0
      %s546 = sadd.s32 %s545, %s543
      %s547 = smul.addr %s546, 4
      %s548 = scalar_lea.vmem %s3, %s547
      // Predicated region
      $region41: #{_lambda_.5} parent=31 // pred_check
        %p549 = pneg %p135
      $region42: #{_lambda_.5} parent=31 // pred_check_branch
        %551 = sbr.rel (%p549) target = $region44
      $region43: #{_lambda_.5} parent=31 // pred_region
        %s552 = smul.u32 12, %s19
      $region44: #{_lambda_.5} parent=31 // pred_fallthru
        _
    $region32: #{_lambda_.5} parent=5 // pred_fallthru
      _
    %p553 = scmp.le.s32.totalorder 2, %s9
    // Predicated region
    $region45: #{_lambda_.5} parent=5 // pred_check
      %p554 = pneg %p553
    $region46: #{_lambda_.5} parent=5 // pred_check_branch
      %556 = sbr.rel (%p554) target = $region48
    $region47: #{_lambda_.5} parent=5 // pred_region
      %s557 = ssub.s32 %s9, 2
      // Predicated region
      $region49: #{_lambda_.5} parent=47 // pred_check
        %p558 = pneg %p141
      $region50: #{_lambda_.5} parent=47 // pred_check_branch
        %560 = sbr.rel (%p558) target = $region52
      $region51: #{_lambda_.5} parent=47 // pred_region
        %s561 = smul.u32 12, %s22
        %p562 = scmp.lt.s32.totalorder %s561, 23
        %s563 = scalar_select %p562, %s561, 23
        %p564 = scmp.lt.s32.totalorder %s23, 0
        %s565 = scalar_select %p564, %s23, 0
        %s566 = sadd.s32 %s565, %s563
        %s567 = smul.addr %s566, 4
        %s568 = scalar_lea.vmem %s3, %s567
      $region52: #{_lambda_.5} parent=47 // pred_fallthru
        _
    $region48: #{_lambda_.5} parent=5 // pred_fallthru
      _
  $region6: #{_lambda_.5} parent=0 // loop_footer
    %s13 = sadd.s32 1, %s9
  $region7: #{_lambda_.5} parent=0 // loop_footer_branch
    %8 = sbr.rel target = $region3
  $region8: #{_lambda_.5} parent=0 // loop_exit
    _

// kernel: _lambda_.6
$region0: #{_lambda_.6}
  #allocation0 [shape = 'u32[]', space=smem, size = 0x4, offset = 0x4, fixed_abs, tag = 'smem constant byte address 0x4 - core index']
  #allocation1 [shape = 'u32[72,128]{1,0:T(1,128)}', space=vmem, size = 0x9000, scoped, tag = 'internal scratch']
  #allocation2 [shape = 'f32[32,128]{1,0:T(8,128)}', space=vmem, size = 0x4000, scoped, tag = 'scratch operand']
  %s0 = inlined_call_operand.vmem [shape: bf16[64,128], index: 0, kind: input, shape index: {}]
  %s1 = inlined_call_operand.vmem [shape: bf16[128,128], index: 1, kind: input, shape index: {}]
  %s2 = inlined_call_operand.vmem [shape: f32[1,128], index: 2, kind: input, shape index: {}]
  %s3 = inlined_call_operand.vmem [shape: bf16[64,128], index: 3, kind: output, shape index: {0}]
  %s4 = inlined_call_operand.vmem [shape: f32[2,1,128], index: 4, kind: output, shape index: {1}]
  %s5 = inlined_call_operand.vmem [shape: f32[2,1,128], index: 5, kind: output, shape index: {2}]
  %6 = xla_tuple %s3, %s4, %s5
  %s7 = sld [smem:[#allocation0]]
  $region69: #{_lambda_.6} parent=0
    _
  %s9 = ssub.s32 1, %s7
  %s10 = scalar_select 0, %s9, %s7
  loop: start=0, step=1, limit=4
  $region2: #{_lambda_.6} parent=0 // loop_pre_header
    _
  $region3: #{_lambda_.6} parent=0 // loop_header
    %s12 = sphi 0, %s16
    %p13 = scmp.ge.s32.totalorder %s12, 4
    %s19 = sphi 0, %s38
    %s20 = sphi 0, %s34
    %s21 = sphi 0, %s30
    %s22 = sphi 0, %s19
    %s23 = sphi 0, %s20
    %s24 = sphi 0, %s21
    %s25 = sphi 0, %s22
    %s26 = sphi 0, %s23
    %s27 = sphi 0, %s24
    %s43 = sphi 0, %s45
    %s46 = sphi 0, %s43
    %s47 = sphi 0, %s46
    %s63 = sphi 0, %s47
    %s71 = sphi 0, %s73
    %s74 = sphi 0, %s71
    %s75 = sphi 0, %s74
    %s91 = sphi 0, %s75
    %s97 = sphi 0, %s99
    %s100 = sphi 0, %s97
    %s101 = sphi 0, %s100
    %s117 = sphi 0, %s101
    %s125 = sphi 0, %s127
    %s128 = sphi 0, %s125
    %s129 = sphi 0, %s128
    %s145 = sphi 0, %s129
    %s153 = sphi 0, %s155
    %s156 = sphi 0, %s153
    %s157 = sphi 0, %s156
    %s173 = sphi 0, %s157
    %s181 = sphi 0, %s183
    %s184 = sphi 0, %s181
    %s185 = sphi 0, %s184
    %s201 = sphi 0, %s185
  $region4: #{_lambda_.6} parent=0 // loop_header_branch
    %15 = sbr.rel (%p13) target = $region8
  $region5: #{_lambda_.6} parent=0 // loop_body
    %s17 = ssub.s32 %s12, 1
    %s18 = ssub.s32 %s12, 2
    %s28 = sadd.s32 1, %s21
    %p29 = scmp.ge.s32.totalorder %s28, 1
    %s30 = scalar_select %p29, 0, %s28
    %s31 = sadd.s32 1, %s20
    %s32 = scalar_select %p29, %s31, %s20
    %p33 = scmp.ge.s32.totalorder %s32, 1
    %s34 = scalar_select %p33, 0, %s32
    %s35 = sadd.s32 1, %s19
    %s36 = scalar_select %p33, %s35, %s19
    %p37 = scmp.ge.s32.totalorder %s36, 2
    %s38 = scalar_select %p37, 0, %s36
    %s39 = ssub.s32 %s19, %s38
    %s40 = ssub.s32 %s21, %s30
    %s41 = sor.u32 %s39, %s40
    %p42 = scmp.eq.s32.totalorder %s41, 0
    %s44 = sadd.s32 %s43, 1
    %s45 = scalar_select %p42, %s43, %s44
    %p48 = pneg %p42
    %p49 = scmp.eq.s32.totalorder %s12, 1
    %p50 = por %p48, %p49
    %p51 = scmp.ne.s32.totalorder %s43, %s46
    %p52 = scmp.eq.s32.totalorder %s12, 0
    %p53 = por %p51, %p52
    %p54 = scmp.ne.s32.totalorder %s43, %s46
    %p55 = scmp.eq.s32.totalorder %s17, 1
    %p56 = por %p54, %p55
    %p57 = scmp.ne.s32.totalorder %s46, %s47
    %p58 = scmp.eq.s32.totalorder %s17, 0
    %p59 = por %p57, %p58
    %p60 = scmp.ne.s32.totalorder %s46, %s47
    %p61 = scmp.eq.s32.totalorder %s18, 1
    %p62 = por %p60, %p61
    %p64 = scmp.ne.s32.totalorder %s47, %s63
    %p65 = scmp.eq.s32.totalorder %s18, 0
    %p66 = por %p64, %p65
    %s67 = ssub.s32 %s21, %s30
    %s68 = ssub.s32 %s20, %s34
    %s69 = sor.u32 %s67, %s68
    %p70 = scmp.eq.s32.totalorder %s69, 0
    %s72 = sadd.s32 %s71, 1
    %s73 = scalar_select %p70, %s71, %s72
    %p76 = pneg %p70
    %p77 = scmp.eq.s32.totalorder %s12, 1
    %p78 = por %p76, %p77
    %p79 = scmp.ne.s32.totalorder %s71, %s74
    %p80 = scmp.eq.s32.totalorder %s12, 0
    %p81 = por %p79, %p80
    %p82 = scmp.ne.s32.totalorder %s71, %s74
    %p83 = scmp.eq.s32.totalorder %s17, 1
    %p84 = por %p82, %p83
    %p85 = scmp.ne.s32.totalorder %s74, %s75
    %p86 = scmp.eq.s32.totalorder %s17, 0
    %p87 = por %p85, %p86
    %p88 = scmp.ne.s32.totalorder %s74, %s75
    %p89 = scmp.eq.s32.totalorder %s18, 1
    %p90 = por %p88, %p89
    %p92 = scmp.ne.s32.totalorder %s75, %s91
    %p93 = scmp.eq.s32.totalorder %s18, 0
    %p94 = por %p92, %p93
    %s95 = ssub.s32 %s20, %s34
    %p96 = scmp.eq.s32.totalorder %s95, 0
    %s98 = sadd.s32 %s97, 1
    %s99 = scalar_select %p96, %s97, %s98
    %p102 = pneg %p96
    %p103 = scmp.eq.s32.totalorder %s12, 1
    %p104 = por %p102, %p103
    %p105 = scmp.ne.s32.totalorder %s97, %s100
    %p106 = scmp.eq.s32.totalorder %s12, 0
    %p107 = por %p105, %p106
    %p108 = scmp.ne.s32.totalorder %s97, %s100
    %p109 = scmp.eq.s32.totalorder %s17, 1
    %p110 = por %p108, %p109
    %p111 = scmp.ne.s32.totalorder %s100, %s101
    %p112 = scmp.eq.s32.totalorder %s17, 0
    %p113 = por %p111, %p112
    %p114 = scmp.ne.s32.totalorder %s100, %s101
    %p115 = scmp.eq.s32.totalorder %s18, 1
    %p116 = por %p114, %p115
    %p118 = scmp.ne.s32.totalorder %s101, %s117
    %p119 = scmp.eq.s32.totalorder %s18, 0
    %p120 = por %p118, %p119
    %s121 = ssub.s32 %s19, %s38
    %s122 = ssub.s32 %s20, %s34
    %s123 = sor.u32 %s121, %s122
    %p124 = scmp.eq.s32.totalorder %s123, 0
    %s126 = sadd.s32 %s125, 1
    %s127 = scalar_select %p124, %s125, %s126
    %p130 = pneg %p124
    %p131 = scmp.eq.s32.totalorder %s12, 1
    %p132 = por %p130, %p131
    %p133 = scmp.ne.s32.totalorder %s125, %s128
    %p134 = scmp.eq.s32.totalorder %s12, 0
    %p135 = por %p133, %p134
    %p136 = scmp.ne.s32.totalorder %s125, %s128
    %p137 = scmp.eq.s32.totalorder %s17, 1
    %p138 = por %p136, %p137
    %p139 = scmp.ne.s32.totalorder %s128, %s129
    %p140 = scmp.eq.s32.totalorder %s17, 0
    %p141 = por %p139, %p140
    %p142 = scmp.ne.s32.totalorder %s128, %s129
    %p143 = scmp.eq.s32.totalorder %s18, 1
    %p144 = por %p142, %p143
    %p146 = scmp.ne.s32.totalorder %s129, %s145
    %p147 = scmp.eq.s32.totalorder %s18, 0
    %p148 = por %p146, %p147
    %s149 = ssub.s32 %s19, %s38
    %s150 = ssub.s32 %s20, %s34
    %s151 = sor.u32 %s149, %s150
    %p152 = scmp.eq.s32.totalorder %s151, 0
    %s154 = sadd.s32 %s153, 1
    %s155 = scalar_select %p152, %s153, %s154
    %p158 = pneg %p152
    %p159 = scmp.eq.s32.totalorder %s12, 1
    %p160 = por %p158, %p159
    %p161 = scmp.ne.s32.totalorder %s153, %s156
    %p162 = scmp.eq.s32.totalorder %s12, 0
    %p163 = por %p161, %p162
    %p164 = scmp.ne.s32.totalorder %s153, %s156
    %p165 = scmp.eq.s32.totalorder %s17, 1
    %p166 = por %p164, %p165
    %p167 = scmp.ne.s32.totalorder %s156, %s157
    %p168 = scmp.eq.s32.totalorder %s17, 0
    %p169 = por %p167, %p168
    %p170 = scmp.ne.s32.totalorder %s156, %s157
    %p171 = scmp.eq.s32.totalorder %s18, 1
    %p172 = por %p170, %p171
    %p174 = scmp.ne.s32.totalorder %s157, %s173
    %p175 = scmp.eq.s32.totalorder %s18, 0
    %p176 = por %p174, %p175
    %s177 = ssub.s32 %s19, %s38
    %s178 = ssub.s32 %s20, %s34
    %s179 = sor.u32 %s177, %s178
    %p180 = scmp.eq.s32.totalorder %s179, 0
    %s182 = sadd.s32 %s181, 1
    %s183 = scalar_select %p180, %s181, %s182
    %p186 = pneg %p180
    %p187 = scmp.eq.s32.totalorder %s12, 1
    %p188 = por %p186, %p187
    %p189 = scmp.ne.s32.totalorder %s181, %s184
    %p190 = scmp.eq.s32.totalorder %s12, 0
    %p191 = por %p189, %p190
    %p192 = scmp.ne.s32.totalorder %s181, %s184
    %p193 = scmp.eq.s32.totalorder %s17, 1
    %p194 = por %p192, %p193
    %p195 = scmp.ne.s32.totalorder %s184, %s185
    %p196 = scmp.eq.s32.totalorder %s17, 0
    %p197 = por %p195, %p196
    %p198 = scmp.ne.s32.totalorder %s184, %s185
    %p199 = scmp.eq.s32.totalorder %s18, 1
    %p200 = por %p198, %p199
    %p202 = scmp.ne.s32.totalorder %s185, %s201
    %p203 = scmp.eq.s32.totalorder %s18, 0
    %p204 = por %p202, %p203
    %p205 = scmp.le.s32.totalorder 1, %s12
    %p206 = scmp.lt.s32.totalorder %s12, 3
    %p207 = pnand %p205, %p206
    %p208 = pneg %p207
    // Predicated region
    $region9: #{_lambda_.6} parent=5 // pred_check
      _
    $region10: #{_lambda_.6} parent=5 // pred_check_branch
      %210 = sbr.rel (%p207) target = $region12
    $region11: #{_lambda_.6} parent=5 // pred_region
      %s211 = ssub.s32 %s12, 1
      // Predicated region
      $region13: #{_lambda_.6} parent=11 // pred_check
        %p212 = pneg %p87
      $region14: #{_lambda_.6} parent=11 // pred_check_branch
        %214 = sbr.rel (%p212) target = $region16
      $region15: #{_lambda_.6} parent=11 // pred_region
        %s215 = smul.u32 16, %s24
        %p216 = scmp.lt.s32.totalorder %s215, 15
        %s217 = scalar_select %p216, %s215, 15
        %p218 = scmp.lt.s32.totalorder %s23, 0
        %s219 = scalar_select %p218, %s23, 0
        %s220 = sadd.s32 %s219, %s217
        %s221 = smul.addr %s220, 4
        %s222 = scalar_lea.vmem %s1, %s221
        %s223 = smul.u32 16, %s24
      $region16: #{_lambda_.6} parent=11 // pred_fallthru
        _
      // Predicated region
      $region17: #{_lambda_.6} parent=11 // pred_check
        %p224 = pneg %p113
      $region18: #{_lambda_.6} parent=11 // pred_check_branch
        %226 = sbr.rel (%p224) target = $region20
      $region19: #{_lambda_.6} parent=11 // pred_region
        %p227 = scmp.lt.s32.totalorder %s23, 0
        %s228 = scalar_select %p227, %s23, 0
        %s229 = scalar_lea.vmem %s2, %s228
      $region20: #{_lambda_.6} parent=11 // pred_fallthru
        _
    $region12: #{_lambda_.6} parent=5 // pred_fallthru
      _
    %p230 = scmp.lt.s32.totalorder %s12, 2
    // Predicated region
    $region21: #{_lambda_.6} parent=5 // pred_check
      %p231 = pneg %p230
    $region22: #{_lambda_.6} parent=5 // pred_check_branch
      %233 = sbr.rel (%p231) target = $region24
    $region23: #{_lambda_.6} parent=5 // pred_region
      // Predicated region
      $region25: #{_lambda_.6} parent=23 // pred_check
        %p234 = pneg %p53
      $region26: #{_lambda_.6} parent=23 // pred_check_branch
        %236 = sbr.rel (%p234) target = $region28
      $region27: #{_lambda_.6} parent=23 // pred_region
        %s237 = smul.u32 4, %s19
        %p238 = scmp.lt.s32.totalorder %s237, 7
        %s239 = scalar_select %p238, %s237, 7
        %p240 = scmp.lt.s32.totalorder %s21, 0
        %s241 = scalar_select %p240, %s21, 0
        %s242 = sadd.s32 %s241, %s239
        %s243 = smul.addr %s242, 4
        %s244 = scalar_lea.vmem %s0, %s243
        %s245 = smul.u32 4, %s19
      $region28: #{_lambda_.6} parent=23 // pred_fallthru
        _
    $region24: #{_lambda_.6} parent=5 // pred_fallthru
      _
    %p246 = scmp.le.s32.totalorder 1, %s12
    %p247 = scmp.lt.s32.totalorder %s12, 3
    %p248 = pnand %p246, %p247
    %p249 = pneg %p248
    // Predicated region
    $region29: #{_lambda_.6} parent=5 // pred_check
      _
    $region30: #{_lambda_.6} parent=5 // pred_check_branch
      %251 = sbr.rel (%p248) target = $region32
    $region31: #{_lambda_.6} parent=5 // pred_region
      %s252 = ssub.s32 %s12, 1
      %s253 = smul.u32 4, %s22
      %p254 = scmp.lt.s32.totalorder %s253, 7
      %s255 = scalar_select %p254, %s253, 7
      %p256 = scmp.lt.s32.totalorder %s24, 0
      %s257 = scalar_select %p256, %s24, 0
      %s258 = sadd.s32 %s257, %s255
      %s259 = smul.addr %s258, 4
      %s260 = scalar_lea.vmem %s0, %s259
      %p261 = pneg %p59
      %p262 = pneg %p56
      %s263 = smul.u32 16, %s24
      %p264 = scmp.lt.s32.totalorder %s263, 15
      %s265 = scalar_select %p264, %s263, 15
      %p266 = scmp.lt.s32.totalorder %s23, 0
      %s267 = scalar_select %p266, %s23, 0
      %s268 = sadd.s32 %s267, %s265
      %s269 = smul.addr %s268, 4
      %s270 = scalar_lea.vmem %s1, %s269
      %p271 = pneg %p87
      %p272 = pneg %p84
      %p273 = scmp.lt.s32.totalorder %s23, 0
      %s274 = scalar_select %p273, %s23, 0
      %s275 = scalar_lea.vmem %s2, %s274
      %p276 = pneg %p113
      %p277 = pneg %p110
      %p278 = pneg %p141
      %p279 = pneg %p138
      %s280 = smul.u32 4, %s22
      %p281 = scmp.lt.s32.totalorder %s280, 7
      %s282 = scalar_select %p281, %s280, 7
      %p283 = scmp.lt.s32.totalorder %s23, 0
      %s284 = scalar_select %p283, %s23, 0
      %s285 = sadd.s32 %s284, %s282
      %s286 = smul.addr %s285, 4
      %s287 = scalar_lea.vmem %s3, %s286
      %p288 = pneg %p169
      %p289 = pneg %p166
      %p290 = scmp.lt.s32.totalorder %s22, 1
      %s291 = scalar_select %p290, %s22, 1
      %p292 = scmp.lt.s32.totalorder %s23, 0
      %s293 = scalar_select %p292, %s23, 0
      %s294 = sadd.s32 %s293, %s291
      %s295 = scalar_lea.vmem %s4, %s294
      %p296 = pneg %p197
      %p297 = pneg %p194
      %p298 = scmp.lt.s32.totalorder %s22, 1
      %s299 = scalar_select %p298, %s22, 1
      %p300 = scmp.lt.s32.totalorder %s23, 0
      %s301 = scalar_select %p300, %s23, 0
      %s302 = sadd.s32 %s301, %s299
      %s303 = scalar_lea.vmem %s5, %s302
      %s304 = smul.u32 4, %s22
      %p305 = scmp.lt.s32.totalorder %s304, 7
      %s306 = scalar_select %p305, %s304, 7
      %p307 = scmp.lt.s32.totalorder %s24, 0
      %s308 = scalar_select %p307, %s24, 0
      %s309 = sadd.s32 %s308, %s306
      %s310 = smul.addr %s309, 4
      %s311 = scalar_lea.vmem %s0, %s310
      %s312 = smul.u32 4, %s22
      %s313 = smul.u32 16, %s24
      %p314 = scmp.lt.s32.totalorder %s313, 15
      %s315 = scalar_select %p314, %s313, 15
      %p316 = scmp.lt.s32.totalorder %s23, 0
      %s317 = scalar_select %p316, %s23, 0
      %s318 = sadd.s32 %s317, %s315
      %s319 = smul.addr %s318, 4
      %s320 = scalar_lea.vmem %s1, %s319
      %s321 = smul.u32 16, %s24
      %p322 = scmp.lt.s32.totalorder %s23, 0
      %s323 = scalar_select %p322, %s23, 0
      %s324 = scalar_lea.vmem %s2, %s323
      %s325 = smul.u32 4, %s22
      %p326 = scmp.lt.s32.totalorder %s325, 7
      %s327 = scalar_select %p326, %s325, 7
      %p328 = scmp.lt.s32.totalorder %s23, 0
      %s329 = scalar_select %p328, %s23, 0
      %s330 = sadd.s32 %s329, %s327
      %s331 = smul.addr %s330, 4
      %s332 = scalar_lea.vmem %s3, %s331
      %s333 = smul.u32 4, %s22
      %p334 = scmp.lt.s32.totalorder %s22, 1
      %s335 = scalar_select %p334, %s22, 1
      %p336 = scmp.lt.s32.totalorder %s23, 0
      %s337 = scalar_select %p336, %s23, 0
      %s338 = sadd.s32 %s337, %s335
      %s339 = scalar_lea.vmem %s4, %s338
      %p340 = scmp.lt.s32.totalorder %s22, 1
      %s341 = scalar_select %p340, %s22, 1
      %p342 = scmp.lt.s32.totalorder %s23, 0
      %s343 = scalar_select %p342, %s23, 0
      %s344 = sadd.s32 %s343, %s341
      %s345 = scalar_lea.vmem %s5, %s344
      %p346 = scmp.eq.s32.totalorder %s24, 0
      // Predicated region
      $region33: #{_lambda_.6} parent=31 // pred_check
        %p347 = pneg %p346
      $region34: #{_lambda_.6} parent=31 // pred_check_branch
        %349 = sbr.rel (%p347) target = $region36
      $region35: #{_lambda_.6} parent=31 // pred_region
        %v350 = vld [vmem:[%s324] sm:$0x1]
        %v352 = vperm.slane %v350, 0
        %354 = vst [vmem:[#allocation2] sm:$0xff] %v352
        %355 = vst [vmem:[#allocation2 + $0x8] sm:$0xff] %v352
        %356 = vst [vmem:[#allocation2 + $0x10] sm:$0xff] %v352
        %357 = vst [vmem:[#allocation2 + $0x18] sm:$0xff] %v352
      $region36: #{_lambda_.6} parent=31 // pred_fallthru
        _
      %v358 = vld [vmem:[#allocation2] sm:$0xff]
      %v359 = vld [vmem:[#allocation2 + $0x8] sm:$0xff]
      %v360 = vld [vmem:[#allocation2 + $0x10] sm:$0xff]
      %v361 = vld [vmem:[#allocation2 + $0x18] sm:$0xff]
      %v362 = vld [vmem:[%s311] sm:$0xf]
      %v363 = vld [vmem:[%s311 + $0x4] sm:$0xf]
      %v364 = vld [vmem:[%s311 + $0x8] sm:$0xf]
      %v365 = vld [vmem:[%s311 + $0xc] sm:$0xf]
      %v366 = vld [vmem:[%s320] sm:$0xf]
      %v367 = vld [vmem:[%s320 + $0x4] sm:$0xf]
      %v368 = vld [vmem:[%s320 + $0x8] sm:$0xf]
      %v369 = vld [vmem:[%s320 + $0xc] sm:$0xf]
      %v370 = vld [vmem:[%s320 + $0x10] sm:$0xf]
      %v371 = vld [vmem:[%s320 + $0x14] sm:$0xf]
      %v372 = vld [vmem:[%s320 + $0x18] sm:$0xf]
      %v373 = vld [vmem:[%s320 + $0x1c] sm:$0xf]
      %v374 = vld [vmem:[%s320 + $0x20] sm:$0xf]
      %v375 = vld [vmem:[%s320 + $0x24] sm:$0xf]
      %v376 = vld [vmem:[%s320 + $0x28] sm:$0xf]
      %v377 = vld [vmem:[%s320 + $0x2c] sm:$0xf]
      %v378 = vld [vmem:[%s320 + $0x30] sm:$0xf]
      %v379 = vld [vmem:[%s320 + $0x34] sm:$0xf]
      %v380 = vld [vmem:[%s320 + $0x38] sm:$0xf]
      %v381 = vld [vmem:[%s320 + $0x3c] sm:$0xf]
      %v386 = vunpack.c.l.b16 %v362
      %v387 = vunpack.c.l.b16 %v363
      %v388 = vunpack.c.l.b16 %v364
      %v389 = vunpack.c.l.b16 %v365
      %v390 = vpack.c.b16 %v387, %v386
      %v391 = vpack.c.b16 %v389, %v388
      %v410 = vunpack.c.l.b16 %v366
      %v411 = vunpack.c.l.b16 %v367
      %v412 = vunpack.c.l.b16 %v368
      %v413 = vunpack.c.l.b16 %v369
      %v414 = vunpack.c.l.b16 %v370
      %v415 = vunpack.c.l.b16 %v371
      %v416 = vunpack.c.l.b16 %v372
      %v417 = vunpack.c.l.b16 %v373
      %v418 = vunpack.c.l.b16 %v374
      %v419 = vunpack.c.l.b16 %v375
      %v420 = vunpack.c.l.b16 %v376
      %v421 = vunpack.c.l.b16 %v377
      %v422 = vunpack.c.l.b16 %v378
      %v423 = vunpack.c.l.b16 %v379
      %v424 = vunpack.c.l.b16 %v380
      %v425 = vunpack.c.l.b16 %v381
      %v426 = vpack.c.b16 %v411, %v410
      %v427 = vpack.c.b16 %v413, %v412
      %v428 = vpack.c.b16 %v415, %v414
      %v429 = vpack.c.b16 %v417, %v416
      %v430 = vpack.c.b16 %v419, %v418
      %v431 = vpack.c.b16 %v421, %v420
      %v432 = vpack.c.b16 %v423, %v422
      %v433 = vpack.c.b16 %v425, %v424
      %442 = vmatpush.bf16.msra.mxu0 %v433
      %443 = vmatpush.bf16.msra.mxu0 %v432
      %444 = vmatpush.bf16.msra.mxu0 %v431
      %445 = vmatpush.bf16.msra.mxu0 %v430
      %446 = vmatpush.bf16.msra.mxu0 %v429
      %447 = vmatpush.bf16.msra.mxu0 %v428
      %448 = vmatpush.bf16.msra.mxu0 %v427
      %449 = vmatpush.bf16.msra.mxu0 %v426
      %450 = vmatmul.bf16.gmra.mxu0 %v390
      %v451 = vpop.f32.mrf.mxu0
      %v452 = vadd.f32 0.0, %v451
      %v453 = vpop.f32.mrf.mxu0
      %v454 = vadd.f32 0.0, %v453
      %455 = vmatmul.bf16.gmra.mxu0 %v391
      %v456 = vpop.f32.mrf.mxu0
      %v457 = vadd.f32 0.0, %v456
      %v458 = vpop.f32.mrf.mxu0
      %v459 = vadd.f32 0.0, %v458
      %460 = vdwg.mxu0
      %v461 = vadd.f32 %v358, %v452
      %v462 = vadd.f32 %v359, %v454
      %v463 = vadd.f32 %v360, %v457
      %v464 = vadd.f32 %v361, %v459
      %465 = vst [vmem:[#allocation2] sm:$0xff] %v461
      %466 = vst [vmem:[#allocation2 + $0x8] sm:$0xff] %v462
      %467 = vst [vmem:[#allocation2 + $0x10] sm:$0xff] %v463
      %468 = vst [vmem:[#allocation2 + $0x18] sm:$0xff] %v464
      // Predicated region
      $region37: #{_lambda_.6} parent=31 // pred_check
        %p469 = pneg %p346
      $region38: #{_lambda_.6} parent=31 // pred_check_branch
        %471 = sbr.rel (%p469) target = $region40
      $region39: #{_lambda_.6} parent=31 // pred_region
        %v472 = vld [vmem:[#allocation2] sm:$0xff]
        %v473 = vld [vmem:[#allocation2 + $0x8] sm:$0xff]
        %v474 = vld [vmem:[#allocation2 + $0x10] sm:$0xff]
        %v475 = vld [vmem:[#allocation2 + $0x18] sm:$0xff]
        %v476 = vpack.c.bf16 %v472, %v472
        %v477 = vpack.c.bf16 %v473, %v473
        %v478 = vpack.c.bf16 %v474, %v474
        %v479 = vpack.c.bf16 %v475, %v475
        %480 = vst [vmem:[%s332] sm:$0xf] %v476
        %481 = vst [vmem:[%s332 + $0x4] sm:$0xf] %v477
        %482 = vst [vmem:[%s332 + $0x8] sm:$0xf] %v478
        %483 = vst [vmem:[%s332 + $0xc] sm:$0xf] %v479
        %v484 = vadd.f32 %v472, %v473
        %v485 = vadd.f32 %v484, %v474
        %v486 = vadd.f32 %v485, %v475
        %v487 = vrot.slane %v486, 4
        %v488 = vadd.f32 %v486, %v487
        %v489 = vrot.slane %v488, 2
        %v490 = vadd.f32 %v488, %v489
        %v491 = vrot.slane %v490, 1
        %v492 = vadd.f32 %v490, %v491
        %493 = vst [vmem:[%s339] sm:$0x1] %v492
        %v494 = vmul.f32 %v472, %v472
        %v495 = vmul.f32 %v473, %v473
        %v496 = vmul.f32 %v474, %v474
        %v497 = vmul.f32 %v475, %v475
        %v498 = vadd.f32 %v494, %v495
        %v499 = vadd.f32 %v498, %v496
        %v500 = vadd.f32 %v499, %v497
        %v501 = vrot.slane %v500, 4
        %v502 = vadd.f32 %v500, %v501
        %v503 = vrot.slane %v502, 2
        %v504 = vadd.f32 %v502, %v503
        %v505 = vrot.slane %v504, 1
        %v506 = vadd.f32 %v504, %v505
        %507 = vst [vmem:[%s345] sm:$0x1] %v506
      $region40: #{_lambda_.6} parent=31 // pred_fallthru
        _
      %s508 = smul.u32 4, %s22
      %p509 = scmp.lt.s32.totalorder %s508, 7
      %s510 = scalar_select %p509, %s508, 7
      %p511 = scmp.lt.s32.totalorder %s23, 0
      %s512 = scalar_select %p511, %s23, 0
      %s513 = sadd.s32 %s512, %s510
      %s514 = smul.addr %s513, 4
      %s515 = scalar_lea.vmem %s3, %s514
      %p516 = scmp.lt.s32.totalorder %s22, 1
      %s517 = scalar_select %p516, %s22, 1
      %p518 = scmp.lt.s32.totalorder %s23, 0
      %s519 = scalar_select %p518, %s23, 0
      %s520 = sadd.s32 %s519, %s517
      %s521 = scalar_lea.vmem %s4, %s520
      %p522 = scmp.lt.s32.totalorder %s22, 1
      %s523 = scalar_select %p522, %s22, 1
      %p524 = scmp.lt.s32.totalorder %s23, 0
      %s525 = scalar_select %p524, %s23, 0
      %s526 = sadd.s32 %s525, %s523
      %s527 = scalar_lea.vmem %s5, %s526
      // Predicated region
      $region41: #{_lambda_.6} parent=31 // pred_check
        %p528 = pneg %p138
      $region42: #{_lambda_.6} parent=31 // pred_check_branch
        %530 = sbr.rel (%p528) target = $region44
      $region43: #{_lambda_.6} parent=31 // pred_region
        %s531 = smul.u32 4, %s22
      $region44: #{_lambda_.6} parent=31 // pred_fallthru
        _
      // Predicated region
      $region45: #{_lambda_.6} parent=31 // pred_check
        %p532 = pneg %p166
      $region46: #{_lambda_.6} parent=31 // pred_check_branch
        %534 = sbr.rel (%p532) target = $region48
      $region47: #{_lambda_.6} parent=31 // pred_region
        _
      $region48: #{_lambda_.6} parent=31 // pred_fallthru
        _
      // Predicated region
      $region49: #{_lambda_.6} parent=31 // pred_check
        %p535 = pneg %p194
      $region50: #{_lambda_.6} parent=31 // pred_check_branch
        %537 = sbr.rel (%p535) target = $region52
      $region51: #{_lambda_.6} parent=31 // pred_region
        _
      $region52: #{_lambda_.6} parent=31 // pred_fallthru
        _
    $region32: #{_lambda_.6} parent=5 // pred_fallthru
      _
    %p538 = scmp.le.s32.totalorder 2, %s12
    // Predicated region
    $region53: #{_lambda_.6} parent=5 // pred_check
      %p539 = pneg %p538
    $region54: #{_lambda_.6} parent=5 // pred_check_branch
      %541 = sbr.rel (%p539) target = $region56
    $region55: #{_lambda_.6} parent=5 // pred_region
      %s542 = ssub.s32 %s12, 2
      // Predicated region
      $region57: #{_lambda_.6} parent=55 // pred_check
        %p543 = pneg %p144
      $region58: #{_lambda_.6} parent=55 // pred_check_branch
        %545 = sbr.rel (%p543) target = $region60
      $region59: #{_lambda_.6} parent=55 // pred_region
        %s546 = smul.u32 4, %s25
        %p547 = scmp.lt.s32.totalorder %s546, 7
        %s548 = scalar_select %p547, %s546, 7
        %p549 = scmp.lt.s32.totalorder %s26, 0
        %s550 = scalar_select %p549, %s26, 0
        %s551 = sadd.s32 %s550, %s548
        %s552 = smul.addr %s551, 4
        %s553 = scalar_lea.vmem %s3, %s552
      $region60: #{_lambda_.6} parent=55 // pred_fallthru
        _
      // Predicated region
      $region61: #{_lambda_.6} parent=55 // pred_check
        %p554 = pneg %p172
      $region62: #{_lambda_.6} parent=55 // pred_check_branch
        %556 = sbr.rel (%p554) target = $region64
      $region63: #{_lambda_.6} parent=55 // pred_region
        %p557 = scmp.lt.s32.totalorder %s25, 1
        %s558 = scalar_select %p557, %s25, 1
        %p559 = scmp.lt.s32.totalorder %s26, 0
        %s560 = scalar_select %p559, %s26, 0
        %s561 = sadd.s32 %s560, %s558
        %s562 = scalar_lea.vmem %s4, %s561
      $region64: #{_lambda_.6} parent=55 // pred_fallthru
        _
      // Predicated region
      $region65: #{_lambda_.6} parent=55 // pred_check
        %p563 = pneg %p200
      $region66: #{_lambda_.6} parent=55 // pred_check_branch
        %565 = sbr.rel (%p563) target = $region68
      $region67: #{_lambda_.6} parent=55 // pred_region
        %p566 = scmp.lt.s32.totalorder %s25, 1
        %s567 = scalar_select %p566, %s25, 1
        %p568 = scmp.lt.s32.totalorder %s26, 0
        %s569 = scalar_select %p568, %s26, 0
        %s570 = sadd.s32 %s569, %s567
        %s571 = scalar_lea.vmem %s5, %s570
      $region68: #{_lambda_.6} parent=55 // pred_fallthru
        _
    $region56: #{_lambda_.6} parent=5 // pred_fallthru
      _
  $region6: #{_lambda_.6} parent=0 // loop_footer
    %s16 = sadd.s32 1, %s12
  $region7: #{_lambda_.6} parent=0 // loop_footer_branch
    %11 = sbr.rel target = $region3
  $region8: #{_lambda_.6} parent=0 // loop_exit
    _

// kernel: _lambda_.7
$region0: #{_lambda_.7}
  #allocation0 [shape = 'u32[]', space=smem, size = 0x4, offset = 0x4, fixed_abs, tag = 'smem constant byte address 0x4 - core index']
  #allocation1 [shape = 'u32[72,128]{1,0:T(1,128)}', space=vmem, size = 0x9000, scoped, tag = 'internal scratch']
  #allocation2 [shape = 'f32[16,128]{1,0:T(8,128)}', space=vmem, size = 0x2000, scoped, tag = 'scratch operand']
  %s0 = inlined_call_operand.vmem [shape: bf16[32,256], index: 0, kind: input, shape index: {}]
  %s1 = inlined_call_operand.vmem [shape: bf16[256,128], index: 1, kind: input, shape index: {}]
  %s2 = inlined_call_operand.vmem [shape: f32[1,128], index: 2, kind: input, shape index: {}]
  %s3 = inlined_call_operand.vmem [shape: bf16[32,128], index: 3, kind: output, shape index: {0}]
  %s4 = inlined_call_operand.vmem [shape: f32[2,1,128], index: 4, kind: output, shape index: {1}]
  %s5 = inlined_call_operand.vmem [shape: f32[2,1,128], index: 5, kind: output, shape index: {2}]
  %6 = xla_tuple %s3, %s4, %s5
  %s7 = sld [smem:[#allocation0]]
  $region69: #{_lambda_.7} parent=0
    _
  %s9 = ssub.s32 1, %s7
  %s10 = scalar_select 0, %s9, %s7
  loop: start=0, step=1, limit=4
  $region2: #{_lambda_.7} parent=0 // loop_pre_header
    _
  $region3: #{_lambda_.7} parent=0 // loop_header
    %s12 = sphi 0, %s16
    %p13 = scmp.ge.s32.totalorder %s12, 4
    %s19 = sphi 0, %s38
    %s20 = sphi 0, %s34
    %s21 = sphi 0, %s30
    %s22 = sphi 0, %s19
    %s23 = sphi 0, %s20
    %s24 = sphi 0, %s21
    %s25 = sphi 0, %s22
    %s26 = sphi 0, %s23
    %s27 = sphi 0, %s24
    %s43 = sphi 0, %s45
    %s46 = sphi 0, %s43
    %s47 = sphi 0, %s46
    %s63 = sphi 0, %s47
    %s71 = sphi 0, %s73
    %s74 = sphi 0, %s71
    %s75 = sphi 0, %s74
    %s91 = sphi 0, %s75
    %s97 = sphi 0, %s99
    %s100 = sphi 0, %s97
    %s101 = sphi 0, %s100
    %s117 = sphi 0, %s101
    %s125 = sphi 0, %s127
    %s128 = sphi 0, %s125
    %s129 = sphi 0, %s128
    %s145 = sphi 0, %s129
    %s153 = sphi 0, %s155
    %s156 = sphi 0, %s153
    %s157 = sphi 0, %s156
    %s173 = sphi 0, %s157
    %s181 = sphi 0, %s183
    %s184 = sphi 0, %s181
    %s185 = sphi 0, %s184
    %s201 = sphi 0, %s185
  $region4: #{_lambda_.7} parent=0 // loop_header_branch
    %15 = sbr.rel (%p13) target = $region8
  $region5: #{_lambda_.7} parent=0 // loop_body
    %s17 = ssub.s32 %s12, 1
    %s18 = ssub.s32 %s12, 2
    %s28 = sadd.s32 1, %s21
    %p29 = scmp.ge.s32.totalorder %s28, 1
    %s30 = scalar_select %p29, 0, %s28
    %s31 = sadd.s32 1, %s20
    %s32 = scalar_select %p29, %s31, %s20
    %p33 = scmp.ge.s32.totalorder %s32, 1
    %s34 = scalar_select %p33, 0, %s32
    %s35 = sadd.s32 1, %s19
    %s36 = scalar_select %p33, %s35, %s19
    %p37 = scmp.ge.s32.totalorder %s36, 2
    %s38 = scalar_select %p37, 0, %s36
    %s39 = ssub.s32 %s19, %s38
    %s40 = ssub.s32 %s21, %s30
    %s41 = sor.u32 %s39, %s40
    %p42 = scmp.eq.s32.totalorder %s41, 0
    %s44 = sadd.s32 %s43, 1
    %s45 = scalar_select %p42, %s43, %s44
    %p48 = pneg %p42
    %p49 = scmp.eq.s32.totalorder %s12, 1
    %p50 = por %p48, %p49
    %p51 = scmp.ne.s32.totalorder %s43, %s46
    %p52 = scmp.eq.s32.totalorder %s12, 0
    %p53 = por %p51, %p52
    %p54 = scmp.ne.s32.totalorder %s43, %s46
    %p55 = scmp.eq.s32.totalorder %s17, 1
    %p56 = por %p54, %p55
    %p57 = scmp.ne.s32.totalorder %s46, %s47
    %p58 = scmp.eq.s32.totalorder %s17, 0
    %p59 = por %p57, %p58
    %p60 = scmp.ne.s32.totalorder %s46, %s47
    %p61 = scmp.eq.s32.totalorder %s18, 1
    %p62 = por %p60, %p61
    %p64 = scmp.ne.s32.totalorder %s47, %s63
    %p65 = scmp.eq.s32.totalorder %s18, 0
    %p66 = por %p64, %p65
    %s67 = ssub.s32 %s21, %s30
    %s68 = ssub.s32 %s20, %s34
    %s69 = sor.u32 %s67, %s68
    %p70 = scmp.eq.s32.totalorder %s69, 0
    %s72 = sadd.s32 %s71, 1
    %s73 = scalar_select %p70, %s71, %s72
    %p76 = pneg %p70
    %p77 = scmp.eq.s32.totalorder %s12, 1
    %p78 = por %p76, %p77
    %p79 = scmp.ne.s32.totalorder %s71, %s74
    %p80 = scmp.eq.s32.totalorder %s12, 0
    %p81 = por %p79, %p80
    %p82 = scmp.ne.s32.totalorder %s71, %s74
    %p83 = scmp.eq.s32.totalorder %s17, 1
    %p84 = por %p82, %p83
    %p85 = scmp.ne.s32.totalorder %s74, %s75
    %p86 = scmp.eq.s32.totalorder %s17, 0
    %p87 = por %p85, %p86
    %p88 = scmp.ne.s32.totalorder %s74, %s75
    %p89 = scmp.eq.s32.totalorder %s18, 1
    %p90 = por %p88, %p89
    %p92 = scmp.ne.s32.totalorder %s75, %s91
    %p93 = scmp.eq.s32.totalorder %s18, 0
    %p94 = por %p92, %p93
    %s95 = ssub.s32 %s20, %s34
    %p96 = scmp.eq.s32.totalorder %s95, 0
    %s98 = sadd.s32 %s97, 1
    %s99 = scalar_select %p96, %s97, %s98
    %p102 = pneg %p96
    %p103 = scmp.eq.s32.totalorder %s12, 1
    %p104 = por %p102, %p103
    %p105 = scmp.ne.s32.totalorder %s97, %s100
    %p106 = scmp.eq.s32.totalorder %s12, 0
    %p107 = por %p105, %p106
    %p108 = scmp.ne.s32.totalorder %s97, %s100
    %p109 = scmp.eq.s32.totalorder %s17, 1
    %p110 = por %p108, %p109
    %p111 = scmp.ne.s32.totalorder %s100, %s101
    %p112 = scmp.eq.s32.totalorder %s17, 0
    %p113 = por %p111, %p112
    %p114 = scmp.ne.s32.totalorder %s100, %s101
    %p115 = scmp.eq.s32.totalorder %s18, 1
    %p116 = por %p114, %p115
    %p118 = scmp.ne.s32.totalorder %s101, %s117
    %p119 = scmp.eq.s32.totalorder %s18, 0
    %p120 = por %p118, %p119
    %s121 = ssub.s32 %s19, %s38
    %s122 = ssub.s32 %s20, %s34
    %s123 = sor.u32 %s121, %s122
    %p124 = scmp.eq.s32.totalorder %s123, 0
    %s126 = sadd.s32 %s125, 1
    %s127 = scalar_select %p124, %s125, %s126
    %p130 = pneg %p124
    %p131 = scmp.eq.s32.totalorder %s12, 1
    %p132 = por %p130, %p131
    %p133 = scmp.ne.s32.totalorder %s125, %s128
    %p134 = scmp.eq.s32.totalorder %s12, 0
    %p135 = por %p133, %p134
    %p136 = scmp.ne.s32.totalorder %s125, %s128
    %p137 = scmp.eq.s32.totalorder %s17, 1
    %p138 = por %p136, %p137
    %p139 = scmp.ne.s32.totalorder %s128, %s129
    %p140 = scmp.eq.s32.totalorder %s17, 0
    %p141 = por %p139, %p140
    %p142 = scmp.ne.s32.totalorder %s128, %s129
    %p143 = scmp.eq.s32.totalorder %s18, 1
    %p144 = por %p142, %p143
    %p146 = scmp.ne.s32.totalorder %s129, %s145
    %p147 = scmp.eq.s32.totalorder %s18, 0
    %p148 = por %p146, %p147
    %s149 = ssub.s32 %s19, %s38
    %s150 = ssub.s32 %s20, %s34
    %s151 = sor.u32 %s149, %s150
    %p152 = scmp.eq.s32.totalorder %s151, 0
    %s154 = sadd.s32 %s153, 1
    %s155 = scalar_select %p152, %s153, %s154
    %p158 = pneg %p152
    %p159 = scmp.eq.s32.totalorder %s12, 1
    %p160 = por %p158, %p159
    %p161 = scmp.ne.s32.totalorder %s153, %s156
    %p162 = scmp.eq.s32.totalorder %s12, 0
    %p163 = por %p161, %p162
    %p164 = scmp.ne.s32.totalorder %s153, %s156
    %p165 = scmp.eq.s32.totalorder %s17, 1
    %p166 = por %p164, %p165
    %p167 = scmp.ne.s32.totalorder %s156, %s157
    %p168 = scmp.eq.s32.totalorder %s17, 0
    %p169 = por %p167, %p168
    %p170 = scmp.ne.s32.totalorder %s156, %s157
    %p171 = scmp.eq.s32.totalorder %s18, 1
    %p172 = por %p170, %p171
    %p174 = scmp.ne.s32.totalorder %s157, %s173
    %p175 = scmp.eq.s32.totalorder %s18, 0
    %p176 = por %p174, %p175
    %s177 = ssub.s32 %s19, %s38
    %s178 = ssub.s32 %s20, %s34
    %s179 = sor.u32 %s177, %s178
    %p180 = scmp.eq.s32.totalorder %s179, 0
    %s182 = sadd.s32 %s181, 1
    %s183 = scalar_select %p180, %s181, %s182
    %p186 = pneg %p180
    %p187 = scmp.eq.s32.totalorder %s12, 1
    %p188 = por %p186, %p187
    %p189 = scmp.ne.s32.totalorder %s181, %s184
    %p190 = scmp.eq.s32.totalorder %s12, 0
    %p191 = por %p189, %p190
    %p192 = scmp.ne.s32.totalorder %s181, %s184
    %p193 = scmp.eq.s32.totalorder %s17, 1
    %p194 = por %p192, %p193
    %p195 = scmp.ne.s32.totalorder %s184, %s185
    %p196 = scmp.eq.s32.totalorder %s17, 0
    %p197 = por %p195, %p196
    %p198 = scmp.ne.s32.totalorder %s184, %s185
    %p199 = scmp.eq.s32.totalorder %s18, 1
    %p200 = por %p198, %p199
    %p202 = scmp.ne.s32.totalorder %s185, %s201
    %p203 = scmp.eq.s32.totalorder %s18, 0
    %p204 = por %p202, %p203
    %p205 = scmp.le.s32.totalorder 1, %s12
    %p206 = scmp.lt.s32.totalorder %s12, 3
    %p207 = pnand %p205, %p206
    %p208 = pneg %p207
    // Predicated region
    $region9: #{_lambda_.7} parent=5 // pred_check
      _
    $region10: #{_lambda_.7} parent=5 // pred_check_branch
      %210 = sbr.rel (%p207) target = $region12
    $region11: #{_lambda_.7} parent=5 // pred_region
      %s211 = ssub.s32 %s12, 1
      // Predicated region
      $region13: #{_lambda_.7} parent=11 // pred_check
        %p212 = pneg %p87
      $region14: #{_lambda_.7} parent=11 // pred_check_branch
        %214 = sbr.rel (%p212) target = $region16
      $region15: #{_lambda_.7} parent=11 // pred_region
        %s215 = smul.u32 32, %s24
        %p216 = scmp.lt.s32.totalorder %s215, 31
        %s217 = scalar_select %p216, %s215, 31
        %p218 = scmp.lt.s32.totalorder %s23, 0
        %s219 = scalar_select %p218, %s23, 0
        %s220 = sadd.s32 %s219, %s217
        %s221 = smul.addr %s220, 4
        %s222 = scalar_lea.vmem %s1, %s221
        %s223 = smul.u32 32, %s24
      $region16: #{_lambda_.7} parent=11 // pred_fallthru
        _
      // Predicated region
      $region17: #{_lambda_.7} parent=11 // pred_check
        %p224 = pneg %p113
      $region18: #{_lambda_.7} parent=11 // pred_check_branch
        %226 = sbr.rel (%p224) target = $region20
      $region19: #{_lambda_.7} parent=11 // pred_region
        %p227 = scmp.lt.s32.totalorder %s23, 0
        %s228 = scalar_select %p227, %s23, 0
        %s229 = scalar_lea.vmem %s2, %s228
      $region20: #{_lambda_.7} parent=11 // pred_fallthru
        _
    $region12: #{_lambda_.7} parent=5 // pred_fallthru
      _
    %p230 = scmp.lt.s32.totalorder %s12, 2
    // Predicated region
    $region21: #{_lambda_.7} parent=5 // pred_check
      %p231 = pneg %p230
    $region22: #{_lambda_.7} parent=5 // pred_check_branch
      %233 = sbr.rel (%p231) target = $region24
    $region23: #{_lambda_.7} parent=5 // pred_region
      // Predicated region
      $region25: #{_lambda_.7} parent=23 // pred_check
        %p234 = pneg %p53
      $region26: #{_lambda_.7} parent=23 // pred_check_branch
        %236 = sbr.rel (%p234) target = $region28
      $region27: #{_lambda_.7} parent=23 // pred_region
        %s237 = smul.u32 2, %s19
        %s238 = smul.u32 2, %s21
        %p239 = scmp.lt.s32.totalorder %s237, 3
        %s240 = scalar_select %p239, %s237, 3
        %p241 = scmp.lt.s32.totalorder %s238, 1
        %s242 = scalar_select %p241, %s238, 1
        %s243 = smul.addr %s240, 2
        %s244 = sadd.s32 %s242, %s243
        %s245 = smul.addr %s244, 4
        %s246 = scalar_lea.vmem %s0, %s245
        %s247 = smul.u32 2, %s19
        %s248 = smul.u32 2, %s21
      $region28: #{_lambda_.7} parent=23 // pred_fallthru
        _
    $region24: #{_lambda_.7} parent=5 // pred_fallthru
      _
    %p249 = scmp.le.s32.totalorder 1, %s12
    %p250 = scmp.lt.s32.totalorder %s12, 3
    %p251 = pnand %p249, %p250
    %p252 = pneg %p251
    // Predicated region
    $region29: #{_lambda_.7} parent=5 // pred_check
      _
    $region30: #{_lambda_.7} parent=5 // pred_check_branch
      %254 = sbr.rel (%p251) target = $region32
    $region31: #{_lambda_.7} parent=5 // pred_region
      %s255 = ssub.s32 %s12, 1
      %s256 = smul.u32 2, %s22
      %s257 = smul.u32 2, %s24
      %p258 = scmp.lt.s32.totalorder %s256, 3
      %s259 = scalar_select %p258, %s256, 3
      %p260 = scmp.lt.s32.totalorder %s257, 1
      %s261 = scalar_select %p260, %s257, 1
      %s262 = smul.addr %s259, 2
      %s263 = sadd.s32 %s261, %s262
      %s264 = smul.addr %s263, 4
      %s265 = scalar_lea.vmem %s0, %s264
      %p266 = pneg %p59
      %p267 = pneg %p56
      %s268 = smul.u32 32, %s24
      %p269 = scmp.lt.s32.totalorder %s268, 31
      %s270 = scalar_select %p269, %s268, 31
      %p271 = scmp.lt.s32.totalorder %s23, 0
      %s272 = scalar_select %p271, %s23, 0
      %s273 = sadd.s32 %s272, %s270
      %s274 = smul.addr %s273, 4
      %s275 = scalar_lea.vmem %s1, %s274
      %p276 = pneg %p87
      %p277 = pneg %p84
      %p278 = scmp.lt.s32.totalorder %s23, 0
      %s279 = scalar_select %p278, %s23, 0
      %s280 = scalar_lea.vmem %s2, %s279
      %p281 = pneg %p113
      %p282 = pneg %p110
      %p283 = pneg %p141
      %p284 = pneg %p138
      %s285 = smul.u32 2, %s22
      %p286 = scmp.lt.s32.totalorder %s285, 3
      %s287 = scalar_select %p286, %s285, 3
      %p288 = scmp.lt.s32.totalorder %s23, 0
      %s289 = scalar_select %p288, %s23, 0
      %s290 = sadd.s32 %s289, %s287
      %s291 = smul.addr %s290, 4
      %s292 = scalar_lea.vmem %s3, %s291
      %p293 = pneg %p169
      %p294 = pneg %p166
      %p295 = scmp.lt.s32.totalorder %s22, 1
      %s296 = scalar_select %p295, %s22, 1
      %p297 = scmp.lt.s32.totalorder %s23, 0
      %s298 = scalar_select %p297, %s23, 0
      %s299 = sadd.s32 %s298, %s296
      %s300 = scalar_lea.vmem %s4, %s299
      %p301 = pneg %p197
      %p302 = pneg %p194
      %p303 = scmp.lt.s32.totalorder %s22, 1
      %s304 = scalar_select %p303, %s22, 1
      %p305 = scmp.lt.s32.totalorder %s23, 0
      %s306 = scalar_select %p305, %s23, 0
      %s307 = sadd.s32 %s306, %s304
      %s308 = scalar_lea.vmem %s5, %s307
      %s309 = smul.u32 2, %s22
      %s310 = smul.u32 2, %s24
      %p311 = scmp.lt.s32.totalorder %s309, 3
      %s312 = scalar_select %p311, %s309, 3
      %p313 = scmp.lt.s32.totalorder %s310, 1
      %s314 = scalar_select %p313, %s310, 1
      %s315 = smul.addr %s312, 2
      %s316 = sadd.s32 %s314, %s315
      %s317 = smul.addr %s316, 4
      %s318 = scalar_lea.vmem %s0, %s317
      %s319 = smul.u32 2, %s22
      %s320 = smul.u32 2, %s24
      %s321 = smul.u32 32, %s24
      %p322 = scmp.lt.s32.totalorder %s321, 31
      %s323 = scalar_select %p322, %s321, 31
      %p324 = scmp.lt.s32.totalorder %s23, 0
      %s325 = scalar_select %p324, %s23, 0
      %s326 = sadd.s32 %s325, %s323
      %s327 = smul.addr %s326, 4
      %s328 = scalar_lea.vmem %s1, %s327
      %s329 = smul.u32 32, %s24
      %p330 = scmp.lt.s32.totalorder %s23, 0
      %s331 = scalar_select %p330, %s23, 0
      %s332 = scalar_lea.vmem %s2, %s331
      %s333 = smul.u32 2, %s22
      %p334 = scmp.lt.s32.totalorder %s333, 3
      %s335 = scalar_select %p334, %s333, 3
      %p336 = scmp.lt.s32.totalorder %s23, 0
      %s337 = scalar_select %p336, %s23, 0
      %s338 = sadd.s32 %s337, %s335
      %s339 = smul.addr %s338, 4
      %s340 = scalar_lea.vmem %s3, %s339
      %s341 = smul.u32 2, %s22
      %p342 = scmp.lt.s32.totalorder %s22, 1
      %s343 = scalar_select %p342, %s22, 1
      %p344 = scmp.lt.s32.totalorder %s23, 0
      %s345 = scalar_select %p344, %s23, 0
      %s346 = sadd.s32 %s345, %s343
      %s347 = scalar_lea.vmem %s4, %s346
      %p348 = scmp.lt.s32.totalorder %s22, 1
      %s349 = scalar_select %p348, %s22, 1
      %p350 = scmp.lt.s32.totalorder %s23, 0
      %s351 = scalar_select %p350, %s23, 0
      %s352 = sadd.s32 %s351, %s349
      %s353 = scalar_lea.vmem %s5, %s352
      %p354 = scmp.eq.s32.totalorder %s24, 0
      // Predicated region
      $region33: #{_lambda_.7} parent=31 // pred_check
        %p355 = pneg %p354
      $region34: #{_lambda_.7} parent=31 // pred_check_branch
        %357 = sbr.rel (%p355) target = $region36
      $region35: #{_lambda_.7} parent=31 // pred_region
        %v358 = vld [vmem:[%s332] sm:$0x1]
        %v360 = vperm.slane %v358, 0
        %362 = vst [vmem:[#allocation2] sm:$0xff] %v360
        %363 = vst [vmem:[#allocation2 + $0x8] sm:$0xff] %v360
      $region36: #{_lambda_.7} parent=31 // pred_fallthru
        _
      %v364 = vld [vmem:[#allocation2] sm:$0xff]
      %v365 = vld [vmem:[#allocation2 + $0x8] sm:$0xff]
      %v366 = vld [vmem:[%s318] sm:$0xff]
      %v367 = vld [vmem:[%s318 + $0x8] sm:$0xff]
      %v368 = vld [vmem:[%s328] sm:$0xf]
      %v369 = vld [vmem:[%s328 + $0x4] sm:$0xf]
      %v370 = vld [vmem:[%s328 + $0x8] sm:$0xf]
      %v371 = vld [vmem:[%s328 + $0xc] sm:$0xf]
      %v372 = vld [vmem:[%s328 + $0x10] sm:$0xf]
      %v373 = vld [vmem:[%s328 + $0x14] sm:$0xf]
      %v374 = vld [vmem:[%s328 + $0x18] sm:$0xf]
      %v375 = vld [vmem:[%s328 + $0x1c] sm:$0xf]
      %v376 = vld [vmem:[%s328 + $0x20] sm:$0xf]
      %v377 = vld [vmem:[%s328 + $0x24] sm:$0xf]
      %v378 = vld [vmem:[%s328 + $0x28] sm:$0xf]
      %v379 = vld [vmem:[%s328 + $0x2c] sm:$0xf]
      %v380 = vld [vmem:[%s328 + $0x30] sm:$0xf]
      %v381 = vld [vmem:[%s328 + $0x34] sm:$0xf]
      %v382 = vld [vmem:[%s328 + $0x38] sm:$0xf]
      %v383 = vld [vmem:[%s328 + $0x3c] sm:$0xf]
      %v384 = vld [vmem:[%s328 + $0x40] sm:$0xf]
      %v385 = vld [vmem:[%s328 + $0x44] sm:$0xf]
      %v386 = vld [vmem:[%s328 + $0x48] sm:$0xf]
      %v387 = vld [vmem:[%s328 + $0x4c] sm:$0xf]
      %v388 = vld [vmem:[%s328 + $0x50] sm:$0xf]
      %v389 = vld [vmem:[%s328 + $0x54] sm:$0xf]
      %v390 = vld [vmem:[%s328 + $0x58] sm:$0xf]
      %v391 = vld [vmem:[%s328 + $0x5c] sm:$0xf]
      %v392 = vld [vmem:[%s328 + $0x60] sm:$0xf]
      %v393 = vld [vmem:[%s328 + $0x64] sm:$0xf]
      %v394 = vld [vmem:[%s328 + $0x68] sm:$0xf]
      %v395 = vld [vmem:[%s328 + $0x6c] sm:$0xf]
      %v396 = vld [vmem:[%s328 + $0x70] sm:$0xf]
      %v397 = vld [vmem:[%s328 + $0x74] sm:$0xf]
      %v398 = vld [vmem:[%s328 + $0x78] sm:$0xf]
      %v399 = vld [vmem:[%s328 + $0x7c] sm:$0xf]
      %v402 = vunpack.c.l.b16 %v366
      %v403 = vunpack.c.h.b16 %v366
      %v404 = vunpack.c.l.b16 %v367
      %v405 = vunpack.c.h.b16 %v367
      %v406 = vpack.c.b16 %v404, %v402
      %v407 = vpack.c.b16 %v405, %v403
      %v442 = vunpack.c.l.b16 %v368
      %v443 = vunpack.c.l.b16 %v369
      %v444 = vunpack.c.l.b16 %v370
      %v445 = vunpack.c.l.b16 %v371
      %v446 = vunpack.c.l.b16 %v372
      %v447 = vunpack.c.l.b16 %v373
      %v448 = vunpack.c.l.b16 %v374
      %v449 = vunpack.c.l.b16 %v375
      %v450 = vunpack.c.l.b16 %v376
      %v451 = vunpack.c.l.b16 %v377
      %v452 = vunpack.c.l.b16 %v378
      %v453 = vunpack.c.l.b16 %v379
      %v454 = vunpack.c.l.b16 %v380
      %v455 = vunpack.c.l.b16 %v381
      %v456 = vunpack.c.l.b16 %v382
      %v457 = vunpack.c.l.b16 %v383
      %v458 = vunpack.c.l.b16 %v384
      %v459 = vunpack.c.l.b16 %v385
      %v460 = vunpack.c.l.b16 %v386
      %v461 = vunpack.c.l.b16 %v387
      %v462 = vunpack.c.l.b16 %v388
      %v463 = vunpack.c.l.b16 %v389
      %v464 = vunpack.c.l.b16 %v390
      %v465 = vunpack.c.l.b16 %v391
      %v466 = vunpack.c.l.b16 %v392
      %v467 = vunpack.c.l.b16 %v393
      %v468 = vunpack.c.l.b16 %v394
      %v469 = vunpack.c.l.b16 %v395
      %v470 = vunpack.c.l.b16 %v396
      %v471 = vunpack.c.l.b16 %v397
      %v472 = vunpack.c.l.b16 %v398
      %v473 = vunpack.c.l.b16 %v399
      %v474 = vpack.c.b16 %v443, %v442
      %v475 = vpack.c.b16 %v445, %v444
      %v476 = vpack.c.b16 %v447, %v446
      %v477 = vpack.c.b16 %v449, %v448
      %v478 = vpack.c.b16 %v451, %v450
      %v479 = vpack.c.b16 %v453, %v452
      %v480 = vpack.c.b16 %v455, %v454
      %v481 = vpack.c.b16 %v457, %v456
      %v482 = vpack.c.b16 %v459, %v458
      %v483 = vpack.c.b16 %v461, %v460
      %v484 = vpack.c.b16 %v463, %v462
      %v485 = vpack.c.b16 %v465, %v464
      %v486 = vpack.c.b16 %v467, %v466
      %v487 = vpack.c.b16 %v469, %v468
      %v488 = vpack.c.b16 %v471, %v470
      %v489 = vpack.c.b16 %v473, %v472
      %506 = vmatpush.bf16.msra.mxu0 %v481
      %507 = vmatpush.bf16.msra.mxu0 %v480
      %508 = vmatpush.bf16.msra.mxu0 %v479
      %509 = vmatpush.bf16.msra.mxu0 %v478
      %510 = vmatpush.bf16.msra.mxu0 %v477
      %511 = vmatpush.bf16.msra.mxu0 %v476
      %512 = vmatpush.bf16.msra.mxu0 %v475
      %513 = vmatpush.bf16.msra.mxu0 %v474
      %514 = vmatmul.bf16.gmra.mxu0 %v406
      %v515 = vpop.f32.mrf.mxu0
      %v516 = vadd.f32 0.0, %v515
      %v517 = vpop.f32.mrf.mxu0
      %v518 = vadd.f32 0.0, %v517
      %519 = vdwg.mxu0
      %520 = vmatpush.bf16.msra.mxu0 %v489
      %521 = vmatpush.bf16.msra.mxu0 %v488
      %522 = vmatpush.bf16.msra.mxu0 %v487
      %523 = vmatpush.bf16.msra.mxu0 %v486
      %524 = vmatpush.bf16.msra.mxu0 %v485
      %525 = vmatpush.bf16.msra.mxu0 %v484
      %526 = vmatpush.bf16.msra.mxu0 %v483
      %527 = vmatpush.bf16.msra.mxu0 %v482
      %528 = vmatmul.bf16.gmra.mxu0 %v407
      %v529 = vpop.f32.mrf.mxu0
      %v530 = vadd.f32 %v516, %v529
      %v531 = vpop.f32.mrf.mxu0
      %v532 = vadd.f32 %v518, %v531
      %533 = vdwg.mxu0
      %v534 = vadd.f32 %v364, %v530
      %v535 = vadd.f32 %v365, %v532
      %536 = vst [vmem:[#allocation2] sm:$0xff] %v534
      %537 = vst [vmem:[#allocation2 + $0x8] sm:$0xff] %v535
      // Predicated region
      $region37: #{_lambda_.7} parent=31 // pred_check
        %p538 = pneg %p354
      $region38: #{_lambda_.7} parent=31 // pred_check_branch
        %540 = sbr.rel (%p538) target = $region40
      $region39: #{_lambda_.7} parent=31 // pred_region
        %v541 = vld [vmem:[#allocation2] sm:$0xff]
        %v542 = vld [vmem:[#allocation2 + $0x8] sm:$0xff]
        %v543 = vpack.c.bf16 %v541, %v541
        %v544 = vpack.c.bf16 %v542, %v542
        %545 = vst [vmem:[%s340] sm:$0xf] %v543
        %546 = vst [vmem:[%s340 + $0x4] sm:$0xf] %v544
        %v547 = vadd.f32 %v541, %v542
        %v548 = vrot.slane %v547, 4
        %v549 = vadd.f32 %v547, %v548
        %v550 = vrot.slane %v549, 2
        %v551 = vadd.f32 %v549, %v550
        %v552 = vrot.slane %v551, 1
        %v553 = vadd.f32 %v551, %v552
        %554 = vst [vmem:[%s347] sm:$0x1] %v553
        %v555 = vmul.f32 %v541, %v541
        %v556 = vmul.f32 %v542, %v542
        %v557 = vadd.f32 %v555, %v556
        %v558 = vrot.slane %v557, 4
        %v559 = vadd.f32 %v557, %v558
        %v560 = vrot.slane %v559, 2
        %v561 = vadd.f32 %v559, %v560
        %v562 = vrot.slane %v561, 1
        %v563 = vadd.f32 %v561, %v562
        %564 = vst [vmem:[%s353] sm:$0x1] %v563
      $region40: #{_lambda_.7} parent=31 // pred_fallthru
        _
      %s565 = smul.u32 2, %s22
      %p566 = scmp.lt.s32.totalorder %s565, 3
      %s567 = scalar_select %p566, %s565, 3
      %p568 = scmp.lt.s32.totalorder %s23, 0
      %s569 = scalar_select %p568, %s23, 0
      %s570 = sadd.s32 %s569, %s567
      %s571 = smul.addr %s570, 4
      %s572 = scalar_lea.vmem %s3, %s571
      %p573 = scmp.lt.s32.totalorder %s22, 1
      %s574 = scalar_select %p573, %s22, 1
      %p575 = scmp.lt.s32.totalorder %s23, 0
      %s576 = scalar_select %p575, %s23, 0
      %s577 = sadd.s32 %s576, %s574
      %s578 = scalar_lea.vmem %s4, %s577
      %p579 = scmp.lt.s32.totalorder %s22, 1
      %s580 = scalar_select %p579, %s22, 1
      %p581 = scmp.lt.s32.totalorder %s23, 0
      %s582 = scalar_select %p581, %s23, 0
      %s583 = sadd.s32 %s582, %s580
      %s584 = scalar_lea.vmem %s5, %s583
      // Predicated region
      $region41: #{_lambda_.7} parent=31 // pred_check
        %p585 = pneg %p138
      $region42: #{_lambda_.7} parent=31 // pred_check_branch
        %587 = sbr.rel (%p585) target = $region44
      $region43: #{_lambda_.7} parent=31 // pred_region
        %s588 = smul.u32 2, %s22
      $region44: #{_lambda_.7} parent=31 // pred_fallthru
        _
      // Predicated region
      $region45: #{_lambda_.7} parent=31 // pred_check
        %p589 = pneg %p166
      $region46: #{_lambda_.7} parent=31 // pred_check_branch
        %591 = sbr.rel (%p589) target = $region48
      $region47: #{_lambda_.7} parent=31 // pred_region
        _
      $region48: #{_lambda_.7} parent=31 // pred_fallthru
        _
      // Predicated region
      $region49: #{_lambda_.7} parent=31 // pred_check
        %p592 = pneg %p194
      $region50: #{_lambda_.7} parent=31 // pred_check_branch
        %594 = sbr.rel (%p592) target = $region52
      $region51: #{_lambda_.7} parent=31 // pred_region
        _
      $region52: #{_lambda_.7} parent=31 // pred_fallthru
        _
    $region32: #{_lambda_.7} parent=5 // pred_fallthru
      _
    %p595 = scmp.le.s32.totalorder 2, %s12
    // Predicated region
    $region53: #{_lambda_.7} parent=5 // pred_check
      %p596 = pneg %p595
    $region54: #{_lambda_.7} parent=5 // pred_check_branch
      %598 = sbr.rel (%p596) target = $region56
    $region55: #{_lambda_.7} parent=5 // pred_region
      %s599 = ssub.s32 %s12, 2
      // Predicated region
      $region57: #{_lambda_.7} parent=55 // pred_check
        %p600 = pneg %p144
      $region58: #{_lambda_.7} parent=55 // pred_check_branch
        %602 = sbr.rel (%p600) target = $region60
      $region59: #{_lambda_.7} parent=55 // pred_region
        %s603 = smul.u32 2, %s25
        %p604 = scmp.lt.s32.totalorder %s603, 3
        %s605 = scalar_select %p604, %s603, 3
        %p606 = scmp.lt.s32.totalorder %s26, 0
        %s607 = scalar_select %p606, %s26, 0
        %s608 = sadd.s32 %s607, %s605
        %s609 = smul.addr %s608, 4
        %s610 = scalar_lea.vmem %s3, %s609
      $region60: #{_lambda_.7} parent=55 // pred_fallthru
        _
      // Predicated region
      $region61: #{_lambda_.7} parent=55 // pred_check
        %p611 = pneg %p172
      $region62: #{_lambda_.7} parent=55 // pred_check_branch
        %613 = sbr.rel (%p611) target = $region64
      $region63: #{_lambda_.7} parent=55 // pred_region
        %p614 = scmp.lt.s32.totalorder %s25, 1
        %s615 = scalar_select %p614, %s25, 1
        %p616 = scmp.lt.s32.totalorder %s26, 0
        %s617 = scalar_select %p616, %s26, 0
        %s618 = sadd.s32 %s617, %s615
        %s619 = scalar_lea.vmem %s4, %s618
      $region64: #{_lambda_.7} parent=55 // pred_fallthru
        _
      // Predicated region
      $region65: #{_lambda_.7} parent=55 // pred_check
        %p620 = pneg %p200
      $region66: #{_lambda_.7} parent=55 // pred_check_branch
        %622 = sbr.rel (%p620) target = $region68
      $region67: #{_lambda_.7} parent=55 // pred_region
        %p623 = scmp.lt.s32.totalorder %s25, 1
        %s624 = scalar_select %p623, %s25, 1
        %p625 = scmp.lt.s32.totalorder %s26, 0
        %s626 = scalar_select %p625, %s26, 0
        %s627 = sadd.s32 %s626, %s624
        %s628 = scalar_lea.vmem %s5, %s627
      $region68: #{_lambda_.7} parent=55 // pred_fallthru
        _
    $region56: #{_lambda_.7} parent=5 // pred_fallthru
      _
  $region6: #{_lambda_.7} parent=0 // loop_footer
    %s16 = sadd.s32 1, %s12
  $region7: #{_lambda_.7} parent=0 // loop_footer_branch
    %11 = sbr.rel target = $region3
  $region8: #{_lambda_.7} parent=0 // loop_exit
    _

// kernel: _lambda_.8
$region0: #{_lambda_.8}
  #allocation0 [shape = 'u32[]', space=smem, size = 0x4, offset = 0x4, fixed_abs, tag = 'smem constant byte address 0x4 - core index']
  #allocation1 [shape = 'u32[72,128]{1,0:T(1,128)}', space=vmem, size = 0x9000, scoped, tag = 'internal scratch']
  #allocation2 [shape = 'f32[16,128]{1,0:T(8,128)}', space=vmem, size = 0x2000, scoped, tag = 'scratch operand']
  %s0 = inlined_call_operand.vmem [shape: bf16[32,512], index: 0, kind: input, shape index: {}]
  %s1 = inlined_call_operand.vmem [shape: bf16[512,128], index: 1, kind: input, shape index: {}]
  %s2 = inlined_call_operand.vmem [shape: f32[1,128], index: 2, kind: input, shape index: {}]
  %s3 = inlined_call_operand.vmem [shape: bf16[32,128], index: 3, kind: output, shape index: {0}]
  %s4 = inlined_call_operand.vmem [shape: f32[2,1,128], index: 4, kind: output, shape index: {1}]
  %s5 = inlined_call_operand.vmem [shape: f32[2,1,128], index: 5, kind: output, shape index: {2}]
  %6 = xla_tuple %s3, %s4, %s5
  %s7 = sld [smem:[#allocation0]]
  $region69: #{_lambda_.8} parent=0
    _
  %s9 = ssub.s32 1, %s7
  %s10 = scalar_select 0, %s9, %s7
  loop: start=0, step=1, limit=4
  $region2: #{_lambda_.8} parent=0 // loop_pre_header
    _
  $region3: #{_lambda_.8} parent=0 // loop_header
    %s12 = sphi 0, %s16
    %p13 = scmp.ge.s32.totalorder %s12, 4
    %s19 = sphi 0, %s38
    %s20 = sphi 0, %s34
    %s21 = sphi 0, %s30
    %s22 = sphi 0, %s19
    %s23 = sphi 0, %s20
    %s24 = sphi 0, %s21
    %s25 = sphi 0, %s22
    %s26 = sphi 0, %s23
    %s27 = sphi 0, %s24
    %s43 = sphi 0, %s45
    %s46 = sphi 0, %s43
    %s47 = sphi 0, %s46
    %s63 = sphi 0, %s47
    %s71 = sphi 0, %s73
    %s74 = sphi 0, %s71
    %s75 = sphi 0, %s74
    %s91 = sphi 0, %s75
    %s97 = sphi 0, %s99
    %s100 = sphi 0, %s97
    %s101 = sphi 0, %s100
    %s117 = sphi 0, %s101
    %s125 = sphi 0, %s127
    %s128 = sphi 0, %s125
    %s129 = sphi 0, %s128
    %s145 = sphi 0, %s129
    %s153 = sphi 0, %s155
    %s156 = sphi 0, %s153
    %s157 = sphi 0, %s156
    %s173 = sphi 0, %s157
    %s181 = sphi 0, %s183
    %s184 = sphi 0, %s181
    %s185 = sphi 0, %s184
    %s201 = sphi 0, %s185
  $region4: #{_lambda_.8} parent=0 // loop_header_branch
    %15 = sbr.rel (%p13) target = $region8
  $region5: #{_lambda_.8} parent=0 // loop_body
    %s17 = ssub.s32 %s12, 1
    %s18 = ssub.s32 %s12, 2
    %s28 = sadd.s32 1, %s21
    %p29 = scmp.ge.s32.totalorder %s28, 1
    %s30 = scalar_select %p29, 0, %s28
    %s31 = sadd.s32 1, %s20
    %s32 = scalar_select %p29, %s31, %s20
    %p33 = scmp.ge.s32.totalorder %s32, 1
    %s34 = scalar_select %p33, 0, %s32
    %s35 = sadd.s32 1, %s19
    %s36 = scalar_select %p33, %s35, %s19
    %p37 = scmp.ge.s32.totalorder %s36, 2
    %s38 = scalar_select %p37, 0, %s36
    %s39 = ssub.s32 %s19, %s38
    %s40 = ssub.s32 %s21, %s30
    %s41 = sor.u32 %s39, %s40
    %p42 = scmp.eq.s32.totalorder %s41, 0
    %s44 = sadd.s32 %s43, 1
    %s45 = scalar_select %p42, %s43, %s44
    %p48 = pneg %p42
    %p49 = scmp.eq.s32.totalorder %s12, 1
    %p50 = por %p48, %p49
    %p51 = scmp.ne.s32.totalorder %s43, %s46
    %p52 = scmp.eq.s32.totalorder %s12, 0
    %p53 = por %p51, %p52
    %p54 = scmp.ne.s32.totalorder %s43, %s46
    %p55 = scmp.eq.s32.totalorder %s17, 1
    %p56 = por %p54, %p55
    %p57 = scmp.ne.s32.totalorder %s46, %s47
    %p58 = scmp.eq.s32.totalorder %s17, 0
    %p59 = por %p57, %p58
    %p60 = scmp.ne.s32.totalorder %s46, %s47
    %p61 = scmp.eq.s32.totalorder %s18, 1
    %p62 = por %p60, %p61
    %p64 = scmp.ne.s32.totalorder %s47, %s63
    %p65 = scmp.eq.s32.totalorder %s18, 0
    %p66 = por %p64, %p65
    %s67 = ssub.s32 %s21, %s30
    %s68 = ssub.s32 %s20, %s34
    %s69 = sor.u32 %s67, %s68
    %p70 = scmp.eq.s32.totalorder %s69, 0
    %s72 = sadd.s32 %s71, 1
    %s73 = scalar_select %p70, %s71, %s72
    %p76 = pneg %p70
    %p77 = scmp.eq.s32.totalorder %s12, 1
    %p78 = por %p76, %p77
    %p79 = scmp.ne.s32.totalorder %s71, %s74
    %p80 = scmp.eq.s32.totalorder %s12, 0
    %p81 = por %p79, %p80
    %p82 = scmp.ne.s32.totalorder %s71, %s74
    %p83 = scmp.eq.s32.totalorder %s17, 1
    %p84 = por %p82, %p83
    %p85 = scmp.ne.s32.totalorder %s74, %s75
    %p86 = scmp.eq.s32.totalorder %s17, 0
    %p87 = por %p85, %p86
    %p88 = scmp.ne.s32.totalorder %s74, %s75
    %p89 = scmp.eq.s32.totalorder %s18, 1
    %p90 = por %p88, %p89
    %p92 = scmp.ne.s32.totalorder %s75, %s91
    %p93 = scmp.eq.s32.totalorder %s18, 0
    %p94 = por %p92, %p93
    %s95 = ssub.s32 %s20, %s34
    %p96 = scmp.eq.s32.totalorder %s95, 0
    %s98 = sadd.s32 %s97, 1
    %s99 = scalar_select %p96, %s97, %s98
    %p102 = pneg %p96
    %p103 = scmp.eq.s32.totalorder %s12, 1
    %p104 = por %p102, %p103
    %p105 = scmp.ne.s32.totalorder %s97, %s100
    %p106 = scmp.eq.s32.totalorder %s12, 0
    %p107 = por %p105, %p106
    %p108 = scmp.ne.s32.totalorder %s97, %s100
    %p109 = scmp.eq.s32.totalorder %s17, 1
    %p110 = por %p108, %p109
    %p111 = scmp.ne.s32.totalorder %s100, %s101
    %p112 = scmp.eq.s32.totalorder %s17, 0
    %p113 = por %p111, %p112
    %p114 = scmp.ne.s32.totalorder %s100, %s101
    %p115 = scmp.eq.s32.totalorder %s18, 1
    %p116 = por %p114, %p115
    %p118 = scmp.ne.s32.totalorder %s101, %s117
    %p119 = scmp.eq.s32.totalorder %s18, 0
    %p120 = por %p118, %p119
    %s121 = ssub.s32 %s19, %s38
    %s122 = ssub.s32 %s20, %s34
    %s123 = sor.u32 %s121, %s122
    %p124 = scmp.eq.s32.totalorder %s123, 0
    %s126 = sadd.s32 %s125, 1
    %s127 = scalar_select %p124, %s125, %s126
    %p130 = pneg %p124
    %p131 = scmp.eq.s32.totalorder %s12, 1
    %p132 = por %p130, %p131
    %p133 = scmp.ne.s32.totalorder %s125, %s128
    %p134 = scmp.eq.s32.totalorder %s12, 0
    %p135 = por %p133, %p134
    %p136 = scmp.ne.s32.totalorder %s125, %s128
    %p137 = scmp.eq.s32.totalorder %s17, 1
    %p138 = por %p136, %p137
    %p139 = scmp.ne.s32.totalorder %s128, %s129
    %p140 = scmp.eq.s32.totalorder %s17, 0
    %p141 = por %p139, %p140
    %p142 = scmp.ne.s32.totalorder %s128, %s129
    %p143 = scmp.eq.s32.totalorder %s18, 1
    %p144 = por %p142, %p143
    %p146 = scmp.ne.s32.totalorder %s129, %s145
    %p147 = scmp.eq.s32.totalorder %s18, 0
    %p148 = por %p146, %p147
    %s149 = ssub.s32 %s19, %s38
    %s150 = ssub.s32 %s20, %s34
    %s151 = sor.u32 %s149, %s150
    %p152 = scmp.eq.s32.totalorder %s151, 0
    %s154 = sadd.s32 %s153, 1
    %s155 = scalar_select %p152, %s153, %s154
    %p158 = pneg %p152
    %p159 = scmp.eq.s32.totalorder %s12, 1
    %p160 = por %p158, %p159
    %p161 = scmp.ne.s32.totalorder %s153, %s156
    %p162 = scmp.eq.s32.totalorder %s12, 0
    %p163 = por %p161, %p162
    %p164 = scmp.ne.s32.totalorder %s153, %s156
    %p165 = scmp.eq.s32.totalorder %s17, 1
    %p166 = por %p164, %p165
    %p167 = scmp.ne.s32.totalorder %s156, %s157
    %p168 = scmp.eq.s32.totalorder %s17, 0
    %p169 = por %p167, %p168
    %p170 = scmp.ne.s32.totalorder %s156, %s157
    %p171 = scmp.eq.s32.totalorder %s18, 1
    %p172 = por %p170, %p171
    %p174 = scmp.ne.s32.totalorder %s157, %s173
    %p175 = scmp.eq.s32.totalorder %s18, 0
    %p176 = por %p174, %p175
    %s177 = ssub.s32 %s19, %s38
    %s178 = ssub.s32 %s20, %s34
    %s179 = sor.u32 %s177, %s178
    %p180 = scmp.eq.s32.totalorder %s179, 0
    %s182 = sadd.s32 %s181, 1
    %s183 = scalar_select %p180, %s181, %s182
    %p186 = pneg %p180
    %p187 = scmp.eq.s32.totalorder %s12, 1
    %p188 = por %p186, %p187
    %p189 = scmp.ne.s32.totalorder %s181, %s184
    %p190 = scmp.eq.s32.totalorder %s12, 0
    %p191 = por %p189, %p190
    %p192 = scmp.ne.s32.totalorder %s181, %s184
    %p193 = scmp.eq.s32.totalorder %s17, 1
    %p194 = por %p192, %p193
    %p195 = scmp.ne.s32.totalorder %s184, %s185
    %p196 = scmp.eq.s32.totalorder %s17, 0
    %p197 = por %p195, %p196
    %p198 = scmp.ne.s32.totalorder %s184, %s185
    %p199 = scmp.eq.s32.totalorder %s18, 1
    %p200 = por %p198, %p199
    %p202 = scmp.ne.s32.totalorder %s185, %s201
    %p203 = scmp.eq.s32.totalorder %s18, 0
    %p204 = por %p202, %p203
    %p205 = scmp.le.s32.totalorder 1, %s12
    %p206 = scmp.lt.s32.totalorder %s12, 3
    %p207 = pnand %p205, %p206
    %p208 = pneg %p207
    // Predicated region
    $region9: #{_lambda_.8} parent=5 // pred_check
      _
    $region10: #{_lambda_.8} parent=5 // pred_check_branch
      %210 = sbr.rel (%p207) target = $region12
    $region11: #{_lambda_.8} parent=5 // pred_region
      %s211 = ssub.s32 %s12, 1
      // Predicated region
      $region13: #{_lambda_.8} parent=11 // pred_check
        %p212 = pneg %p87
      $region14: #{_lambda_.8} parent=11 // pred_check_branch
        %214 = sbr.rel (%p212) target = $region16
      $region15: #{_lambda_.8} parent=11 // pred_region
        %s215 = smul.u32 64, %s24
        %p216 = scmp.lt.s32.totalorder %s215, 63
        %s217 = scalar_select %p216, %s215, 63
        %p218 = scmp.lt.s32.totalorder %s23, 0
        %s219 = scalar_select %p218, %s23, 0
        %s220 = sadd.s32 %s219, %s217
        %s221 = smul.addr %s220, 4
        %s222 = scalar_lea.vmem %s1, %s221
        %s223 = smul.u32 64, %s24
      $region16: #{_lambda_.8} parent=11 // pred_fallthru
        _
      // Predicated region
      $region17: #{_lambda_.8} parent=11 // pred_check
        %p224 = pneg %p113
      $region18: #{_lambda_.8} parent=11 // pred_check_branch
        %226 = sbr.rel (%p224) target = $region20
      $region19: #{_lambda_.8} parent=11 // pred_region
        %p227 = scmp.lt.s32.totalorder %s23, 0
        %s228 = scalar_select %p227, %s23, 0
        %s229 = scalar_lea.vmem %s2, %s228
      $region20: #{_lambda_.8} parent=11 // pred_fallthru
        _
    $region12: #{_lambda_.8} parent=5 // pred_fallthru
      _
    %p230 = scmp.lt.s32.totalorder %s12, 2
    // Predicated region
    $region21: #{_lambda_.8} parent=5 // pred_check
      %p231 = pneg %p230
    $region22: #{_lambda_.8} parent=5 // pred_check_branch
      %233 = sbr.rel (%p231) target = $region24
    $region23: #{_lambda_.8} parent=5 // pred_region
      // Predicated region
      $region25: #{_lambda_.8} parent=23 // pred_check
        %p234 = pneg %p53
      $region26: #{_lambda_.8} parent=23 // pred_check_branch
        %236 = sbr.rel (%p234) target = $region28
      $region27: #{_lambda_.8} parent=23 // pred_region
        %s237 = smul.u32 2, %s19
        %s238 = smul.u32 4, %s21
        %p239 = scmp.lt.s32.totalorder %s237, 3
        %s240 = scalar_select %p239, %s237, 3
        %p241 = scmp.lt.s32.totalorder %s238, 3
        %s242 = scalar_select %p241, %s238, 3
        %s243 = smul.addr %s240, 4
        %s244 = sadd.s32 %s242, %s243
        %s245 = smul.addr %s244, 4
        %s246 = scalar_lea.vmem %s0, %s245
        %s247 = smul.u32 2, %s19
        %s248 = smul.u32 4, %s21
      $region28: #{_lambda_.8} parent=23 // pred_fallthru
        _
    $region24: #{_lambda_.8} parent=5 // pred_fallthru
      _
    %p249 = scmp.le.s32.totalorder 1, %s12
    %p250 = scmp.lt.s32.totalorder %s12, 3
    %p251 = pnand %p249, %p250
    %p252 = pneg %p251
    // Predicated region
    $region29: #{_lambda_.8} parent=5 // pred_check
      _
    $region30: #{_lambda_.8} parent=5 // pred_check_branch
      %254 = sbr.rel (%p251) target = $region32
    $region31: #{_lambda_.8} parent=5 // pred_region
      %s255 = ssub.s32 %s12, 1
      %s256 = smul.u32 2, %s22
      %s257 = smul.u32 4, %s24
      %p258 = scmp.lt.s32.totalorder %s256, 3
      %s259 = scalar_select %p258, %s256, 3
      %p260 = scmp.lt.s32.totalorder %s257, 3
      %s261 = scalar_select %p260, %s257, 3
      %s262 = smul.addr %s259, 4
      %s263 = sadd.s32 %s261, %s262
      %s264 = smul.addr %s263, 4
      %s265 = scalar_lea.vmem %s0, %s264
      %p266 = pneg %p59
      %p267 = pneg %p56
      %s268 = smul.u32 64, %s24
      %p269 = scmp.lt.s32.totalorder %s268, 63
      %s270 = scalar_select %p269, %s268, 63
      %p271 = scmp.lt.s32.totalorder %s23, 0
      %s272 = scalar_select %p271, %s23, 0
      %s273 = sadd.s32 %s272, %s270
      %s274 = smul.addr %s273, 4
      %s275 = scalar_lea.vmem %s1, %s274
      %p276 = pneg %p87
      %p277 = pneg %p84
      %p278 = scmp.lt.s32.totalorder %s23, 0
      %s279 = scalar_select %p278, %s23, 0
      %s280 = scalar_lea.vmem %s2, %s279
      %p281 = pneg %p113
      %p282 = pneg %p110
      %p283 = pneg %p141
      %p284 = pneg %p138
      %s285 = smul.u32 2, %s22
      %p286 = scmp.lt.s32.totalorder %s285, 3
      %s287 = scalar_select %p286, %s285, 3
      %p288 = scmp.lt.s32.totalorder %s23, 0
      %s289 = scalar_select %p288, %s23, 0
      %s290 = sadd.s32 %s289, %s287
      %s291 = smul.addr %s290, 4
      %s292 = scalar_lea.vmem %s3, %s291
      %p293 = pneg %p169
      %p294 = pneg %p166
      %p295 = scmp.lt.s32.totalorder %s22, 1
      %s296 = scalar_select %p295, %s22, 1
      %p297 = scmp.lt.s32.totalorder %s23, 0
      %s298 = scalar_select %p297, %s23, 0
      %s299 = sadd.s32 %s298, %s296
      %s300 = scalar_lea.vmem %s4, %s299
      %p301 = pneg %p197
      %p302 = pneg %p194
      %p303 = scmp.lt.s32.totalorder %s22, 1
      %s304 = scalar_select %p303, %s22, 1
      %p305 = scmp.lt.s32.totalorder %s23, 0
      %s306 = scalar_select %p305, %s23, 0
      %s307 = sadd.s32 %s306, %s304
      %s308 = scalar_lea.vmem %s5, %s307
      %s309 = smul.u32 2, %s22
      %s310 = smul.u32 4, %s24
      %p311 = scmp.lt.s32.totalorder %s309, 3
      %s312 = scalar_select %p311, %s309, 3
      %p313 = scmp.lt.s32.totalorder %s310, 3
      %s314 = scalar_select %p313, %s310, 3
      %s315 = smul.addr %s312, 4
      %s316 = sadd.s32 %s314, %s315
      %s317 = smul.addr %s316, 4
      %s318 = scalar_lea.vmem %s0, %s317
      %s319 = smul.u32 2, %s22
      %s320 = smul.u32 4, %s24
      %s321 = smul.u32 64, %s24
      %p322 = scmp.lt.s32.totalorder %s321, 63
      %s323 = scalar_select %p322, %s321, 63
      %p324 = scmp.lt.s32.totalorder %s23, 0
      %s325 = scalar_select %p324, %s23, 0
      %s326 = sadd.s32 %s325, %s323
      %s327 = smul.addr %s326, 4
      %s328 = scalar_lea.vmem %s1, %s327
      %s329 = smul.u32 64, %s24
      %p330 = scmp.lt.s32.totalorder %s23, 0
      %s331 = scalar_select %p330, %s23, 0
      %s332 = scalar_lea.vmem %s2, %s331
      %s333 = smul.u32 2, %s22
      %p334 = scmp.lt.s32.totalorder %s333, 3
      %s335 = scalar_select %p334, %s333, 3
      %p336 = scmp.lt.s32.totalorder %s23, 0
      %s337 = scalar_select %p336, %s23, 0
      %s338 = sadd.s32 %s337, %s335
      %s339 = smul.addr %s338, 4
      %s340 = scalar_lea.vmem %s3, %s339
      %s341 = smul.u32 2, %s22
      %p342 = scmp.lt.s32.totalorder %s22, 1
      %s343 = scalar_select %p342, %s22, 1
      %p344 = scmp.lt.s32.totalorder %s23, 0
      %s345 = scalar_select %p344, %s23, 0
      %s346 = sadd.s32 %s345, %s343
      %s347 = scalar_lea.vmem %s4, %s346
      %p348 = scmp.lt.s32.totalorder %s22, 1
      %s349 = scalar_select %p348, %s22, 1
      %p350 = scmp.lt.s32.totalorder %s23, 0
      %s351 = scalar_select %p350, %s23, 0
      %s352 = sadd.s32 %s351, %s349
      %s353 = scalar_lea.vmem %s5, %s352
      %p354 = scmp.eq.s32.totalorder %s24, 0
      // Predicated region
      $region33: #{_lambda_.8} parent=31 // pred_check
        %p355 = pneg %p354
      $region34: #{_lambda_.8} parent=31 // pred_check_branch
        %357 = sbr.rel (%p355) target = $region36
      $region35: #{_lambda_.8} parent=31 // pred_region
        %v358 = vld [vmem:[%s332] sm:$0x1]
        %v360 = vperm.slane %v358, 0
        %362 = vst [vmem:[#allocation2] sm:$0xff] %v360
        %363 = vst [vmem:[#allocation2 + $0x8] sm:$0xff] %v360
      $region36: #{_lambda_.8} parent=31 // pred_fallthru
        _
      %v364 = vld [vmem:[#allocation2] sm:$0xff]
      %v365 = vld [vmem:[#allocation2 + $0x8] sm:$0xff]
      %v366 = vld [vmem:[%s318] sm:$0xff]
      %v367 = vld [vmem:[%s318 + $0x8] sm:$0xff]
      %v368 = vld [vmem:[%s318 + $0x10] sm:$0xff]
      %v369 = vld [vmem:[%s318 + $0x18] sm:$0xff]
      %v370 = vld [vmem:[%s328] sm:$0xf]
      %v371 = vld [vmem:[%s328 + $0x4] sm:$0xf]
      %v372 = vld [vmem:[%s328 + $0x8] sm:$0xf]
      %v373 = vld [vmem:[%s328 + $0xc] sm:$0xf]
      %v374 = vld [vmem:[%s328 + $0x10] sm:$0xf]
      %v375 = vld [vmem:[%s328 + $0x14] sm:$0xf]
      %v376 = vld [vmem:[%s328 + $0x18] sm:$0xf]
      %v377 = vld [vmem:[%s328 + $0x1c] sm:$0xf]
      %v378 = vld [vmem:[%s328 + $0x20] sm:$0xf]
      %v379 = vld [vmem:[%s328 + $0x24] sm:$0xf]
      %v380 = vld [vmem:[%s328 + $0x28] sm:$0xf]
      %v381 = vld [vmem:[%s328 + $0x2c] sm:$0xf]
      %v382 = vld [vmem:[%s328 + $0x30] sm:$0xf]
      %v383 = vld [vmem:[%s328 + $0x34] sm:$0xf]
      %v384 = vld [vmem:[%s328 + $0x38] sm:$0xf]
      %v385 = vld [vmem:[%s328 + $0x3c] sm:$0xf]
      %v386 = vld [vmem:[%s328 + $0x40] sm:$0xf]
      %v387 = vld [vmem:[%s328 + $0x44] sm:$0xf]
      %v388 = vld [vmem:[%s328 + $0x48] sm:$0xf]
      %v389 = vld [vmem:[%s328 + $0x4c] sm:$0xf]
      %v390 = vld [vmem:[%s328 + $0x50] sm:$0xf]
      %v391 = vld [vmem:[%s328 + $0x54] sm:$0xf]
      %v392 = vld [vmem:[%s328 + $0x58] sm:$0xf]
      %v393 = vld [vmem:[%s328 + $0x5c] sm:$0xf]
      %v394 = vld [vmem:[%s328 + $0x60] sm:$0xf]
      %v395 = vld [vmem:[%s328 + $0x64] sm:$0xf]
      %v396 = vld [vmem:[%s328 + $0x68] sm:$0xf]
      %v397 = vld [vmem:[%s328 + $0x6c] sm:$0xf]
      %v398 = vld [vmem:[%s328 + $0x70] sm:$0xf]
      %v399 = vld [vmem:[%s328 + $0x74] sm:$0xf]
      %v400 = vld [vmem:[%s328 + $0x78] sm:$0xf]
      %v401 = vld [vmem:[%s328 + $0x7c] sm:$0xf]
      %v402 = vld [vmem:[%s328 + $0x80] sm:$0xf]
      %v403 = vld [vmem:[%s328 + $0x84] sm:$0xf]
      %v404 = vld [vmem:[%s328 + $0x88] sm:$0xf]
      %v405 = vld [vmem:[%s328 + $0x8c] sm:$0xf]
      %v406 = vld [vmem:[%s328 + $0x90] sm:$0xf]
      %v407 = vld [vmem:[%s328 + $0x94] sm:$0xf]
      %v408 = vld [vmem:[%s328 + $0x98] sm:$0xf]
      %v409 = vld [vmem:[%s328 + $0x9c] sm:$0xf]
      %v410 = vld [vmem:[%s328 + $0xa0] sm:$0xf]
      %v411 = vld [vmem:[%s328 + $0xa4] sm:$0xf]
      %v412 = vld [vmem:[%s328 + $0xa8] sm:$0xf]
      %v413 = vld [vmem:[%s328 + $0xac] sm:$0xf]
      %v414 = vld [vmem:[%s328 + $0xb0] sm:$0xf]
      %v415 = vld [vmem:[%s328 + $0xb4] sm:$0xf]
      %v416 = vld [vmem:[%s328 + $0xb8] sm:$0xf]
      %v417 = vld [vmem:[%s328 + $0xbc] sm:$0xf]
      %v418 = vld [vmem:[%s328 + $0xc0] sm:$0xf]
      %v419 = vld [vmem:[%s328 + $0xc4] sm:$0xf]
      %v420 = vld [vmem:[%s328 + $0xc8] sm:$0xf]
      %v421 = vld [vmem:[%s328 + $0xcc] sm:$0xf]
      %v422 = vld [vmem:[%s328 + $0xd0] sm:$0xf]
      %v423 = vld [vmem:[%s328 + $0xd4] sm:$0xf]
      %v424 = vld [vmem:[%s328 + $0xd8] sm:$0xf]
      %v425 = vld [vmem:[%s328 + $0xdc] sm:$0xf]
      %v426 = vld [vmem:[%s328 + $0xe0] sm:$0xf]
      %v427 = vld [vmem:[%s328 + $0xe4] sm:$0xf]
      %v428 = vld [vmem:[%s328 + $0xe8] sm:$0xf]
      %v429 = vld [vmem:[%s328 + $0xec] sm:$0xf]
      %v430 = vld [vmem:[%s328 + $0xf0] sm:$0xf]
      %v431 = vld [vmem:[%s328 + $0xf4] sm:$0xf]
      %v432 = vld [vmem:[%s328 + $0xf8] sm:$0xf]
      %v433 = vld [vmem:[%s328 + $0xfc] sm:$0xf]
      %v438 = vunpack.c.l.b16 %v366
      %v439 = vunpack.c.h.b16 %v366
      %v440 = vunpack.c.l.b16 %v367
      %v441 = vunpack.c.h.b16 %v367
      %v442 = vunpack.c.l.b16 %v368
      %v443 = vunpack.c.h.b16 %v368
      %v444 = vunpack.c.l.b16 %v369
      %v445 = vunpack.c.h.b16 %v369
      %v446 = vpack.c.b16 %v442, %v438
      %v447 = vpack.c.b16 %v443, %v439
      %v448 = vpack.c.b16 %v444, %v440
      %v449 = vpack.c.b16 %v445, %v441
      %v518 = vunpack.c.l.b16 %v370
      %v519 = vunpack.c.l.b16 %v371
      %v520 = vunpack.c.l.b16 %v372
      %v521 = vunpack.c.l.b16 %v373
      %v522 = vunpack.c.l.b16 %v374
      %v523 = vunpack.c.l.b16 %v375
      %v524 = vunpack.c.l.b16 %v376
      %v525 = vunpack.c.l.b16 %v377
      %v526 = vunpack.c.l.b16 %v378
      %v527 = vunpack.c.l.b16 %v379
      %v528 = vunpack.c.l.b16 %v380
      %v529 = vunpack.c.l.b16 %v381
      %v530 = vunpack.c.l.b16 %v382
      %v531 = vunpack.c.l.b16 %v383
      %v532 = vunpack.c.l.b16 %v384
      %v533 = vunpack.c.l.b16 %v385
      %v534 = vunpack.c.l.b16 %v386
      %v535 = vunpack.c.l.b16 %v387
      %v536 = vunpack.c.l.b16 %v388
      %v537 = vunpack.c.l.b16 %v389
      %v538 = vunpack.c.l.b16 %v390
      %v539 = vunpack.c.l.b16 %v391
      %v540 = vunpack.c.l.b16 %v392
      %v541 = vunpack.c.l.b16 %v393
      %v542 = vunpack.c.l.b16 %v394
      %v543 = vunpack.c.l.b16 %v395
      %v544 = vunpack.c.l.b16 %v396
      %v545 = vunpack.c.l.b16 %v397
      %v546 = vunpack.c.l.b16 %v398
      %v547 = vunpack.c.l.b16 %v399
      %v548 = vunpack.c.l.b16 %v400
      %v549 = vunpack.c.l.b16 %v401
      %v550 = vunpack.c.l.b16 %v402
      %v551 = vunpack.c.l.b16 %v403
      %v552 = vunpack.c.l.b16 %v404
      %v553 = vunpack.c.l.b16 %v405
      %v554 = vunpack.c.l.b16 %v406
      %v555 = vunpack.c.l.b16 %v407
      %v556 = vunpack.c.l.b16 %v408
      %v557 = vunpack.c.l.b16 %v409
      %v558 = vunpack.c.l.b16 %v410
      %v559 = vunpack.c.l.b16 %v411
      %v560 = vunpack.c.l.b16 %v412
      %v561 = vunpack.c.l.b16 %v413
      %v562 = vunpack.c.l.b16 %v414
      %v563 = vunpack.c.l.b16 %v415
      %v564 = vunpack.c.l.b16 %v416
      %v565 = vunpack.c.l.b16 %v417
      %v566 = vunpack.c.l.b16 %v418
      %v567 = vunpack.c.l.b16 %v419
      %v568 = vunpack.c.l.b16 %v420
      %v569 = vunpack.c.l.b16 %v421
      %v570 = vunpack.c.l.b16 %v422
      %v571 = vunpack.c.l.b16 %v423
      %v572 = vunpack.c.l.b16 %v424
      %v573 = vunpack.c.l.b16 %v425
      %v574 = vunpack.c.l.b16 %v426
      %v575 = vunpack.c.l.b16 %v427
      %v576 = vunpack.c.l.b16 %v428
      %v577 = vunpack.c.l.b16 %v429
      %v578 = vunpack.c.l.b16 %v430
      %v579 = vunpack.c.l.b16 %v431
      %v580 = vunpack.c.l.b16 %v432
      %v581 = vunpack.c.l.b16 %v433
      %v582 = vpack.c.b16 %v519, %v518
      %v583 = vpack.c.b16 %v521, %v520
      %v584 = vpack.c.b16 %v523, %v522
      %v585 = vpack.c.b16 %v525, %v524
      %v586 = vpack.c.b16 %v527, %v526
      %v587 = vpack.c.b16 %v529, %v528
      %v588 = vpack.c.b16 %v531, %v530
      %v589 = vpack.c.b16 %v533, %v532
      %v590 = vpack.c.b16 %v535, %v534
      %v591 = vpack.c.b16 %v537, %v536
      %v592 = vpack.c.b16 %v539, %v538
      %v593 = vpack.c.b16 %v541, %v540
      %v594 = vpack.c.b16 %v543, %v542
      %v595 = vpack.c.b16 %v545, %v544
      %v596 = vpack.c.b16 %v547, %v546
      %v597 = vpack.c.b16 %v549, %v548
      %v598 = vpack.c.b16 %v551, %v550
      %v599 = vpack.c.b16 %v553, %v552
      %v600 = vpack.c.b16 %v555, %v554
      %v601 = vpack.c.b16 %v557, %v556
      %v602 = vpack.c.b16 %v559, %v558
      %v603 = vpack.c.b16 %v561, %v560
      %v604 = vpack.c.b16 %v563, %v562
      %v605 = vpack.c.b16 %v565, %v564
      %v606 = vpack.c.b16 %v567, %v566
      %v607 = vpack.c.b16 %v569, %v568
      %v608 = vpack.c.b16 %v571, %v570
      %v609 = vpack.c.b16 %v573, %v572
      %v610 = vpack.c.b16 %v575, %v574
      %v611 = vpack.c.b16 %v577, %v576
      %v612 = vpack.c.b16 %v579, %v578
      %v613 = vpack.c.b16 %v581, %v580
      %646 = vmatpush.bf16.msra.mxu0 %v589
      %647 = vmatpush.bf16.msra.mxu0 %v588
      %648 = vmatpush.bf16.msra.mxu0 %v587
      %649 = vmatpush.bf16.msra.mxu0 %v586
      %650 = vmatpush.bf16.msra.mxu0 %v585
      %651 = vmatpush.bf16.msra.mxu0 %v584
      %652 = vmatpush.bf16.msra.mxu0 %v583
      %653 = vmatpush.bf16.msra.mxu0 %v582
      %654 = vmatmul.bf16.gmra.mxu0 %v446
      %v655 = vpop.f32.mrf.mxu0
      %v656 = vadd.f32 0.0, %v655
      %v657 = vpop.f32.mrf.mxu0
      %v658 = vadd.f32 0.0, %v657
      %659 = vdwg.mxu0
      %660 = vmatpush.bf16.msra.mxu0 %v597
      %661 = vmatpush.bf16.msra.mxu0 %v596
      %662 = vmatpush.bf16.msra.mxu0 %v595
      %663 = vmatpush.bf16.msra.mxu0 %v594
      %664 = vmatpush.bf16.msra.mxu0 %v593
      %665 = vmatpush.bf16.msra.mxu0 %v592
      %666 = vmatpush.bf16.msra.mxu0 %v591
      %667 = vmatpush.bf16.msra.mxu0 %v590
      %668 = vmatmul.bf16.gmra.mxu0 %v447
      %v669 = vpop.f32.mrf.mxu0
      %v670 = vadd.f32 %v656, %v669
      %v671 = vpop.f32.mrf.mxu0
      %v672 = vadd.f32 %v658, %v671
      %673 = vdwg.mxu0
      %674 = vmatpush.bf16.msra.mxu0 %v605
      %675 = vmatpush.bf16.msra.mxu0 %v604
      %676 = vmatpush.bf16.msra.mxu0 %v603
      %677 = vmatpush.bf16.msra.mxu0 %v602
      %678 = vmatpush.bf16.msra.mxu0 %v601
      %679 = vmatpush.bf16.msra.mxu0 %v600
      %680 = vmatpush.bf16.msra.mxu0 %v599
      %681 = vmatpush.bf16.msra.mxu0 %v598
      %682 = vmatmul.bf16.gmra.mxu0 %v448
      %v683 = vpop.f32.mrf.mxu0
      %v684 = vadd.f32 %v670, %v683
      %v685 = vpop.f32.mrf.mxu0
      %v686 = vadd.f32 %v672, %v685
      %687 = vdwg.mxu0
      %688 = vmatpush.bf16.msra.mxu0 %v613
      %689 = vmatpush.bf16.msra.mxu0 %v612
      %690 = vmatpush.bf16.msra.mxu0 %v611
      %691 = vmatpush.bf16.msra.mxu0 %v610
      %692 = vmatpush.bf16.msra.mxu0 %v609
      %693 = vmatpush.bf16.msra.mxu0 %v608
      %694 = vmatpush.bf16.msra.mxu0 %v607
      %695 = vmatpush.bf16.msra.mxu0 %v606
      %696 = vmatmul.bf16.gmra.mxu0 %v449
      %v697 = vpop.f32.mrf.mxu0
      %v698 = vadd.f32 %v684, %v697
      %v699 = vpop.f32.mrf.mxu0
      %v700 = vadd.f32 %v686, %v699
      %701 = vdwg.mxu0
      %v702 = vadd.f32 %v364, %v698
      %v703 = vadd.f32 %v365, %v700
      %704 = vst [vmem:[#allocation2] sm:$0xff] %v702
      %705 = vst [vmem:[#allocation2 + $0x8] sm:$0xff] %v703
      // Predicated region
      $region37: #{_lambda_.8} parent=31 // pred_check
        %p706 = pneg %p354
      $region38: #{_lambda_.8} parent=31 // pred_check_branch
        %708 = sbr.rel (%p706) target = $region40
      $region39: #{_lambda_.8} parent=31 // pred_region
        %v709 = vld [vmem:[#allocation2] sm:$0xff]
        %v710 = vld [vmem:[#allocation2 + $0x8] sm:$0xff]
        %v711 = vpack.c.bf16 %v709, %v709
        %v712 = vpack.c.bf16 %v710, %v710
        %713 = vst [vmem:[%s340] sm:$0xf] %v711
        %714 = vst [vmem:[%s340 + $0x4] sm:$0xf] %v712
        %v715 = vadd.f32 %v709, %v710
        %v716 = vrot.slane %v715, 4
        %v717 = vadd.f32 %v715, %v716
        %v718 = vrot.slane %v717, 2
        %v719 = vadd.f32 %v717, %v718
        %v720 = vrot.slane %v719, 1
        %v721 = vadd.f32 %v719, %v720
        %722 = vst [vmem:[%s347] sm:$0x1] %v721
        %v723 = vmul.f32 %v709, %v709
        %v724 = vmul.f32 %v710, %v710
        %v725 = vadd.f32 %v723, %v724
        %v726 = vrot.slane %v725, 4
        %v727 = vadd.f32 %v725, %v726
        %v728 = vrot.slane %v727, 2
        %v729 = vadd.f32 %v727, %v728
        %v730 = vrot.slane %v729, 1
        %v731 = vadd.f32 %v729, %v730
        %732 = vst [vmem:[%s353] sm:$0x1] %v731
      $region40: #{_lambda_.8} parent=31 // pred_fallthru
        _
      %s733 = smul.u32 2, %s22
      %p734 = scmp.lt.s32.totalorder %s733, 3
      %s735 = scalar_select %p734, %s733, 3
      %p736 = scmp.lt.s32.totalorder %s23, 0
      %s737 = scalar_select %p736, %s23, 0
      %s738 = sadd.s32 %s737, %s735
      %s739 = smul.addr %s738, 4
      %s740 = scalar_lea.vmem %s3, %s739
      %p741 = scmp.lt.s32.totalorder %s22, 1
      %s742 = scalar_select %p741, %s22, 1
      %p743 = scmp.lt.s32.totalorder %s23, 0
      %s744 = scalar_select %p743, %s23, 0
      %s745 = sadd.s32 %s744, %s742
      %s746 = scalar_lea.vmem %s4, %s745
      %p747 = scmp.lt.s32.totalorder %s22, 1
      %s748 = scalar_select %p747, %s22, 1
      %p749 = scmp.lt.s32.totalorder %s23, 0
      %s750 = scalar_select %p749, %s23, 0
      %s751 = sadd.s32 %s750, %s748
      %s752 = scalar_lea.vmem %s5, %s751
      // Predicated region
      $region41: #{_lambda_.8} parent=31 // pred_check
        %p753 = pneg %p138
      $region42: #{_lambda_.8} parent=31 // pred_check_branch
        %755 = sbr.rel (%p753) target = $region44
      $region43: #{_lambda_.8} parent=31 // pred_region
        %s756 = smul.u32 2, %s22
      $region44: #{_lambda_.8} parent=31 // pred_fallthru
        _
      // Predicated region
      $region45: #{_lambda_.8} parent=31 // pred_check
        %p757 = pneg %p166
      $region46: #{_lambda_.8} parent=31 // pred_check_branch
        %759 = sbr.rel (%p757) target = $region48
      $region47: #{_lambda_.8} parent=31 // pred_region
        _
      $region48: #{_lambda_.8} parent=31 // pred_fallthru
        _
      // Predicated region
      $region49: #{_lambda_.8} parent=31 // pred_check
        %p760 = pneg %p194
      $region50: #{_lambda_.8} parent=31 // pred_check_branch
        %762 = sbr.rel (%p760) target = $region52
      $region51: #{_lambda_.8} parent=31 // pred_region
        _
      $region52: #{_lambda_.8} parent=31 // pred_fallthru
        _
    $region32: #{_lambda_.8} parent=5 // pred_fallthru
      _
    %p763 = scmp.le.s32.totalorder 2, %s12
    // Predicated region
    $region53: #{_lambda_.8} parent=5 // pred_check
      %p764 = pneg %p763
    $region54: #{_lambda_.8} parent=5 // pred_check_branch
      %766 = sbr.rel (%p764) target = $region56
    $region55: #{_lambda_.8} parent=5 // pred_region
      %s767 = ssub.s32 %s12, 2
      // Predicated region
      $region57: #{_lambda_.8} parent=55 // pred_check
        %p768 = pneg %p144
      $region58: #{_lambda_.8} parent=55 // pred_check_branch
        %770 = sbr.rel (%p768) target = $region60
      $region59: #{_lambda_.8} parent=55 // pred_region
        %s771 = smul.u32 2, %s25
        %p772 = scmp.lt.s32.totalorder %s771, 3
        %s773 = scalar_select %p772, %s771, 3
        %p774 = scmp.lt.s32.totalorder %s26, 0
        %s775 = scalar_select %p774, %s26, 0
        %s776 = sadd.s32 %s775, %s773
        %s777 = smul.addr %s776, 4
        %s778 = scalar_lea.vmem %s3, %s777
      $region60: #{_lambda_.8} parent=55 // pred_fallthru
        _
      // Predicated region
      $region61: #{_lambda_.8} parent=55 // pred_check
        %p779 = pneg %p172
      $region62: #{_lambda_.8} parent=55 // pred_check_branch
        %781 = sbr.rel (%p779) target = $region64
      $region63: #{_lambda_.8} parent=55 // pred_region
        %p782 = scmp.lt.s32.totalorder %s25, 1
        %s783 = scalar_select %p782, %s25, 1
        %p784 = scmp.lt.s32.totalorder %s26, 0
        %s785 = scalar_select %p784, %s26, 0
        %s786 = sadd.s32 %s785, %s783
        %s787 = scalar_lea.vmem %s4, %s786
      $region64: #{_lambda_.8} parent=55 // pred_fallthru
        _
      // Predicated region
      $region65: #{_lambda_.8} parent=55 // pred_check
        %p788 = pneg %p200
      $region66: #{_lambda_.8} parent=55 // pred_check_branch
        %790 = sbr.rel (%p788) target = $region68
      $region67: #{_lambda_.8} parent=55 // pred_region
        %p791 = scmp.lt.s32.totalorder %s25, 1
        %s792 = scalar_select %p791, %s25, 1
        %p793 = scmp.lt.s32.totalorder %s26, 0
        %s794 = scalar_select %p793, %s26, 0
        %s795 = sadd.s32 %s794, %s792
        %s796 = scalar_lea.vmem %s5, %s795
      $region68: #{_lambda_.8} parent=55 // pred_fallthru
        _
    $region56: #{_lambda_.8} parent=5 // pred_fallthru
      _
  $region6: #{_lambda_.8} parent=0 // loop_footer
    %s16 = sadd.s32 1, %s12
  $region7: #{_lambda_.8} parent=0 // loop_footer_branch
    %11 = sbr.rel target = $region3
  $region8: #{_lambda_.8} parent=0 // loop_exit
    _

// kernel: _lambda_.9
$region0: #{_lambda_.9}
  #allocation0 [shape = 'u32[]', space=smem, size = 0x4, offset = 0x4, fixed_abs, tag = 'smem constant byte address 0x4 - core index']
  #allocation1 [shape = 'u32[72,128]{1,0:T(1,128)}', space=vmem, size = 0x9000, scoped, tag = 'internal scratch']
  #allocation2 [shape = 'f32[32,128]{1,0:T(8,128)}', space=vmem, size = 0x4000, scoped, tag = 'scratch operand']
  %s0 = inlined_call_operand.vmem [shape: bf16[64,1024], index: 0, kind: input, shape index: {}]
  %s1 = inlined_call_operand.vmem [shape: bf16[1024,128], index: 1, kind: input, shape index: {}]
  %s2 = inlined_call_operand.vmem [shape: f32[1,128], index: 2, kind: input, shape index: {}]
  %s3 = inlined_call_operand.vmem [shape: f32[64,128], index: 3, kind: output, shape index: {}]
  %s4 = sld [smem:[#allocation0]]
  $region53: #{_lambda_.9} parent=0
    _
  %s6 = ssub.s32 1, %s4
  %s7 = scalar_select 0, %s6, %s4
  loop: start=0, step=1, limit=4
  $region2: #{_lambda_.9} parent=0 // loop_pre_header
    _
  $region3: #{_lambda_.9} parent=0 // loop_header
    %s9 = sphi 0, %s13
    %p10 = scmp.ge.s32.totalorder %s9, 4
    %s16 = sphi 0, %s35
    %s17 = sphi 0, %s31
    %s18 = sphi 0, %s27
    %s19 = sphi 0, %s16
    %s20 = sphi 0, %s17
    %s21 = sphi 0, %s18
    %s22 = sphi 0, %s19
    %s23 = sphi 0, %s20
    %s24 = sphi 0, %s21
    %s40 = sphi 0, %s42
    %s43 = sphi 0, %s40
    %s44 = sphi 0, %s43
    %s60 = sphi 0, %s44
    %s68 = sphi 0, %s70
    %s71 = sphi 0, %s68
    %s72 = sphi 0, %s71
    %s88 = sphi 0, %s72
    %s94 = sphi 0, %s96
    %s97 = sphi 0, %s94
    %s98 = sphi 0, %s97
    %s114 = sphi 0, %s98
    %s122 = sphi 0, %s124
    %s125 = sphi 0, %s122
    %s126 = sphi 0, %s125
    %s142 = sphi 0, %s126
  $region4: #{_lambda_.9} parent=0 // loop_header_branch
    %12 = sbr.rel (%p10) target = $region8
  $region5: #{_lambda_.9} parent=0 // loop_body
    %s14 = ssub.s32 %s9, 1
    %s15 = ssub.s32 %s9, 2
    %s25 = sadd.s32 1, %s18
    %p26 = scmp.ge.s32.totalorder %s25, 1
    %s27 = scalar_select %p26, 0, %s25
    %s28 = sadd.s32 1, %s17
    %s29 = scalar_select %p26, %s28, %s17
    %p30 = scmp.ge.s32.totalorder %s29, 1
    %s31 = scalar_select %p30, 0, %s29
    %s32 = sadd.s32 1, %s16
    %s33 = scalar_select %p30, %s32, %s16
    %p34 = scmp.ge.s32.totalorder %s33, 2
    %s35 = scalar_select %p34, 0, %s33
    %s36 = ssub.s32 %s16, %s35
    %s37 = ssub.s32 %s18, %s27
    %s38 = sor.u32 %s36, %s37
    %p39 = scmp.eq.s32.totalorder %s38, 0
    %s41 = sadd.s32 %s40, 1
    %s42 = scalar_select %p39, %s40, %s41
    %p45 = pneg %p39
    %p46 = scmp.eq.s32.totalorder %s9, 1
    %p47 = por %p45, %p46
    %p48 = scmp.ne.s32.totalorder %s40, %s43
    %p49 = scmp.eq.s32.totalorder %s9, 0
    %p50 = por %p48, %p49
    %p51 = scmp.ne.s32.totalorder %s40, %s43
    %p52 = scmp.eq.s32.totalorder %s14, 1
    %p53 = por %p51, %p52
    %p54 = scmp.ne.s32.totalorder %s43, %s44
    %p55 = scmp.eq.s32.totalorder %s14, 0
    %p56 = por %p54, %p55
    %p57 = scmp.ne.s32.totalorder %s43, %s44
    %p58 = scmp.eq.s32.totalorder %s15, 1
    %p59 = por %p57, %p58
    %p61 = scmp.ne.s32.totalorder %s44, %s60
    %p62 = scmp.eq.s32.totalorder %s15, 0
    %p63 = por %p61, %p62
    %s64 = ssub.s32 %s18, %s27
    %s65 = ssub.s32 %s17, %s31
    %s66 = sor.u32 %s64, %s65
    %p67 = scmp.eq.s32.totalorder %s66, 0
    %s69 = sadd.s32 %s68, 1
    %s70 = scalar_select %p67, %s68, %s69
    %p73 = pneg %p67
    %p74 = scmp.eq.s32.totalorder %s9, 1
    %p75 = por %p73, %p74
    %p76 = scmp.ne.s32.totalorder %s68, %s71
    %p77 = scmp.eq.s32.totalorder %s9, 0
    %p78 = por %p76, %p77
    %p79 = scmp.ne.s32.totalorder %s68, %s71
    %p80 = scmp.eq.s32.totalorder %s14, 1
    %p81 = por %p79, %p80
    %p82 = scmp.ne.s32.totalorder %s71, %s72
    %p83 = scmp.eq.s32.totalorder %s14, 0
    %p84 = por %p82, %p83
    %p85 = scmp.ne.s32.totalorder %s71, %s72
    %p86 = scmp.eq.s32.totalorder %s15, 1
    %p87 = por %p85, %p86
    %p89 = scmp.ne.s32.totalorder %s72, %s88
    %p90 = scmp.eq.s32.totalorder %s15, 0
    %p91 = por %p89, %p90
    %s92 = ssub.s32 %s17, %s31
    %p93 = scmp.eq.s32.totalorder %s92, 0
    %s95 = sadd.s32 %s94, 1
    %s96 = scalar_select %p93, %s94, %s95
    %p99 = pneg %p93
    %p100 = scmp.eq.s32.totalorder %s9, 1
    %p101 = por %p99, %p100
    %p102 = scmp.ne.s32.totalorder %s94, %s97
    %p103 = scmp.eq.s32.totalorder %s9, 0
    %p104 = por %p102, %p103
    %p105 = scmp.ne.s32.totalorder %s94, %s97
    %p106 = scmp.eq.s32.totalorder %s14, 1
    %p107 = por %p105, %p106
    %p108 = scmp.ne.s32.totalorder %s97, %s98
    %p109 = scmp.eq.s32.totalorder %s14, 0
    %p110 = por %p108, %p109
    %p111 = scmp.ne.s32.totalorder %s97, %s98
    %p112 = scmp.eq.s32.totalorder %s15, 1
    %p113 = por %p111, %p112
    %p115 = scmp.ne.s32.totalorder %s98, %s114
    %p116 = scmp.eq.s32.totalorder %s15, 0
    %p117 = por %p115, %p116
    %s118 = ssub.s32 %s16, %s35
    %s119 = ssub.s32 %s17, %s31
    %s120 = sor.u32 %s118, %s119
    %p121 = scmp.eq.s32.totalorder %s120, 0
    %s123 = sadd.s32 %s122, 1
    %s124 = scalar_select %p121, %s122, %s123
    %p127 = pneg %p121
    %p128 = scmp.eq.s32.totalorder %s9, 1
    %p129 = por %p127, %p128
    %p130 = scmp.ne.s32.totalorder %s122, %s125
    %p131 = scmp.eq.s32.totalorder %s9, 0
    %p132 = por %p130, %p131
    %p133 = scmp.ne.s32.totalorder %s122, %s125
    %p134 = scmp.eq.s32.totalorder %s14, 1
    %p135 = por %p133, %p134
    %p136 = scmp.ne.s32.totalorder %s125, %s126
    %p137 = scmp.eq.s32.totalorder %s14, 0
    %p138 = por %p136, %p137
    %p139 = scmp.ne.s32.totalorder %s125, %s126
    %p140 = scmp.eq.s32.totalorder %s15, 1
    %p141 = por %p139, %p140
    %p143 = scmp.ne.s32.totalorder %s126, %s142
    %p144 = scmp.eq.s32.totalorder %s15, 0
    %p145 = por %p143, %p144
    %p146 = scmp.le.s32.totalorder 1, %s9
    %p147 = scmp.lt.s32.totalorder %s9, 3
    %p148 = pnand %p146, %p147
    %p149 = pneg %p148
    // Predicated region
    $region9: #{_lambda_.9} parent=5 // pred_check
      _
    $region10: #{_lambda_.9} parent=5 // pred_check_branch
      %151 = sbr.rel (%p148) target = $region12
    $region11: #{_lambda_.9} parent=5 // pred_region
      %s152 = ssub.s32 %s9, 1
      // Predicated region
      $region13: #{_lambda_.9} parent=11 // pred_check
        %p153 = pneg %p84
      $region14: #{_lambda_.9} parent=11 // pred_check_branch
        %155 = sbr.rel (%p153) target = $region16
      $region15: #{_lambda_.9} parent=11 // pred_region
        %s156 = smul.u32 128, %s21
        %p157 = scmp.lt.s32.totalorder %s156, 127
        %s158 = scalar_select %p157, %s156, 127
        %p159 = scmp.lt.s32.totalorder %s20, 0
        %s160 = scalar_select %p159, %s20, 0
        %s161 = sadd.s32 %s160, %s158
        %s162 = smul.addr %s161, 4
        %s163 = scalar_lea.vmem %s1, %s162
        %s164 = smul.u32 128, %s21
      $region16: #{_lambda_.9} parent=11 // pred_fallthru
        _
      // Predicated region
      $region17: #{_lambda_.9} parent=11 // pred_check
        %p165 = pneg %p110
      $region18: #{_lambda_.9} parent=11 // pred_check_branch
        %167 = sbr.rel (%p165) target = $region20
      $region19: #{_lambda_.9} parent=11 // pred_region
        %p168 = scmp.lt.s32.totalorder %s20, 0
        %s169 = scalar_select %p168, %s20, 0
        %s170 = scalar_lea.vmem %s2, %s169
      $region20: #{_lambda_.9} parent=11 // pred_fallthru
        _
    $region12: #{_lambda_.9} parent=5 // pred_fallthru
      _
    %p171 = scmp.lt.s32.totalorder %s9, 2
    // Predicated region
    $region21: #{_lambda_.9} parent=5 // pred_check
      %p172 = pneg %p171
    $region22: #{_lambda_.9} parent=5 // pred_check_branch
      %174 = sbr.rel (%p172) target = $region24
    $region23: #{_lambda_.9} parent=5 // pred_region
      // Predicated region
      $region25: #{_lambda_.9} parent=23 // pred_check
        %p175 = pneg %p50
      $region26: #{_lambda_.9} parent=23 // pred_check_branch
        %177 = sbr.rel (%p175) target = $region28
      $region27: #{_lambda_.9} parent=23 // pred_region
        %s178 = smul.u32 4, %s16
        %s179 = smul.u32 8, %s18
        %p180 = scmp.lt.s32.totalorder %s178, 7
        %s181 = scalar_select %p180, %s178, 7
        %p182 = scmp.lt.s32.totalorder %s179, 7
        %s183 = scalar_select %p182, %s179, 7
        %s184 = smul.addr %s181, 8
        %s185 = sadd.s32 %s183, %s184
        %s186 = smul.addr %s185, 4
        %s187 = scalar_lea.vmem %s0, %s186
        %s188 = smul.u32 4, %s16
        %s189 = smul.u32 8, %s18
      $region28: #{_lambda_.9} parent=23 // pred_fallthru
        _
    $region24: #{_lambda_.9} parent=5 // pred_fallthru
      _
    %p190 = scmp.le.s32.totalorder 1, %s9
    %p191 = scmp.lt.s32.totalorder %s9, 3
    %p192 = pnand %p190, %p191
    %p193 = pneg %p192
    // Predicated region
    $region29: #{_lambda_.9} parent=5 // pred_check
      _
    $region30: #{_lambda_.9} parent=5 // pred_check_branch
      %195 = sbr.rel (%p192) target = $region32
    $region31: #{_lambda_.9} parent=5 // pred_region
      %s196 = ssub.s32 %s9, 1
      %s197 = smul.u32 4, %s19
      %s198 = smul.u32 8, %s21
      %p199 = scmp.lt.s32.totalorder %s197, 7
      %s200 = scalar_select %p199, %s197, 7
      %p201 = scmp.lt.s32.totalorder %s198, 7
      %s202 = scalar_select %p201, %s198, 7
      %s203 = smul.addr %s200, 8
      %s204 = sadd.s32 %s202, %s203
      %s205 = smul.addr %s204, 4
      %s206 = scalar_lea.vmem %s0, %s205
      %p207 = pneg %p56
      %p208 = pneg %p53
      %s209 = smul.u32 128, %s21
      %p210 = scmp.lt.s32.totalorder %s209, 127
      %s211 = scalar_select %p210, %s209, 127
      %p212 = scmp.lt.s32.totalorder %s20, 0
      %s213 = scalar_select %p212, %s20, 0
      %s214 = sadd.s32 %s213, %s211
      %s215 = smul.addr %s214, 4
      %s216 = scalar_lea.vmem %s1, %s215
      %p217 = pneg %p84
      %p218 = pneg %p81
      %p219 = scmp.lt.s32.totalorder %s20, 0
      %s220 = scalar_select %p219, %s20, 0
      %s221 = scalar_lea.vmem %s2, %s220
      %p222 = pneg %p110
      %p223 = pneg %p107
      %p224 = pneg %p138
      %p225 = pneg %p135
      %s226 = smul.u32 4, %s19
      %p227 = scmp.lt.s32.totalorder %s226, 7
      %s228 = scalar_select %p227, %s226, 7
      %p229 = scmp.lt.s32.totalorder %s20, 0
      %s230 = scalar_select %p229, %s20, 0
      %s231 = sadd.s32 %s230, %s228
      %s232 = smul.addr %s231, 8
      %s233 = scalar_lea.vmem %s3, %s232
      %s234 = smul.u32 4, %s19
      %s235 = smul.u32 8, %s21
      %p236 = scmp.lt.s32.totalorder %s234, 7
      %s237 = scalar_select %p236, %s234, 7
      %p238 = scmp.lt.s32.totalorder %s235, 7
      %s239 = scalar_select %p238, %s235, 7
      %s240 = smul.addr %s237, 8
      %s241 = sadd.s32 %s239, %s240
      %s242 = smul.addr %s241, 4
      %s243 = scalar_lea.vmem %s0, %s242
      %s244 = smul.u32 4, %s19
      %s245 = smul.u32 8, %s21
      %s246 = smul.u32 128, %s21
      %p247 = scmp.lt.s32.totalorder %s246, 127
      %s248 = scalar_select %p247, %s246, 127
      %p249 = scmp.lt.s32.totalorder %s20, 0
      %s250 = scalar_select %p249, %s20, 0
      %s251 = sadd.s32 %s250, %s248
      %s252 = smul.addr %s251, 4
      %s253 = scalar_lea.vmem %s1, %s252
      %s254 = smul.u32 128, %s21
      %p255 = scmp.lt.s32.totalorder %s20, 0
      %s256 = scalar_select %p255, %s20, 0
      %s257 = scalar_lea.vmem %s2, %s256
      %s258 = smul.u32 4, %s19
      %p259 = scmp.lt.s32.totalorder %s258, 7
      %s260 = scalar_select %p259, %s258, 7
      %p261 = scmp.lt.s32.totalorder %s20, 0
      %s262 = scalar_select %p261, %s20, 0
      %s263 = sadd.s32 %s262, %s260
      %s264 = smul.addr %s263, 8
      %s265 = scalar_lea.vmem %s3, %s264
      %s266 = smul.u32 4, %s19
      %p267 = scmp.eq.s32.totalorder %s21, 0
      // Predicated region
      $region33: #{_lambda_.9} parent=31 // pred_check
        %p268 = pneg %p267
      $region34: #{_lambda_.9} parent=31 // pred_check_branch
        %270 = sbr.rel (%p268) target = $region36
      $region35: #{_lambda_.9} parent=31 // pred_region
        %v271 = vld [vmem:[%s257] sm:$0x1]
        %v273 = vperm.slane %v271, 0
        %275 = vst [vmem:[#allocation2] sm:$0xff] %v273
        %276 = vst [vmem:[#allocation2 + $0x8] sm:$0xff] %v273
        %277 = vst [vmem:[#allocation2 + $0x10] sm:$0xff] %v273
        %278 = vst [vmem:[#allocation2 + $0x18] sm:$0xff] %v273
      $region36: #{_lambda_.9} parent=31 // pred_fallthru
        _
      %v279 = vld [vmem:[#allocation2] sm:$0xff]
      %v280 = vld [vmem:[#allocation2 + $0x8] sm:$0xff]
      %v281 = vld [vmem:[#allocation2 + $0x10] sm:$0xff]
      %v282 = vld [vmem:[#allocation2 + $0x18] sm:$0xff]
      %v283 = vld [vmem:[%s243] sm:$0xff]
      %v284 = vld [vmem:[%s243 + $0x8] sm:$0xff]
      %v285 = vld [vmem:[%s243 + $0x10] sm:$0xff]
      %v286 = vld [vmem:[%s243 + $0x18] sm:$0xff]
      %v287 = vld [vmem:[%s243 + $0x20] sm:$0xff]
      %v288 = vld [vmem:[%s243 + $0x28] sm:$0xff]
      %v289 = vld [vmem:[%s243 + $0x30] sm:$0xff]
      %v290 = vld [vmem:[%s243 + $0x38] sm:$0xff]
      %v291 = vld [vmem:[%s243 + $0x40] sm:$0xff]
      %v292 = vld [vmem:[%s243 + $0x48] sm:$0xff]
      %v293 = vld [vmem:[%s243 + $0x50] sm:$0xff]
      %v294 = vld [vmem:[%s243 + $0x58] sm:$0xff]
      %v295 = vld [vmem:[%s243 + $0x60] sm:$0xff]
      %v296 = vld [vmem:[%s243 + $0x68] sm:$0xff]
      %v297 = vld [vmem:[%s243 + $0x70] sm:$0xff]
      %v298 = vld [vmem:[%s243 + $0x78] sm:$0xff]
      %v299 = vld [vmem:[%s253] sm:$0xf]
      %v300 = vld [vmem:[%s253 + $0x4] sm:$0xf]
      %v301 = vld [vmem:[%s253 + $0x8] sm:$0xf]
      %v302 = vld [vmem:[%s253 + $0xc] sm:$0xf]
      %v303 = vld [vmem:[%s253 + $0x10] sm:$0xf]
      %v304 = vld [vmem:[%s253 + $0x14] sm:$0xf]
      %v305 = vld [vmem:[%s253 + $0x18] sm:$0xf]
      %v306 = vld [vmem:[%s253 + $0x1c] sm:$0xf]
      %v307 = vld [vmem:[%s253 + $0x20] sm:$0xf]
      %v308 = vld [vmem:[%s253 + $0x24] sm:$0xf]
      %v309 = vld [vmem:[%s253 + $0x28] sm:$0xf]
      %v310 = vld [vmem:[%s253 + $0x2c] sm:$0xf]
      %v311 = vld [vmem:[%s253 + $0x30] sm:$0xf]
      %v312 = vld [vmem:[%s253 + $0x34] sm:$0xf]
      %v313 = vld [vmem:[%s253 + $0x38] sm:$0xf]
      %v314 = vld [vmem:[%s253 + $0x3c] sm:$0xf]
      %v315 = vld [vmem:[%s253 + $0x40] sm:$0xf]
      %v316 = vld [vmem:[%s253 + $0x44] sm:$0xf]
      %v317 = vld [vmem:[%s253 + $0x48] sm:$0xf]
      %v318 = vld [vmem:[%s253 + $0x4c] sm:$0xf]
      %v319 = vld [vmem:[%s253 + $0x50] sm:$0xf]
      %v320 = vld [vmem:[%s253 + $0x54] sm:$0xf]
      %v321 = vld [vmem:[%s253 + $0x58] sm:$0xf]
      %v322 = vld [vmem:[%s253 + $0x5c] sm:$0xf]
      %v323 = vld [vmem:[%s253 + $0x60] sm:$0xf]
      %v324 = vld [vmem:[%s253 + $0x64] sm:$0xf]
      %v325 = vld [vmem:[%s253 + $0x68] sm:$0xf]
      %v326 = vld [vmem:[%s253 + $0x6c] sm:$0xf]
      %v327 = vld [vmem:[%s253 + $0x70] sm:$0xf]
      %v328 = vld [vmem:[%s253 + $0x74] sm:$0xf]
      %v329 = vld [vmem:[%s253 + $0x78] sm:$0xf]
      %v330 = vld [vmem:[%s253 + $0x7c] sm:$0xf]
      %v331 = vld [vmem:[%s253 + $0x80] sm:$0xf]
      %v332 = vld [vmem:[%s253 + $0x84] sm:$0xf]
      %v333 = vld [vmem:[%s253 + $0x88] sm:$0xf]
      %v334 = vld [vmem:[%s253 + $0x8c] sm:$0xf]
      %v335 = vld [vmem:[%s253 + $0x90] sm:$0xf]
      %v336 = vld [vmem:[%s253 + $0x94] sm:$0xf]
      %v337 = vld [vmem:[%s253 + $0x98] sm:$0xf]
      %v338 = vld [vmem:[%s253 + $0x9c] sm:$0xf]
      %v339 = vld [vmem:[%s253 + $0xa0] sm:$0xf]
      %v340 = vld [vmem:[%s253 + $0xa4] sm:$0xf]
      %v341 = vld [vmem:[%s253 + $0xa8] sm:$0xf]
      %v342 = vld [vmem:[%s253 + $0xac] sm:$0xf]
      %v343 = vld [vmem:[%s253 + $0xb0] sm:$0xf]
      %v344 = vld [vmem:[%s253 + $0xb4] sm:$0xf]
      %v345 = vld [vmem:[%s253 + $0xb8] sm:$0xf]
      %v346 = vld [vmem:[%s253 + $0xbc] sm:$0xf]
      %v347 = vld [vmem:[%s253 + $0xc0] sm:$0xf]
      %v348 = vld [vmem:[%s253 + $0xc4] sm:$0xf]
      %v349 = vld [vmem:[%s253 + $0xc8] sm:$0xf]
      %v350 = vld [vmem:[%s253 + $0xcc] sm:$0xf]
      %v351 = vld [vmem:[%s253 + $0xd0] sm:$0xf]
      %v352 = vld [vmem:[%s253 + $0xd4] sm:$0xf]
      %v353 = vld [vmem:[%s253 + $0xd8] sm:$0xf]
      %v354 = vld [vmem:[%s253 + $0xdc] sm:$0xf]
      %v355 = vld [vmem:[%s253 + $0xe0] sm:$0xf]
      %v356 = vld [vmem:[%s253 + $0xe4] sm:$0xf]
      %v357 = vld [vmem:[%s253 + $0xe8] sm:$0xf]
      %v358 = vld [vmem:[%s253 + $0xec] sm:$0xf]
      %v359 = vld [vmem:[%s253 + $0xf0] sm:$0xf]
      %v360 = vld [vmem:[%s253 + $0xf4] sm:$0xf]
      %v361 = vld [vmem:[%s253 + $0xf8] sm:$0xf]
      %v362 = vld [vmem:[%s253 + $0xfc] sm:$0xf]
      %v363 = vld [vmem:[%s253 + $0x100] sm:$0xf]
      %v364 = vld [vmem:[%s253 + $0x104] sm:$0xf]
      %v365 = vld [vmem:[%s253 + $0x108] sm:$0xf]
      %v366 = vld [vmem:[%s253 + $0x10c] sm:$0xf]
      %v367 = vld [vmem:[%s253 + $0x110] sm:$0xf]
      %v368 = vld [vmem:[%s253 + $0x114] sm:$0xf]
      %v369 = vld [vmem:[%s253 + $0x118] sm:$0xf]
      %v370 = vld [vmem:[%s253 + $0x11c] sm:$0xf]
      %v371 = vld [vmem:[%s253 + $0x120] sm:$0xf]
      %v372 = vld [vmem:[%s253 + $0x124] sm:$0xf]
      %v373 = vld [vmem:[%s253 + $0x128] sm:$0xf]
      %v374 = vld [vmem:[%s253 + $0x12c] sm:$0xf]
      %v375 = vld [vmem:[%s253 + $0x130] sm:$0xf]
      %v376 = vld [vmem:[%s253 + $0x134] sm:$0xf]
      %v377 = vld [vmem:[%s253 + $0x138] sm:$0xf]
      %v378 = vld [vmem:[%s253 + $0x13c] sm:$0xf]
      %v379 = vld [vmem:[%s253 + $0x140] sm:$0xf]
      %v380 = vld [vmem:[%s253 + $0x144] sm:$0xf]
      %v381 = vld [vmem:[%s253 + $0x148] sm:$0xf]
      %v382 = vld [vmem:[%s253 + $0x14c] sm:$0xf]
      %v383 = vld [vmem:[%s253 + $0x150] sm:$0xf]
      %v384 = vld [vmem:[%s253 + $0x154] sm:$0xf]
      %v385 = vld [vmem:[%s253 + $0x158] sm:$0xf]
      %v386 = vld [vmem:[%s253 + $0x15c] sm:$0xf]
      %v387 = vld [vmem:[%s253 + $0x160] sm:$0xf]
      %v388 = vld [vmem:[%s253 + $0x164] sm:$0xf]
      %v389 = vld [vmem:[%s253 + $0x168] sm:$0xf]
      %v390 = vld [vmem:[%s253 + $0x16c] sm:$0xf]
      %v391 = vld [vmem:[%s253 + $0x170] sm:$0xf]
      %v392 = vld [vmem:[%s253 + $0x174] sm:$0xf]
      %v393 = vld [vmem:[%s253 + $0x178] sm:$0xf]
      %v394 = vld [vmem:[%s253 + $0x17c] sm:$0xf]
      %v395 = vld [vmem:[%s253 + $0x180] sm:$0xf]
      %v396 = vld [vmem:[%s253 + $0x184] sm:$0xf]
      %v397 = vld [vmem:[%s253 + $0x188] sm:$0xf]
      %v398 = vld [vmem:[%s253 + $0x18c] sm:$0xf]
      %v399 = vld [vmem:[%s253 + $0x190] sm:$0xf]
      %v400 = vld [vmem:[%s253 + $0x194] sm:$0xf]
      %v401 = vld [vmem:[%s253 + $0x198] sm:$0xf]
      %v402 = vld [vmem:[%s253 + $0x19c] sm:$0xf]
      %v403 = vld [vmem:[%s253 + $0x1a0] sm:$0xf]
      %v404 = vld [vmem:[%s253 + $0x1a4] sm:$0xf]
      %v405 = vld [vmem:[%s253 + $0x1a8] sm:$0xf]
      %v406 = vld [vmem:[%s253 + $0x1ac] sm:$0xf]
      %v407 = vld [vmem:[%s253 + $0x1b0] sm:$0xf]
      %v408 = vld [vmem:[%s253 + $0x1b4] sm:$0xf]
      %v409 = vld [vmem:[%s253 + $0x1b8] sm:$0xf]
      %v410 = vld [vmem:[%s253 + $0x1bc] sm:$0xf]
      %v411 = vld [vmem:[%s253 + $0x1c0] sm:$0xf]
      %v412 = vld [vmem:[%s253 + $0x1c4] sm:$0xf]
      %v413 = vld [vmem:[%s253 + $0x1c8] sm:$0xf]
      %v414 = vld [vmem:[%s253 + $0x1cc] sm:$0xf]
      %v415 = vld [vmem:[%s253 + $0x1d0] sm:$0xf]
      %v416 = vld [vmem:[%s253 + $0x1d4] sm:$0xf]
      %v417 = vld [vmem:[%s253 + $0x1d8] sm:$0xf]
      %v418 = vld [vmem:[%s253 + $0x1dc] sm:$0xf]
      %v419 = vld [vmem:[%s253 + $0x1e0] sm:$0xf]
      %v420 = vld [vmem:[%s253 + $0x1e4] sm:$0xf]
      %v421 = vld [vmem:[%s253 + $0x1e8] sm:$0xf]
      %v422 = vld [vmem:[%s253 + $0x1ec] sm:$0xf]
      %v423 = vld [vmem:[%s253 + $0x1f0] sm:$0xf]
      %v424 = vld [vmem:[%s253 + $0x1f4] sm:$0xf]
      %v425 = vld [vmem:[%s253 + $0x1f8] sm:$0xf]
      %v426 = vld [vmem:[%s253 + $0x1fc] sm:$0xf]
      %v443 = vunpack.c.l.b16 %v283
      %v444 = vunpack.c.h.b16 %v283
      %v445 = vunpack.c.l.b16 %v284
      %v446 = vunpack.c.h.b16 %v284
      %v447 = vunpack.c.l.b16 %v285
      %v448 = vunpack.c.h.b16 %v285
      %v449 = vunpack.c.l.b16 %v286
      %v450 = vunpack.c.h.b16 %v286
      %v451 = vunpack.c.l.b16 %v287
      %v452 = vunpack.c.h.b16 %v287
      %v453 = vunpack.c.l.b16 %v288
      %v454 = vunpack.c.h.b16 %v288
      %v455 = vunpack.c.l.b16 %v289
      %v456 = vunpack.c.h.b16 %v289
      %v457 = vunpack.c.l.b16 %v290
      %v458 = vunpack.c.h.b16 %v290
      %v459 = vunpack.c.l.b16 %v291
      %v460 = vunpack.c.h.b16 %v291
      %v461 = vunpack.c.l.b16 %v292
      %v462 = vunpack.c.h.b16 %v292
      %v463 = vunpack.c.l.b16 %v293
      %v464 = vunpack.c.h.b16 %v293
      %v465 = vunpack.c.l.b16 %v294
      %v466 = vunpack.c.h.b16 %v294
      %v467 = vunpack.c.l.b16 %v295
      %v468 = vunpack.c.h.b16 %v295
      %v469 = vunpack.c.l.b16 %v296
      %v470 = vunpack.c.h.b16 %v296
      %v471 = vunpack.c.l.b16 %v297
      %v472 = vunpack.c.h.b16 %v297
      %v473 = vunpack.c.l.b16 %v298
      %v474 = vunpack.c.h.b16 %v298
      %v475 = vpack.c.b16 %v451, %v443
      %v476 = vpack.c.b16 %v452, %v444
      %v477 = vpack.c.b16 %v453, %v445
      %v478 = vpack.c.b16 %v454, %v446
      %v479 = vpack.c.b16 %v455, %v447
      %v480 = vpack.c.b16 %v456, %v448
      %v481 = vpack.c.b16 %v457, %v449
      %v482 = vpack.c.b16 %v458, %v450
      %v483 = vpack.c.b16 %v467, %v459
      %v484 = vpack.c.b16 %v468, %v460
      %v485 = vpack.c.b16 %v469, %v461
      %v486 = vpack.c.b16 %v470, %v462
      %v487 = vpack.c.b16 %v471, %v463
      %v488 = vpack.c.b16 %v472, %v464
      %v489 = vpack.c.b16 %v473, %v465
      %v490 = vpack.c.b16 %v474, %v466
      %v635 = vunpack.c.l.b16 %v299
      %v636 = vunpack.c.l.b16 %v300
      %v637 = vunpack.c.l.b16 %v301
      %v638 = vunpack.c.l.b16 %v302
      %v639 = vunpack.c.l.b16 %v303
      %v640 = vunpack.c.l.b16 %v304
      %v641 = vunpack.c.l.b16 %v305
      %v642 = vunpack.c.l.b16 %v306
      %v643 = vunpack.c.l.b16 %v307
      %v644 = vunpack.c.l.b16 %v308
      %v645 = vunpack.c.l.b16 %v309
      %v646 = vunpack.c.l.b16 %v310
      %v647 = vunpack.c.l.b16 %v311
      %v648 = vunpack.c.l.b16 %v312
      %v649 = vunpack.c.l.b16 %v313
      %v650 = vunpack.c.l.b16 %v314
      %v651 = vunpack.c.l.b16 %v315
      %v652 = vunpack.c.l.b16 %v316
      %v653 = vunpack.c.l.b16 %v317
      %v654 = vunpack.c.l.b16 %v318
      %v655 = vunpack.c.l.b16 %v319
      %v656 = vunpack.c.l.b16 %v320
      %v657 = vunpack.c.l.b16 %v321
      %v658 = vunpack.c.l.b16 %v322
      %v659 = vunpack.c.l.b16 %v323
      %v660 = vunpack.c.l.b16 %v324
      %v661 = vunpack.c.l.b16 %v325
      %v662 = vunpack.c.l.b16 %v326
      %v663 = vunpack.c.l.b16 %v327
      %v664 = vunpack.c.l.b16 %v328
      %v665 = vunpack.c.l.b16 %v329
      %v666 = vunpack.c.l.b16 %v330
      %v667 = vunpack.c.l.b16 %v331
      %v668 = vunpack.c.l.b16 %v332
      %v669 = vunpack.c.l.b16 %v333
      %v670 = vunpack.c.l.b16 %v334
      %v671 = vunpack.c.l.b16 %v335
      %v672 = vunpack.c.l.b16 %v336
      %v673 = vunpack.c.l.b16 %v337
      %v674 = vunpack.c.l.b16 %v338
      %v675 = vunpack.c.l.b16 %v339
      %v676 = vunpack.c.l.b16 %v340
      %v677 = vunpack.c.l.b16 %v341
      %v678 = vunpack.c.l.b16 %v342
      %v679 = vunpack.c.l.b16 %v343
      %v680 = vunpack.c.l.b16 %v344
      %v681 = vunpack.c.l.b16 %v345
      %v682 = vunpack.c.l.b16 %v346
      %v683 = vunpack.c.l.b16 %v347
      %v684 = vunpack.c.l.b16 %v348
      %v685 = vunpack.c.l.b16 %v349
      %v686 = vunpack.c.l.b16 %v350
      %v687 = vunpack.c.l.b16 %v351
      %v688 = vunpack.c.l.b16 %v352
      %v689 = vunpack.c.l.b16 %v353
      %v690 = vunpack.c.l.b16 %v354
      %v691 = vunpack.c.l.b16 %v355
      %v692 = vunpack.c.l.b16 %v356
      %v693 = vunpack.c.l.b16 %v357
      %v694 = vunpack.c.l.b16 %v358
      %v695 = vunpack.c.l.b16 %v359
      %v696 = vunpack.c.l.b16 %v360
      %v697 = vunpack.c.l.b16 %v361
      %v698 = vunpack.c.l.b16 %v362
      %v699 = vunpack.c.l.b16 %v363
      %v700 = vunpack.c.l.b16 %v364
      %v701 = vunpack.c.l.b16 %v365
      %v702 = vunpack.c.l.b16 %v366
      %v703 = vunpack.c.l.b16 %v367
      %v704 = vunpack.c.l.b16 %v368
      %v705 = vunpack.c.l.b16 %v369
      %v706 = vunpack.c.l.b16 %v370
      %v707 = vunpack.c.l.b16 %v371
      %v708 = vunpack.c.l.b16 %v372
      %v709 = vunpack.c.l.b16 %v373
      %v710 = vunpack.c.l.b16 %v374
      %v711 = vunpack.c.l.b16 %v375
      %v712 = vunpack.c.l.b16 %v376
      %v713 = vunpack.c.l.b16 %v377
      %v714 = vunpack.c.l.b16 %v378
      %v715 = vunpack.c.l.b16 %v379
      %v716 = vunpack.c.l.b16 %v380
      %v717 = vunpack.c.l.b16 %v381
      %v718 = vunpack.c.l.b16 %v382
      %v719 = vunpack.c.l.b16 %v383
      %v720 = vunpack.c.l.b16 %v384
      %v721 = vunpack.c.l.b16 %v385
      %v722 = vunpack.c.l.b16 %v386
      %v723 = vunpack.c.l.b16 %v387
      %v724 = vunpack.c.l.b16 %v388
      %v725 = vunpack.c.l.b16 %v389
      %v726 = vunpack.c.l.b16 %v390
      %v727 = vunpack.c.l.b16 %v391
      %v728 = vunpack.c.l.b16 %v392
      %v729 = vunpack.c.l.b16 %v393
      %v730 = vunpack.c.l.b16 %v394
      %v731 = vunpack.c.l.b16 %v395
      %v732 = vunpack.c.l.b16 %v396
      %v733 = vunpack.c.l.b16 %v397
      %v734 = vunpack.c.l.b16 %v398
      %v735 = vunpack.c.l.b16 %v399
      %v736 = vunpack.c.l.b16 %v400
      %v737 = vunpack.c.l.b16 %v401
      %v738 = vunpack.c.l.b16 %v402
      %v739 = vunpack.c.l.b16 %v403
      %v740 = vunpack.c.l.b16 %v404
      %v741 = vunpack.c.l.b16 %v405
      %v742 = vunpack.c.l.b16 %v406
      %v743 = vunpack.c.l.b16 %v407
      %v744 = vunpack.c.l.b16 %v408
      %v745 = vunpack.c.l.b16 %v409
      %v746 = vunpack.c.l.b16 %v410
      %v747 = vunpack.c.l.b16 %v411
      %v748 = vunpack.c.l.b16 %v412
      %v749 = vunpack.c.l.b16 %v413
      %v750 = vunpack.c.l.b16 %v414
      %v751 = vunpack.c.l.b16 %v415
      %v752 = vunpack.c.l.b16 %v416
      %v753 = vunpack.c.l.b16 %v417
      %v754 = vunpack.c.l.b16 %v418
      %v755 = vunpack.c.l.b16 %v419
      %v756 = vunpack.c.l.b16 %v420
      %v757 = vunpack.c.l.b16 %v421
      %v758 = vunpack.c.l.b16 %v422
      %v759 = vunpack.c.l.b16 %v423
      %v760 = vunpack.c.l.b16 %v424
      %v761 = vunpack.c.l.b16 %v425
      %v762 = vunpack.c.l.b16 %v426
      %v763 = vpack.c.b16 %v636, %v635
      %v764 = vpack.c.b16 %v638, %v637
      %v765 = vpack.c.b16 %v640, %v639
      %v766 = vpack.c.b16 %v642, %v641
      %v767 = vpack.c.b16 %v644, %v643
      %v768 = vpack.c.b16 %v646, %v645
      %v769 = vpack.c.b16 %v648, %v647
      %v770 = vpack.c.b16 %v650, %v649
      %v771 = vpack.c.b16 %v652, %v651
      %v772 = vpack.c.b16 %v654, %v653
      %v773 = vpack.c.b16 %v656, %v655
      %v774 = vpack.c.b16 %v658, %v657
      %v775 = vpack.c.b16 %v660, %v659
      %v776 = vpack.c.b16 %v662, %v661
      %v777 = vpack.c.b16 %v664, %v663
      %v778 = vpack.c.b16 %v666, %v665
      %v779 = vpack.c.b16 %v668, %v667
      %v780 = vpack.c.b16 %v670, %v669
      %v781 = vpack.c.b16 %v672, %v671
      %v782 = vpack.c.b16 %v674, %v673
      %v783 = vpack.c.b16 %v676, %v675
      %v784 = vpack.c.b16 %v678, %v677
      %v785 = vpack.c.b16 %v680, %v679
      %v786 = vpack.c.b16 %v682, %v681
      %v787 = vpack.c.b16 %v684, %v683
      %v788 = vpack.c.b16 %v686, %v685
      %v789 = vpack.c.b16 %v688, %v687
      %v790 = vpack.c.b16 %v690, %v689
      %v791 = vpack.c.b16 %v692, %v691
      %v792 = vpack.c.b16 %v694, %v693
      %v793 = vpack.c.b16 %v696, %v695
      %v794 = vpack.c.b16 %v698, %v697
      %v795 = vpack.c.b16 %v700, %v699
      %v796 = vpack.c.b16 %v702, %v701
      %v797 = vpack.c.b16 %v704, %v703
      %v798 = vpack.c.b16 %v706, %v705
      %v799 = vpack.c.b16 %v708, %v707
      %v800 = vpack.c.b16 %v710, %v709
      %v801 = vpack.c.b16 %v712, %v711
      %v802 = vpack.c.b16 %v714, %v713
      %v803 = vpack.c.b16 %v716, %v715
      %v804 = vpack.c.b16 %v718, %v717
      %v805 = vpack.c.b16 %v720, %v719
      %v806 = vpack.c.b16 %v722, %v721
      %v807 = vpack.c.b16 %v724, %v723
      %v808 = vpack.c.b16 %v726, %v725
      %v809 = vpack.c.b16 %v728, %v727
      %v810 = vpack.c.b16 %v730, %v729
      %v811 = vpack.c.b16 %v732, %v731
      %v812 = vpack.c.b16 %v734, %v733
      %v813 = vpack.c.b16 %v736, %v735
      %v814 = vpack.c.b16 %v738, %v737
      %v815 = vpack.c.b16 %v740, %v739
      %v816 = vpack.c.b16 %v742, %v741
      %v817 = vpack.c.b16 %v744, %v743
      %v818 = vpack.c.b16 %v746, %v745
      %v819 = vpack.c.b16 %v748, %v747
      %v820 = vpack.c.b16 %v750, %v749
      %v821 = vpack.c.b16 %v752, %v751
      %v822 = vpack.c.b16 %v754, %v753
      %v823 = vpack.c.b16 %v756, %v755
      %v824 = vpack.c.b16 %v758, %v757
      %v825 = vpack.c.b16 %v760, %v759
      %v826 = vpack.c.b16 %v762, %v761
      %891 = vmatpush.bf16.msra.mxu0 %v770
      %892 = vmatpush.bf16.msra.mxu0 %v769
      %893 = vmatpush.bf16.msra.mxu0 %v768
      %894 = vmatpush.bf16.msra.mxu0 %v767
      %895 = vmatpush.bf16.msra.mxu0 %v766
      %896 = vmatpush.bf16.msra.mxu0 %v765
      %897 = vmatpush.bf16.msra.mxu0 %v764
      %898 = vmatpush.bf16.msra.mxu0 %v763
      %899 = vmatmul.bf16.gmra.mxu0 %v475
      %v900 = vpop.f32.mrf.mxu0
      %v901 = vadd.f32 0.0, %v900
      %v902 = vpop.f32.mrf.mxu0
      %v903 = vadd.f32 0.0, %v902
      %904 = vmatmul.bf16.gmra.mxu0 %v483
      %v905 = vpop.f32.mrf.mxu0
      %v906 = vadd.f32 0.0, %v905
      %v907 = vpop.f32.mrf.mxu0
      %v908 = vadd.f32 0.0, %v907
      %909 = vdwg.mxu0
      %910 = vmatpush.bf16.msra.mxu0 %v778
      %911 = vmatpush.bf16.msra.mxu0 %v777
      %912 = vmatpush.bf16.msra.mxu0 %v776
      %913 = vmatpush.bf16.msra.mxu0 %v775
      %914 = vmatpush.bf16.msra.mxu0 %v774
      %915 = vmatpush.bf16.msra.mxu0 %v773
      %916 = vmatpush.bf16.msra.mxu0 %v772
      %917 = vmatpush.bf16.msra.mxu0 %v771
      %918 = vmatmul.bf16.gmra.mxu0 %v476
      %v919 = vpop.f32.mrf.mxu0
      %v920 = vadd.f32 %v901, %v919
      %v921 = vpop.f32.mrf.mxu0
      %v922 = vadd.f32 %v903, %v921
      %923 = vmatmul.bf16.gmra.mxu0 %v484
      %v924 = vpop.f32.mrf.mxu0
      %v925 = vadd.f32 %v906, %v924
      %v926 = vpop.f32.mrf.mxu0
      %v927 = vadd.f32 %v908, %v926
      %928 = vdwg.mxu0
      %929 = vmatpush.bf16.msra.mxu0 %v786
      %930 = vmatpush.bf16.msra.mxu0 %v785
      %931 = vmatpush.bf16.msra.mxu0 %v784
      %932 = vmatpush.bf16.msra.mxu0 %v783
      %933 = vmatpush.bf16.msra.mxu0 %v782
      %934 = vmatpush.bf16.msra.mxu0 %v781
      %935 = vmatpush.bf16.msra.mxu0 %v780
      %936 = vmatpush.bf16.msra.mxu0 %v779
      %937 = vmatmul.bf16.gmra.mxu0 %v477
      %v938 = vpop.f32.mrf.mxu0
      %v939 = vadd.f32 %v920, %v938
      %v940 = vpop.f32.mrf.mxu0
      %v941 = vadd.f32 %v922, %v940
      %942 = vmatmul.bf16.gmra.mxu0 %v485
      %v943 = vpop.f32.mrf.mxu0
      %v944 = vadd.f32 %v925, %v943
      %v945 = vpop.f32.mrf.mxu0
      %v946 = vadd.f32 %v927, %v945
      %947 = vdwg.mxu0
      %948 = vmatpush.bf16.msra.mxu0 %v794
      %949 = vmatpush.bf16.msra.mxu0 %v793
      %950 = vmatpush.bf16.msra.mxu0 %v792
      %951 = vmatpush.bf16.msra.mxu0 %v791
      %952 = vmatpush.bf16.msra.mxu0 %v790
      %953 = vmatpush.bf16.msra.mxu0 %v789
      %954 = vmatpush.bf16.msra.mxu0 %v788
      %955 = vmatpush.bf16.msra.mxu0 %v787
      %956 = vmatmul.bf16.gmra.mxu0 %v478
      %v957 = vpop.f32.mrf.mxu0
      %v958 = vadd.f32 %v939, %v957
      %v959 = vpop.f32.mrf.mxu0
      %v960 = vadd.f32 %v941, %v959
      %961 = vmatmul.bf16.gmra.mxu0 %v486
      %v962 = vpop.f32.mrf.mxu0
      %v963 = vadd.f32 %v944, %v962
      %v964 = vpop.f32.mrf.mxu0
      %v965 = vadd.f32 %v946, %v964
      %966 = vdwg.mxu0
      %967 = vmatpush.bf16.msra.mxu0 %v802
      %968 = vmatpush.bf16.msra.mxu0 %v801
      %969 = vmatpush.bf16.msra.mxu0 %v800
      %970 = vmatpush.bf16.msra.mxu0 %v799
      %971 = vmatpush.bf16.msra.mxu0 %v798
      %972 = vmatpush.bf16.msra.mxu0 %v797
      %973 = vmatpush.bf16.msra.mxu0 %v796
      %974 = vmatpush.bf16.msra.mxu0 %v795
      %975 = vmatmul.bf16.gmra.mxu0 %v479
      %v976 = vpop.f32.mrf.mxu0
      %v977 = vadd.f32 %v958, %v976
      %v978 = vpop.f32.mrf.mxu0
      %v979 = vadd.f32 %v960, %v978
      %980 = vmatmul.bf16.gmra.mxu0 %v487
      %v981 = vpop.f32.mrf.mxu0
      %v982 = vadd.f32 %v963, %v981
      %v983 = vpop.f32.mrf.mxu0
      %v984 = vadd.f32 %v965, %v983
      %985 = vdwg.mxu0
      %986 = vmatpush.bf16.msra.mxu0 %v810
      %987 = vmatpush.bf16.msra.mxu0 %v809
      %988 = vmatpush.bf16.msra.mxu0 %v808
      %989 = vmatpush.bf16.msra.mxu0 %v807
      %990 = vmatpush.bf16.msra.mxu0 %v806
      %991 = vmatpush.bf16.msra.mxu0 %v805
      %992 = vmatpush.bf16.msra.mxu0 %v804
      %993 = vmatpush.bf16.msra.mxu0 %v803
      %994 = vmatmul.bf16.gmra.mxu0 %v480
      %v995 = vpop.f32.mrf.mxu0
      %v996 = vadd.f32 %v977, %v995
      %v997 = vpop.f32.mrf.mxu0
      %v998 = vadd.f32 %v979, %v997
      %999 = vmatmul.bf16.gmra.mxu0 %v488
      %v1000 = vpop.f32.mrf.mxu0
      %v1001 = vadd.f32 %v982, %v1000
      %v1002 = vpop.f32.mrf.mxu0
      %v1003 = vadd.f32 %v984, %v1002
      %1004 = vdwg.mxu0
      %1005 = vmatpush.bf16.msra.mxu0 %v818
      %1006 = vmatpush.bf16.msra.mxu0 %v817
      %1007 = vmatpush.bf16.msra.mxu0 %v816
      %1008 = vmatpush.bf16.msra.mxu0 %v815
      %1009 = vmatpush.bf16.msra.mxu0 %v814
      %1010 = vmatpush.bf16.msra.mxu0 %v813
      %1011 = vmatpush.bf16.msra.mxu0 %v812
      %1012 = vmatpush.bf16.msra.mxu0 %v811
      %1013 = vmatmul.bf16.gmra.mxu0 %v481
      %v1014 = vpop.f32.mrf.mxu0
      %v1015 = vadd.f32 %v996, %v1014
      %v1016 = vpop.f32.mrf.mxu0
      %v1017 = vadd.f32 %v998, %v1016
      %1018 = vmatmul.bf16.gmra.mxu0 %v489
      %v1019 = vpop.f32.mrf.mxu0
      %v1020 = vadd.f32 %v1001, %v1019
      %v1021 = vpop.f32.mrf.mxu0
      %v1022 = vadd.f32 %v1003, %v1021
      %1023 = vdwg.mxu0
      %1024 = vmatpush.bf16.msra.mxu0 %v826
      %1025 = vmatpush.bf16.msra.mxu0 %v825
      %1026 = vmatpush.bf16.msra.mxu0 %v824
      %1027 = vmatpush.bf16.msra.mxu0 %v823
      %1028 = vmatpush.bf16.msra.mxu0 %v822
      %1029 = vmatpush.bf16.msra.mxu0 %v821
      %1030 = vmatpush.bf16.msra.mxu0 %v820
      %1031 = vmatpush.bf16.msra.mxu0 %v819
      %1032 = vmatmul.bf16.gmra.mxu0 %v482
      %v1033 = vpop.f32.mrf.mxu0
      %v1034 = vadd.f32 %v1015, %v1033
      %v1035 = vpop.f32.mrf.mxu0
      %v1036 = vadd.f32 %v1017, %v1035
      %1037 = vmatmul.bf16.gmra.mxu0 %v490
      %v1038 = vpop.f32.mrf.mxu0
      %v1039 = vadd.f32 %v1020, %v1038
      %v1040 = vpop.f32.mrf.mxu0
      %v1041 = vadd.f32 %v1022, %v1040
      %1042 = vdwg.mxu0
      %v1043 = vadd.f32 %v279, %v1034
      %v1044 = vadd.f32 %v280, %v1036
      %v1045 = vadd.f32 %v281, %v1039
      %v1046 = vadd.f32 %v282, %v1041
      %1047 = vst [vmem:[#allocation2] sm:$0xff] %v1043
      %1048 = vst [vmem:[#allocation2 + $0x8] sm:$0xff] %v1044
      %1049 = vst [vmem:[#allocation2 + $0x10] sm:$0xff] %v1045
      %1050 = vst [vmem:[#allocation2 + $0x18] sm:$0xff] %v1046
      // Predicated region
      $region37: #{_lambda_.9} parent=31 // pred_check
        %p1051 = pneg %p267
      $region38: #{_lambda_.9} parent=31 // pred_check_branch
        %1053 = sbr.rel (%p1051) target = $region40
      $region39: #{_lambda_.9} parent=31 // pred_region
        %v1054 = vld [vmem:[#allocation2] sm:$0xff]
        %v1055 = vld [vmem:[#allocation2 + $0x8] sm:$0xff]
        %v1056 = vld [vmem:[#allocation2 + $0x10] sm:$0xff]
        %v1057 = vld [vmem:[#allocation2 + $0x18] sm:$0xff]
        %1058 = vst [vmem:[%s265] sm:$0xff] %v1054
        %1059 = vst [vmem:[%s265 + $0x8] sm:$0xff] %v1055
        %1060 = vst [vmem:[%s265 + $0x10] sm:$0xff] %v1056
        %1061 = vst [vmem:[%s265 + $0x18] sm:$0xff] %v1057
      $region40: #{_lambda_.9} parent=31 // pred_fallthru
        _
      %s1062 = smul.u32 4, %s19
      %p1063 = scmp.lt.s32.totalorder %s1062, 7
      %s1064 = scalar_select %p1063, %s1062, 7
      %p1065 = scmp.lt.s32.totalorder %s20, 0
      %s1066 = scalar_select %p1065, %s20, 0
      %s1067 = sadd.s32 %s1066, %s1064
      %s1068 = smul.addr %s1067, 8
      %s1069 = scalar_lea.vmem %s3, %s1068
      // Predicated region
      $region41: #{_lambda_.9} parent=31 // pred_check
        %p1070 = pneg %p135
      $region42: #{_lambda_.9} parent=31 // pred_check_branch
        %1072 = sbr.rel (%p1070) target = $region44
      $region43: #{_lambda_.9} parent=31 // pred_region
        %s1073 = smul.u32 4, %s19
      $region44: #{_lambda_.9} parent=31 // pred_fallthru
        _
    $region32: #{_lambda_.9} parent=5 // pred_fallthru
      _
    %p1074 = scmp.le.s32.totalorder 2, %s9
    // Predicated region
    $region45: #{_lambda_.9} parent=5 // pred_check
      %p1075 = pneg %p1074
    $region46: #{_lambda_.9} parent=5 // pred_check_branch
      %1077 = sbr.rel (%p1075) target = $region48
    $region47: #{_lambda_.9} parent=5 // pred_region
      %s1078 = ssub.s32 %s9, 2
      // Predicated region
      $region49: #{_lambda_.9} parent=47 // pred_check
        %p1079 = pneg %p141
      $region50: #{_lambda_.9} parent=47 // pred_check_branch
        %1081 = sbr.rel (%p1079) target = $region52
      $region51: #{_lambda_.9} parent=47 // pred_region
        %s1082 = smul.u32 4, %s22
        %p1083 = scmp.lt.s32.totalorder %s1082, 7
        %s1084 = scalar_select %p1083, %s1082, 7
        %p1085 = scmp.lt.s32.totalorder %s23, 0
        %s1086 = scalar_select %p1085, %s23, 0
        %s1087 = sadd.s32 %s1086, %s1084
        %s1088 = smul.addr %s1087, 8
        %s1089 = scalar_lea.vmem %s3, %s1088
      $region52: #{_lambda_.9} parent=47 // pred_fallthru
        _
    $region48: #{_lambda_.9} parent=5 // pred_fallthru
      _
  $region6: #{_lambda_.9} parent=0 // loop_footer
    %s13 = sadd.s32 1, %s9
  $region7: #{_lambda_.9} parent=0 // loop_footer_branch
    %8 = sbr.rel target = $region3
  $region8: #{_lambda_.9} parent=0 // loop_exit
    _

</llo_original>
